<compile_context>
chip_gen: v6e
topology: v6e:2x2x1
jax: 0.10.0
libtpu: 0.0.40
codegen_flags: <defaults>
</compile_context>

<pallas_src>
import functools

import jax
import jax.numpy as jnp
from jax import lax
from jax.experimental import pallas as pl
from jax.experimental.pallas import tpu as pltpu

EPS = 1e-5                       # BatchNorm2d default eps
_LANE = 128
_TM = 512                        # M tile for the deconv matmuls
_TK = 2048                       # K tile (>= every layer's K -> weight resident)
_TN_FC = 2048                    # output-column tile for the fc (layer 0) matmul
_TM_BN = 4096                    # row-tile target for the memory-bound BN/act pass
_VMEM_LIMIT = 48 * 1024 * 1024   # actual per-kernel usage <= ~8 MiB; safe v5e/v6e/v7x

_ACTS = ("none", "relu", "relu", "relu", "sigmoid")


# ----------------------------------------------------------------------------
# static helpers
# ----------------------------------------------------------------------------
def _round_up(x, m):
    return (x + m - 1) // m * m


def _pick_tile(total, target, mult):
    """Largest multiple of `mult` dividing `total` and <= target (avoids padding);
    falls back to a round-up tile (caller zero-pads) if no divisor exists."""
    best = None
    for cand in range(mult, min(total, target) + 1, mult):
        if total % cand == 0:
            best = cand
    if best is None:
        best = min(_round_up(total, mult), _round_up(target, mult))
    return best


def _pad2d(a, rows, cols):
    if a.shape == (rows, cols):
        return a
    return jnp.pad(a, ((0, rows - a.shape[0]), (0, cols - a.shape[1])))


def _pad1d(a, n):
    if a.shape[0] == n:
        return a
    return jnp.pad(a, (0, n - a.shape[0]))


# ----------------------------------------------------------------------------
# Pallas kernels
# ----------------------------------------------------------------------------
def _fc_kernel(z_ref, w_ref, b_ref, o_ref):
    y = jnp.dot(z_ref[...], w_ref[...], preferred_element_type=jnp.float32)
    o_ref[...] = (y + b_ref[...]).astype(o_ref.dtype)


def _mm_bn_kernel(p_ref, w_ref, o_ref, stats_ref, acc_ref):
    # NOTE: program_id / num_programs are bound OUTSIDE the pl.when bodies
    # (binding them inside the cond branch breaks interpret-mode lowering).
    ki = pl.program_id(2)
    nk = pl.num_programs(2)

    @pl.when(ki == 0)
    def _():
        acc_ref[...] = jnp.zeros_like(acc_ref)

    acc_ref[...] += jnp.dot(p_ref[...], w_ref[...],
                            preferred_element_type=jnp.float32)

    @pl.when(ki == nk - 1)
    def _():
        y = acc_ref[...]                               # f32, pre-BN, no bias
        o_ref[...] = y.astype(o_ref.dtype)             # bf16 pass-1 output
        s = jnp.sum(y, axis=0, keepdims=True)          # (1, Coutp)
        ss = jnp.sum(y * y, axis=0, keepdims=True)     # (1, Coutp)
        ridx = lax.broadcasted_iota(jnp.int32, stats_ref.shape, 0)
        stats_ref[...] = jnp.where(ridx == 0, s, jnp.where(ridx == 1, ss, 0.0))


def _mm_act_kernel(p_ref, w_ref, b_ref, o_ref, acc_ref, *, act):
    ki = pl.program_id(2)
    nk = pl.num_programs(2)

    @pl.when(ki == 0)
    def _():
        acc_ref[...] = jnp.zeros_like(acc_ref)

    acc_ref[...] += jnp.dot(p_ref[...], w_ref[...],
                            preferred_element_type=jnp.float32)

    @pl.when(ki == nk - 1)
    def _():
        y = acc_ref[...] + b_ref[...]
        if act == "relu":
            y = jnp.maximum(y, 0.0)
        elif act == "sigmoid":
            y = 1.0 / (1.0 + jnp.exp(-y))              # EUP exp + reciprocal
        o_ref[...] = y.astype(o_ref.dtype)


def _bn_act_kernel(y_ref, scale_ref, shift_ref, o_ref, *, act):
    y = y_ref[...].astype(jnp.float32) * scale_ref[...] + shift_ref[...]
    if act == "relu":
        y = jnp.maximum(y, 0.0)
    elif act == "sigmoid":
        y = 1.0 / (1.0 + jnp.exp(-y))
    o_ref[...] = y.astype(o_ref.dtype)


# ----------------------------------------------------------------------------
# pallas_call wrappers
# ----------------------------------------------------------------------------
def _pallas_fc(zp, wmatp, biasp, *, tn, out_dtype):
    mp, kp = zp.shape
    ncolsp = wmatp.shape[1]
    cost = pl.CostEstimate(
        flops=2 * mp * kp * ncolsp, transcendentals=0,
        bytes_accessed=mp * kp * 2 + kp * ncolsp * 2
        + mp * ncolsp * jnp.dtype(out_dtype).itemsize)
    return pl.pallas_call(
        _fc_kernel,
        out_shape=jax.ShapeDtypeStruct((mp, ncolsp), out_dtype),
        grid_spec=pltpu.PrefetchScalarGridSpec(
            num_scalar_prefetch=0,
            grid=(ncolsp // tn,),
            in_specs=[pl.BlockSpec((mp, kp), lambda j: (0, 0)),
                      pl.BlockSpec((kp, tn), lambda j: (0, j)),
                      pl.BlockSpec((1, tn), lambda j: (0, j))],
            out_specs=pl.BlockSpec((mp, tn), lambda j: (0, j))),
        compiler_params=pltpu.CompilerParams(
            dimension_semantics=("parallel",),
            vmem_limit_bytes=_VMEM_LIMIT),
        cost_estimate=cost,
    )(zp, wmatp, biasp)


def _pallas_deconv_mm_bn(pats, wmat, *, tm, tk, out_dtype=jnp.bfloat16):
    _, m_pad, kk_pad = pats.shape
    coutp = wmat.shape[2]
    num_m, num_k = m_pad // tm, kk_pad // tk
    cost = pl.CostEstimate(
        flops=2 * 4 * m_pad * kk_pad * coutp, transcendentals=0,
        bytes_accessed=4 * (m_pad * kk_pad * 2 + kk_pad * coutp * 2
                            + m_pad * coutp * 2 + num_m * 8 * coutp * 4))
    return pl.pallas_call(
        _mm_bn_kernel,
        out_shape=(jax.ShapeDtypeStruct((4, m_pad, coutp), out_dtype),
                   jax.ShapeDtypeStruct((4, num_m * 8, coutp), jnp.float32)),
        grid_spec=pltpu.PrefetchScalarGridSpec(
            num_scalar_prefetch=0,
            grid=(4, num_m, num_k),
            in_specs=[pl.BlockSpec((None, tm, tk), lambda ph, i, k: (ph, i, k)),
                      pl.BlockSpec((None, tk, coutp), lambda ph, i, k: (ph, k, 0))],
            out_specs=(pl.BlockSpec((None, tm, coutp), lambda ph, i, k: (ph, i, 0)),
                       pl.BlockSpec((None, 8, coutp), lambda ph, i, k: (ph, i, 0))),
            scratch_shapes=[pltpu.VMEM((tm, coutp), jnp.float32)]),
        compiler_params=pltpu.CompilerParams(
            dimension_semantics=("parallel", "parallel", "arbitrary"),
            vmem_limit_bytes=_VMEM_LIMIT),
        cost_estimate=cost,
    )(pats, wmat)


def _pallas_deconv_mm_act(pats, wmat, bias, *, act, tm, tk, out_dtype=jnp.bfloat16):
    _, m_pad, kk_pad = pats.shape
    coutp = wmat.shape[2]
    num_m, num_k = m_pad // tm, kk_pad // tk
    cost = pl.CostEstimate(
        flops=2 * 4 * m_pad * kk_pad * coutp,
        transcendentals=4 * m_pad * coutp if act == "sigmoid" else 0,
        bytes_accessed=4 * (m_pad * kk_pad * 2 + kk_pad * coutp * 2
                            + m_pad * coutp * 2))
    return pl.pallas_call(
        functools.partial(_mm_act_kernel, act=act),
        out_shape=jax.ShapeDtypeStruct((4, m_pad, coutp), out_dtype),
        grid_spec=pltpu.PrefetchScalarGridSpec(
            num_scalar_prefetch=0,
            grid=(4, num_m, num_k),
            in_specs=[pl.BlockSpec((None, tm, tk), lambda ph, i, k: (ph, i, k)),
                      pl.BlockSpec((None, tk, coutp), lambda ph, i, k: (ph, k, 0)),
                      pl.BlockSpec((1, coutp), lambda ph, i, k: (0, 0))],
            out_specs=pl.BlockSpec((None, tm, coutp), lambda ph, i, k: (ph, i, 0)),
            scratch_shapes=[pltpu.VMEM((tm, coutp), jnp.float32)]),
        compiler_params=pltpu.CompilerParams(
            dimension_semantics=("parallel", "parallel", "arbitrary"),
            vmem_limit_bytes=_VMEM_LIMIT),
        cost_estimate=cost,
    )(pats, wmat, bias)


def _pallas_bn_act(y2d, scale, shift, *, act, out_dtype=jnp.bfloat16):
    rows, coutp = y2d.shape
    target = max(8, min(_TM_BN, (2 * 1024 * 1024) // (2 * coutp)))
    tr = _pick_tile(rows, target, 8)
    cost = pl.CostEstimate(
        flops=3 * rows * coutp,
        transcendentals=rows * coutp if act == "sigmoid" else 0,
        bytes_accessed=rows * coutp * 4 + 2 * 4 * coutp)
    return pl.pallas_call(
        functools.partial(_bn_act_kernel, act=act),
        out_shape=jax.ShapeDtypeStruct((rows, coutp), out_dtype),
        grid_spec=pltpu.PrefetchScalarGridSpec(
            num_scalar_prefetch=0,
            grid=(rows // tr,),
            in_specs=[pl.BlockSpec((tr, coutp), lambda i: (i, 0)),
                      pl.BlockSpec((1, coutp), lambda i: (0, 0)),
                      pl.BlockSpec((1, coutp), lambda i: (0, 0))],
            out_specs=pl.BlockSpec((tr, coutp), lambda i: (i, 0))),
        compiler_params=pltpu.CompilerParams(
            dimension_semantics=("parallel",),
            vmem_limit_bytes=_VMEM_LIMIT),
        cost_estimate=cost,
    )(y2d, scale, shift)


# ----------------------------------------------------------------------------
# Sub-pixel (phase) decomposition glue for stride-2 / k=4 / pad=1 ConvTranspose
# ----------------------------------------------------------------------------
def _phase_patches_s2(x):
    """x: (N,H,W,C) -> (4, N*H*W, 4*C). Phase p = ph*2+pw produces output
    pixels (2*oh+ph, 2*ow+pw) from the 2x2 un-dilated window at (oh, ow)."""
    n, h, w, c = x.shape
    xp = jnp.pad(x, ((0, 0), (1, 1), (1, 1), (0, 0)))
    phases = []
    for ph in range(2):
        for pw in range(2):
            taps = [xp[:, ph + dh:ph + dh + h, pw + dw:pw + dw + w, :]
                    for dh in range(2) for dw in range(2)]
            phases.append(jnp.stack(taps, axis=3).reshape(n * h * w, 4 * c))
    return jnp.stack(phases, axis=0)


_KH_FOR_PHASE = {0: (3, 1), 1: (2, 0)}   # kernel row used by tap dh for phase ph


def _phase_weights_s2(w):
    """w: (Cin, Cout, 4, 4) torch ConvTranspose2d layout -> (4, 4*Cin, Cout)."""
    cin, cout = w.shape[0], w.shape[1]
    mats = []
    for ph in range(2):
        for pw in range(2):
            taps = [w[:, :, _KH_FOR_PHASE[ph][dh], _KH_FOR_PHASE[pw][dw]]
                    for dh in range(2) for dw in range(2)]
            mats.append(jnp.stack(taps, axis=0).reshape(4 * cin, cout))
    return jnp.stack(mats, axis=0)


# ----------------------------------------------------------------------------
# Layers
# ----------------------------------------------------------------------------
def fc_layer(z, p, *, k, cout, out_dtype=jnp.bfloat16):
    """Layer 0: ConvTranspose2d on a 1x1 spatial input == plain matmul."""
    b, zdim = z.shape
    ncols = k * k * cout
    wmat = jnp.transpose(p["w"], (0, 2, 3, 1)).reshape(zdim, ncols)   # (ci,ho,wo,co)
    bias = jnp.tile(p["b"], k * k)

    mp = _round_up(b, 8)
    kp = _round_up(zdim, _LANE)
    ncolsp = _round_up(ncols, _LANE)
    tn = _pick_tile(ncolsp, _TN_FC, _LANE)

    zp = _pad2d(z, mp, kp).astype(jnp.bfloat16)
    wmatp = _pad2d(wmat, kp, ncolsp).astype(jnp.bfloat16)
    biasp = _pad1d(bias, ncolsp).reshape(1, ncolsp).astype(jnp.float32)

    out = _pallas_fc(zp, wmatp, biasp, tn=tn, out_dtype=out_dtype)
    return out[:b, :ncols].reshape(b, k, k, cout)


def deconv_s2_layer(x, cfg, p, act, out_dtype=jnp.bfloat16):
    cin, cout, k, stride, pad, bn = cfg
    assert (k, stride, pad) == (4, 2, 1), "phase decomposition assumes k=4,s=2,p=1"
    n, h, w, _ = x.shape
    m = n * h * w
    kk = 4 * cin

    # TODO(synk): gather the 2x2 phase taps inside the kernel (pl.ANY input +
    # per-tap index_map accumulation) to remove this remaining XLA-side patch
    # materialization (already 4x smaller and zero-free vs. dilated im2col).
    pats = _phase_patches_s2(x.astype(jnp.bfloat16))            # (4, m, kk)
    wmat = _phase_weights_s2(p["w"]).astype(jnp.bfloat16)       # (4, kk, cout)

    kk_pad = _round_up(kk, _LANE)
    tk = _pick_tile(kk_pad, _TK, _LANE)
    kk_pad = _round_up(kk_pad, tk)
    tm = _pick_tile(m, _TM, 8)
    m_pad = _round_up(m, tm)
    coutp = _round_up(cout, _LANE)

    if pats.shape != (4, m_pad, kk_pad):
        pats = jnp.pad(pats, ((0, 0), (0, m_pad - m), (0, kk_pad - kk)))
    if wmat.shape != (4, kk_pad, coutp):
        wmat = jnp.pad(wmat, ((0, 0), (0, kk_pad - kk), (0, coutp - cout)))

    if bn:
        # Conv bias dropped: it cancels exactly in the BN mean subtraction, and
        # keeps zero-padded rows at exactly 0 so they never pollute the stats.
        y, stats = _pallas_deconv_mm_bn(pats, wmat, tm=tm, tk=tk)
        num_m = m_pad // tm
        st = stats.reshape(4, num_m, 8, coutp)
        cnt = jnp.float32(4 * m)                                 # N * Ho * Wo
        ssum = jnp.sum(st[:, :, 0, :], axis=(0, 1))
        ssq = jnp.sum(st[:, :, 1, :], axis=(0, 1))
        mean = ssum / cnt
        var = jnp.maximum(ssq / cnt - mean * mean, 0.0)
        inv = lax.rsqrt(var + EPS)
        gamma = _pad1d(p["gamma"], coutp)
        beta = _pad1d(p["beta"], coutp)
        scale = (gamma * inv).reshape(1, coutp).astype(jnp.float32)
        shift = (beta - mean * gamma * inv).reshape(1, coutp).astype(jnp.float32)
        y = _pallas_bn_act(y.reshape(4 * m_pad, coutp), scale, shift,
                           act=act, out_dtype=out_dtype)
        y = y.reshape(4, m_pad, coutp)
    else:
        bias = _pad1d(p["b"], coutp).reshape(1, coutp).astype(jnp.float32)
        y = _pallas_deconv_mm_act(pats, wmat, bias, act=act, tm=tm, tk=tk,
                                  out_dtype=out_dtype)

    # Phase interleave (depth-to-space) back to NHWC.
    # TODO(synk): fold this interleave (and the final NHWC->NCHW transpose) into
    # the last kernel's out_spec (channel-on-sublane layout) instead of XLA.
    y = y[:, :m, :cout].reshape(2, 2, n, h, w, cout)
    return jnp.transpose(y, (2, 3, 0, 4, 1, 5)).reshape(n, 2 * h, 2 * w, cout)


# ----------------------------------------------------------------------------
# Generator
# ----------------------------------------------------------------------------
def generator_layer_cfgs(z_dim=256, image_size=128, conv_dim=64):
    ks = int(image_size / 16)
    return (
        # (Cin,        Cout,         K,  stride, pad, bn)
        (z_dim,        conv_dim * 8, ks, 1,      0,   False),   # fc
        (conv_dim * 8, conv_dim * 4, 4,  2,      1,   True),    # deconv1
        (conv_dim * 4, conv_dim * 2, 4,  2,      1,   True),    # deconv2
        (conv_dim * 2, conv_dim,     4,  2,      1,   True),    # deconv3
        (conv_dim,     3,            4,  2,      1,   False),   # deconv4
    )


def init_generator_params(key, cfgs):
    params = []
    for cin, cout, k, _, _, _ in cfgs:
        key, kw, kb, kg, kbt = jax.random.split(key, 5)
        params.append(dict(
            w=0.05 * jax.random.normal(kw, (cin, cout, k, k), jnp.float32),
            b=0.05 * jax.random.normal(kb, (cout,), jnp.float32),
            gamma=1.0 + 0.05 * jax.random.normal(kg, (cout,), jnp.float32),
            beta=0.05 * jax.random.normal(kbt, (cout,), jnp.float32)))
    return params


def generator_forward(cfgs, params, z):
    # torch: z.view(B, z_dim, 1, 1); layer 0 is a plain matmul producing NHWC.
    cfg0 = cfgs[0]
    x = fc_layer(z.astype(jnp.float32), params[0], k=cfg0[2], cout=cfg0[1])
    for cfg, p, act in zip(cfgs[1:], params[1:], _ACTS[1:]):
        x = deconv_s2_layer(x, cfg, p, act)
    # Single f32 cast + NCHW transpose at the very end.
    return jnp.transpose(x, (0, 3, 1, 2)).astype(jnp.float32)


# ----------------------------------------------------------------------------
# Pure-JAX reference (lax.conv_general_dilated, bf16 conv operands like kernels)
# ----------------------------------------------------------------------------
def _reference_forward(cfgs, params, z):
    x = z.reshape(z.shape[0], 1, 1, z.shape[1]).astype(jnp.float32)
    for (cin, cout, k, stride, pad, bn), p, act in zip(cfgs, params, _ACTS):
        w_hwio = jnp.transpose(p["w"][:, :, ::-1, ::-1], (2, 3, 0, 1))
        q = k - 1 - pad
        y = lax.conv_general_dilated(
            x.astype(jnp.bfloat16), w_hwio.astype(jnp.bfloat16),
            window_strides=(1, 1), padding=[(q, q), (q, q)],
            lhs_dilation=(stride, stride),
            dimension_numbers=("NHWC", "HWIO", "NHWC"),
            preferred_element_type=jnp.float32)
        y = y + p["b"].reshape(1, 1, 1, -1)
        if bn:
            mean = jnp.mean(y, axis=(0, 1, 2), keepdims=True)
            var = jnp.mean(jnp.square(y - mean), axis=(0, 1, 2), keepdims=True)
            y = (y - mean) / jnp.sqrt(var + EPS)
            y = y * p["gamma"].reshape(1, 1, 1, -1) + p["beta"].reshape(1, 1, 1, -1)
        if act == "relu":
            y = jnp.maximum(y, 0.0)
        elif act == "sigmoid":
            y = 1.0 / (1.0 + jnp.exp(-y))
        x = y
    return jnp.transpose(x, (0, 3, 1, 2))


if __name__ == "__main__":
    # Small shapes consistent with the module: z_dim=16, image_size=32, conv_dim=8.
    B, z_dim, image_size, conv_dim = 2, 16, 32, 8
    cfgs = generator_layer_cfgs(z_dim=z_dim, image_size=image_size, conv_dim=conv_dim)

    key = jax.random.PRNGKey(0)
    key, kz = jax.random.split(key)
    params = init_generator_params(key, cfgs)
    z = jax.random.normal(kz, (B, z_dim), jnp.float32)

    fwd = jax.jit(functools.partial(generator_forward, cfgs))
    out = jax.block_until_ready(fwd(params, z))
    assert out.shape == (B, 3, image_size, image_size), out.shape

    ref = jax.block_until_ready(_reference_forward(cfgs, params, z))
    err = float(jnp.max(jnp.abs(out - ref)))
    assert err < 2e-2, f"max abs err {err}"

    print("KERNEL_OK")
</pallas_src>

<mosaic_0001>
module attributes {stable_mosaic.version = 11 : i64} {
  func.func @_fc_kernel(%arg0: i32, %arg1: memref<8x128xbf16, #tpu.memory_space<vmem>>, %arg2: memref<128x256xbf16, #tpu.memory_space<vmem>>, %arg3: memref<1x256xf32, #tpu.memory_space<vmem>>, %arg4: memref<8x256xbf16, #tpu.memory_space<vmem>>) attributes {dimension_semantics = [#tpu.dimension_semantics<parallel>], iteration_bounds = array<i64: 1>, scalar_prefetch = 0 : i64, scratch_operands = 0 : i64, tpu.core_type = #tpu.core_type<tc>, window_params = [{pipeline_mode = #tpu.pipeline_mode<synchronous>, transform_indices = @transform_0, window_bounds = array<i64: 8, 128>}, {transform_indices = @transform_1, window_bounds = array<i64: 128, 256>}, {transform_indices = @transform_2, window_bounds = array<i64: 1, 256>}, {transform_indices = @transform_3, window_bounds = array<i64: 8, 256>}]} {
    %c0 = arith.constant 0 : index
    %c0_0 = arith.constant 0 : index
    %0 = vector.load %arg1[%c0, %c0_0] : memref<8x128xbf16, #tpu.memory_space<vmem>>, vector<8x128xbf16>
    %c0_1 = arith.constant 0 : index
    %c0_2 = arith.constant 0 : index
    %1 = vector.load %arg2[%c0_1, %c0_2] : memref<128x256xbf16, #tpu.memory_space<vmem>>, vector<128x256xbf16>
    %cst = arith.constant dense<0.000000e+00> : vector<8x256xf32>
    %2 = tpu.matmul %0, %1, %cst {dimension_numbers = #tpu.dot_dimension_numbers<[1], [0], [0], [1], [0, 0, 1, 1], [], []>} : vector<8x128xbf16>, vector<128x256xbf16>, vector<8x256xf32> -> vector<8x256xf32>
    %c0_3 = arith.constant 0 : index
    %c0_4 = arith.constant 0 : index
    %3 = vector.load %arg3[%c0_3, %c0_4] : memref<1x256xf32, #tpu.memory_space<vmem>>, vector<1x256xf32>
    %4 = vector.broadcast %3 : vector<1x256xf32> to vector<8x256xf32>
    %5 = arith.addf %2, %4 : vector<8x256xf32>
    %6 = arith.truncf %5 : vector<8x256xf32> to vector<8x256xbf16>
    %c0_5 = arith.constant 0 : index
    %c0_6 = arith.constant 0 : index
    %7 = vector.load %arg4[%c0_5, %c0_6] : memref<8x256xbf16, #tpu.memory_space<vmem>>, vector<8x256xbf16>
    tpu.vector_store %arg4[%c0_5, %c0_6], %6 {strides = array<i32>} : memref<8x256xbf16, #tpu.memory_space<vmem>>, vector<8x256xbf16>,
    return
  }
  func.func @transform_0(%arg0: i32) -> (i32, i32) {
    %c0_i32 = arith.constant 0 : i32
    %c0_i32_0 = arith.constant 0 : i32
    %c0_i32_1 = arith.constant 0 : i32
    return %c0_i32, %c0_i32_0 : i32, i32
  }
  func.func @transform_1(%arg0: i32) -> (i32, i32) {
    %c0_i32 = arith.constant 0 : i32
    %c0_i32_0 = arith.constant 0 : i32
    return %c0_i32, %arg0 : i32, i32
  }
  func.func @transform_2(%arg0: i32) -> (i32, i32) {
    %c0_i32 = arith.constant 0 : i32
    %c0_i32_0 = arith.constant 0 : i32
    return %c0_i32, %arg0 : i32, i32
  }
  func.func @transform_3(%arg0: i32) -> (i32, i32) {
    %c0_i32 = arith.constant 0 : i32
    %c0_i32_0 = arith.constant 0 : i32
    return %c0_i32, %arg0 : i32, i32
  }
}

module attributes {stable_mosaic.version = 11 : i64} {
  func.func @_mm_bn_kernel(%arg0: i32, %arg1: i32, %arg2: i32, %arg3: memref<1x8x256xbf16, #tpu.memory_space<vmem>>, %arg4: memref<1x256x128xbf16, #tpu.memory_space<vmem>>, %arg5: memref<1x8x128xbf16, #tpu.memory_space<vmem>>, %arg6: memref<1x8x128xf32, #tpu.memory_space<vmem>>, %arg7: memref<8x128xf32, #tpu.memory_space<vmem>>) attributes {dimension_semantics = [#tpu.dimension_semantics<parallel>, #tpu.dimension_semantics<parallel>, #tpu.dimension_semantics<arbitrary>], iteration_bounds = array<i64: 4, 1, 1>, scalar_prefetch = 0 : i64, scratch_operands = 1 : i64, tpu.core_type = #tpu.core_type<tc>, window_params = [{transform_indices = @transform_0, window_bounds = array<i64: 1, 8, 256>}, {transform_indices = @transform_1, window_bounds = array<i64: 1, 256, 128>}, {transform_indices = @transform_2, window_bounds = array<i64: 1, 8, 128>}, {transform_indices = @transform_3, window_bounds = array<i64: 1, 8, 128>}]} {
    %c0_i32 = arith.constant 0 : i32
    %0 = arith.cmpi eq, %arg2, %c0_i32 : i32
    %1 = arith.extui %0 : i1 to i32
    %c0_i32_0 = arith.constant 0 : i32
    %2 = arith.cmpi ne, %1, %c0_i32_0 : i32
    scf.if %2 {
      %cst_12 = arith.constant 0.000000e+00 : f32
      %14 = vector.broadcast %cst_12 : f32 to vector<8x128xf32>
      %c0_13 = arith.constant 0 : index
      %c0_14 = arith.constant 0 : index
      %15 = vector.load %arg7[%c0_13, %c0_14] : memref<8x128xf32, #tpu.memory_space<vmem>>, vector<8x128xf32>
      tpu.vector_store %arg7[%c0_13, %c0_14], %14 {strides = array<i32>} : memref<8x128xf32, #tpu.memory_space<vmem>>, vector<8x128xf32>,
    } else {
    }
    %c0 = arith.constant 0 : index
    %c0_1 = arith.constant 0 : index
    %3 = vector.load %arg7[%c0, %c0_1] : memref<8x128xf32, #tpu.memory_space<vmem>>, vector<8x128xf32>
    %c0_2 = arith.constant 0 : index
    %c0_3 = arith.constant 0 : index
    %c0_4 = arith.constant 0 : index
    %4 = vector.load %arg3[%c0_2, %c0_3, %c0_4] : memref<1x8x256xbf16, #tpu.memory_space<vmem>>, vector<1x8x256xbf16>
    %5 = vector.shape_cast %4 : vector<1x8x256xbf16> to vector<8x256xbf16>
    %c0_5 = arith.constant 0 : index
    %c0_6 = arith.constant 0 : index
    %c0_7 = arith.constant 0 : index
    %6 = vector.load %arg4[%c0_5, %c0_6, %c0_7] : memref<1x256x128xbf16, #tpu.memory_space<vmem>>, vector<1x256x128xbf16>
    %7 = vector.shape_cast %6 : vector<1x256x128xbf16> to vector<256x128xbf16>
    %cst = arith.constant dense<0.000000e+00> : vector<8x128xf32>
    %8 = tpu.matmul %5, %7, %cst {dimension_numbers = #tpu.dot_dimension_numbers<[1], [0], [0], [1], [0, 0, 1, 1], [], []>} : vector<8x256xbf16>, vector<256x128xbf16>, vector<8x128xf32> -> vector<8x128xf32>
    %9 = arith.addf %3, %8 : vector<8x128xf32>
    %c0_8 = arith.constant 0 : index
    %c0_9 = arith.constant 0 : index
    %10 = vector.load %arg7[%c0_8, %c0_9] : memref<8x128xf32, #tpu.memory_space<vmem>>, vector<8x128xf32>
    tpu.vector_store %arg7[%c0_8, %c0_9], %9 {strides = array<i32>} : memref<8x128xf32, #tpu.memory_space<vmem>>, vector<8x128xf32>,
    %c0_i32_10 = arith.constant 0 : i32
    %11 = arith.cmpi eq, %arg2, %c0_i32_10 : i32
    %12 = arith.extui %11 : i1 to i32
    %c0_i32_11 = arith.constant 0 : i32
    %13 = arith.cmpi ne, %12, %c0_i32_11 : i32
    scf.if %13 {
      %c0_12 = arith.constant 0 : index
      %c0_13 = arith.constant 0 : index
      %14 = vector.load %arg7[%c0_12, %c0_13] : memref<8x128xf32, #tpu.memory_space<vmem>>, vector<8x128xf32>
      %15 = arith.truncf %14 : vector<8x128xf32> to vector<8x128xbf16>
      %c0_14 = arith.constant 0 : index
      %c0_15 = arith.constant 0 : index
      %c0_16 = arith.constant 0 : index
      %16 = vector.load %arg5[%c0_14, %c0_15, %c0_16] : memref<1x8x128xbf16, #tpu.memory_space<vmem>>, vector<1x8x128xbf16>
      %17 = vector.shape_cast %16 : vector<1x8x128xbf16> to vector<8x128xbf16>
      %18 = vector.shape_cast %15 : vector<8x128xbf16> to vector<1x8x128xbf16>
      tpu.vector_store %arg5[%c0_14, %c0_15, %c0_16], %18 {strides = array<i32>} : memref<1x8x128xbf16, #tpu.memory_space<vmem>>, vector<1x8x128xbf16>,
      %cst_17 = arith.constant dense<0.000000e+00> : vector<128xf32>
      %19 = vector.multi_reduction <add>, %14, %cst_17 [0] : vector<8x128xf32> to vector<128xf32>
      %20 = vector.shape_cast %19 : vector<128xf32> to vector<1x128xf32>
      %21 = arith.mulf %14, %14 : vector<8x128xf32>
      %cst_18 = arith.constant dense<0.000000e+00> : vector<128xf32>
      %22 = vector.multi_reduction <add>, %21, %cst_18 [0] : vector<8x128xf32> to vector<128xf32>
      %23 = vector.shape_cast %22 : vector<128xf32> to vector<1x128xf32>
      %24 = tpu.iota {dimensions = array<i32: 0>} : vector<8x128xi32>
      %c0_i32_19 = arith.constant 0 : i32
      %25 = vector.broadcast %c0_i32_19 : i32 to vector<8x128xi32>
      %26 = arith.cmpi eq, %24, %25 : vector<8x128xi32>
      %c1_i32 = arith.constant 1 : i32
      %27 = vector.broadcast %c1_i32 : i32 to vector<8x128xi32>
      %28 = arith.cmpi eq, %24, %27 : vector<8x128xi32>
      %cst_20 = arith.constant 0.000000e+00 : f32
      %29 = vector.shape_cast %23 : vector<1x128xf32> to vector<1x128xf32>
      %30 = vector.broadcast %29 : vector<1x128xf32> to vector<8x128xf32>
      %31 = vector.broadcast %cst_20 : f32 to vector<8x128xf32>
      %32 = arith.select %28, %30, %31 : vector<8x128xi1>, vector<8x128xf32>
      %33 = vector.shape_cast %20 : vector<1x128xf32> to vector<1x128xf32>
      %34 = vector.broadcast %33 : vector<1x128xf32> to vector<8x128xf32>
      %35 = arith.select %26, %34, %32 : vector<8x128xi1>, vector<8x128xf32>
      %c0_21 = arith.constant 0 : index
      %c0_22 = arith.constant 0 : index
      %c0_23 = arith.constant 0 : index
      %36 = vector.load %arg6[%c0_21, %c0_22, %c0_23] : memref<1x8x128xf32, #tpu.memory_space<vmem>>, vector<1x8x128xf32>
      %37 = vector.shape_cast %36 : vector<1x8x128xf32> to vector<8x128xf32>
      %38 = vector.shape_cast %35 : vector<8x128xf32> to vector<1x8x128xf32>
      tpu.vector_store %arg6[%c0_21, %c0_22, %c0_23], %38 {strides = array<i32>} : memref<1x8x128xf32, #tpu.memory_space<vmem>>, vector<1x8x128xf32>,
    } else {
    }
    return
  }
  func.func @transform_0(%arg0: i32, %arg1: i32, %arg2: i32) -> (i32, i32, i32) {
    %c0_i32 = arith.constant 0 : i32
    return %arg0, %arg1, %arg2 : i32, i32, i32
  }
  func.func @transform_1(%arg0: i32, %arg1: i32, %arg2: i32) -> (i32, i32, i32) {
    %c0_i32 = arith.constant 0 : i32
    %c0_i32_0 = arith.constant 0 : i32
    return %arg0, %arg2, %c0_i32 : i32, i32, i32
  }
  func.func @transform_2(%arg0: i32, %arg1: i32, %arg2: i32) -> (i32, i32, i32) {
    %c0_i32 = arith.constant 0 : i32
    %c0_i32_0 = arith.constant 0 : i32
    return %arg0, %arg1, %c0_i32 : i32, i32, i32
  }
  func.func @transform_3(%arg0: i32, %arg1: i32, %arg2: i32) -> (i32, i32, i32) {
    %c0_i32 = arith.constant 0 : i32
    %c0_i32_0 = arith.constant 0 : i32
    return %arg0, %arg1, %c0_i32 : i32, i32, i32
  }
}

module attributes {stable_mosaic.version = 11 : i64} {
  func.func @_bn_act_kernel(%arg0: i32, %arg1: memref<32x128xbf16, #tpu.memory_space<vmem>>, %arg2: memref<1x128xf32, #tpu.memory_space<vmem>>, %arg3: memref<1x128xf32, #tpu.memory_space<vmem>>, %arg4: memref<32x128xbf16, #tpu.memory_space<vmem>>) attributes {dimension_semantics = [#tpu.dimension_semantics<parallel>], iteration_bounds = array<i64: 1>, scalar_prefetch = 0 : i64, scratch_operands = 0 : i64, tpu.core_type = #tpu.core_type<tc>, window_params = [{transform_indices = @transform_0, window_bounds = array<i64: 32, 128>}, {pipeline_mode = #tpu.pipeline_mode<synchronous>, transform_indices = @transform_1, window_bounds = array<i64: 1, 128>}, {pipeline_mode = #tpu.pipeline_mode<synchronous>, transform_indices = @transform_2, window_bounds = array<i64: 1, 128>}, {transform_indices = @transform_3, window_bounds = array<i64: 32, 128>}]} {
    %c0 = arith.constant 0 : index
    %c0_0 = arith.constant 0 : index
    %0 = vector.load %arg1[%c0, %c0_0] : memref<32x128xbf16, #tpu.memory_space<vmem>>, vector<32x128xbf16>
    %1 = arith.extf %0 : vector<32x128xbf16> to vector<32x128xf32>
    %c0_1 = arith.constant 0 : index
    %c0_2 = arith.constant 0 : index
    %2 = vector.load %arg2[%c0_1, %c0_2] : memref<1x128xf32, #tpu.memory_space<vmem>>, vector<1x128xf32>
    %3 = vector.broadcast %2 : vector<1x128xf32> to vector<32x128xf32>
    %4 = arith.mulf %1, %3 : vector<32x128xf32>
    %c0_3 = arith.constant 0 : index
    %c0_4 = arith.constant 0 : index
    %5 = vector.load %arg3[%c0_3, %c0_4] : memref<1x128xf32, #tpu.memory_space<vmem>>, vector<1x128xf32>
    %6 = vector.broadcast %5 : vector<1x128xf32> to vector<32x128xf32>
    %7 = arith.addf %4, %6 : vector<32x128xf32>
    %cst = arith.constant 0.000000e+00 : f32
    %8 = vector.broadcast %cst : f32 to vector<32x128xf32>
    %9 = arith.maximumf %7, %8 : vector<32x128xf32>
    %10 = arith.truncf %9 : vector<32x128xf32> to vector<32x128xbf16>
    %c0_5 = arith.constant 0 : index
    %c0_6 = arith.constant 0 : index
    %11 = vector.load %arg4[%c0_5, %c0_6] : memref<32x128xbf16, #tpu.memory_space<vmem>>, vector<32x128xbf16>
    tpu.vector_store %arg4[%c0_5, %c0_6], %10 {strides = array<i32>} : memref<32x128xbf16, #tpu.memory_space<vmem>>, vector<32x128xbf16>,
    return
  }
  func.func @transform_0(%arg0: i32) -> (i32, i32) {
    %c0_i32 = arith.constant 0 : i32
    %c0_i32_0 = arith.constant 0 : i32
    return %arg0, %c0_i32 : i32, i32
  }
  func.func @transform_1(%arg0: i32) -> (i32, i32) {
    %c0_i32 = arith.constant 0 : i32
    %c0_i32_0 = arith.constant 0 : i32
    %c0_i32_1 = arith.constant 0 : i32
    return %c0_i32, %c0_i32_0 : i32, i32
  }
  func.func @transform_2(%arg0: i32) -> (i32, i32) {
    %c0_i32 = arith.constant 0 : i32
    %c0_i32_0 = arith.constant 0 : i32
    %c0_i32_1 = arith.constant 0 : i32
    return %c0_i32, %c0_i32_0 : i32, i32
  }
  func.func @transform_3(%arg0: i32) -> (i32, i32) {
    %c0_i32 = arith.constant 0 : i32
    %c0_i32_0 = arith.constant 0 : i32
    return %arg0, %c0_i32 : i32, i32
  }
}

module attributes {stable_mosaic.version = 11 : i64} {
  func.func @_mm_bn_kernel(%arg0: i32, %arg1: i32, %arg2: i32, %arg3: memref<1x32x128xbf16, #tpu.memory_space<vmem>>, %arg4: memref<1x128x128xbf16, #tpu.memory_space<vmem>>, %arg5: memref<1x32x128xbf16, #tpu.memory_space<vmem>>, %arg6: memref<1x8x128xf32, #tpu.memory_space<vmem>>, %arg7: memref<32x128xf32, #tpu.memory_space<vmem>>) attributes {dimension_semantics = [#tpu.dimension_semantics<parallel>, #tpu.dimension_semantics<parallel>, #tpu.dimension_semantics<arbitrary>], iteration_bounds = array<i64: 4, 1, 1>, scalar_prefetch = 0 : i64, scratch_operands = 1 : i64, tpu.core_type = #tpu.core_type<tc>, window_params = [{transform_indices = @transform_0, window_bounds = array<i64: 1, 32, 128>}, {transform_indices = @transform_1, window_bounds = array<i64: 1, 128, 128>}, {transform_indices = @transform_2, window_bounds = array<i64: 1, 32, 128>}, {transform_indices = @transform_3, window_bounds = array<i64: 1, 8, 128>}]} {
    %c0_i32 = arith.constant 0 : i32
    %0 = arith.cmpi eq, %arg2, %c0_i32 : i32
    %1 = arith.extui %0 : i1 to i32
    %c0_i32_0 = arith.constant 0 : i32
    %2 = arith.cmpi ne, %1, %c0_i32_0 : i32
    scf.if %2 {
      %cst_12 = arith.constant 0.000000e+00 : f32
      %14 = vector.broadcast %cst_12 : f32 to vector<32x128xf32>
      %c0_13 = arith.constant 0 : index
      %c0_14 = arith.constant 0 : index
      %15 = vector.load %arg7[%c0_13, %c0_14] : memref<32x128xf32, #tpu.memory_space<vmem>>, vector<32x128xf32>
      tpu.vector_store %arg7[%c0_13, %c0_14], %14 {strides = array<i32>} : memref<32x128xf32, #tpu.memory_space<vmem>>, vector<32x128xf32>,
    } else {
    }
    %c0 = arith.constant 0 : index
    %c0_1 = arith.constant 0 : index
    %3 = vector.load %arg7[%c0, %c0_1] : memref<32x128xf32, #tpu.memory_space<vmem>>, vector<32x128xf32>
    %c0_2 = arith.constant 0 : index
    %c0_3 = arith.constant 0 : index
    %c0_4 = arith.constant 0 : index
    %4 = vector.load %arg3[%c0_2, %c0_3, %c0_4] : memref<1x32x128xbf16, #tpu.memory_space<vmem>>, vector<1x32x128xbf16>
    %5 = vector.shape_cast %4 : vector<1x32x128xbf16> to vector<32x128xbf16>
    %c0_5 = arith.constant 0 : index
    %c0_6 = arith.constant 0 : index
    %c0_7 = arith.constant 0 : index
    %6 = vector.load %arg4[%c0_5, %c0_6, %c0_7] : memref<1x128x128xbf16, #tpu.memory_space<vmem>>, vector<1x128x128xbf16>
    %7 = vector.shape_cast %6 : vector<1x128x128xbf16> to vector<128x128xbf16>
    %cst = arith.constant dense<0.000000e+00> : vector<32x128xf32>
    %8 = tpu.matmul %5, %7, %cst {dimension_numbers = #tpu.dot_dimension_numbers<[1], [0], [0], [1], [0, 0, 1, 1], [], []>} : vector<32x128xbf16>, vector<128x128xbf16>, vector<32x128xf32> -> vector<32x128xf32>
    %9 = arith.addf %3, %8 : vector<32x128xf32>
    %c0_8 = arith.constant 0 : index
    %c0_9 = arith.constant 0 : index
    %10 = vector.load %arg7[%c0_8, %c0_9] : memref<32x128xf32, #tpu.memory_space<vmem>>, vector<32x128xf32>
    tpu.vector_store %arg7[%c0_8, %c0_9], %9 {strides = array<i32>} : memref<32x128xf32, #tpu.memory_space<vmem>>, vector<32x128xf32>,
    %c0_i32_10 = arith.constant 0 : i32
    %11 = arith.cmpi eq, %arg2, %c0_i32_10 : i32
    %12 = arith.extui %11 : i1 to i32
    %c0_i32_11 = arith.constant 0 : i32
    %13 = arith.cmpi ne, %12, %c0_i32_11 : i32
    scf.if %13 {
      %c0_12 = arith.constant 0 : index
      %c0_13 = arith.constant 0 : index
      %14 = vector.load %arg7[%c0_12, %c0_13] : memref<32x128xf32, #tpu.memory_space<vmem>>, vector<32x128xf32>
      %15 = arith.truncf %14 : vector<32x128xf32> to vector<32x128xbf16>
      %c0_14 = arith.constant 0 : index
      %c0_15 = arith.constant 0 : index
      %c0_16 = arith.constant 0 : index
      %16 = vector.load %arg5[%c0_14, %c0_15, %c0_16] : memref<1x32x128xbf16, #tpu.memory_space<vmem>>, vector<1x32x128xbf16>
      %17 = vector.shape_cast %16 : vector<1x32x128xbf16> to vector<32x128xbf16>
      %18 = vector.shape_cast %15 : vector<32x128xbf16> to vector<1x32x128xbf16>
      tpu.vector_store %arg5[%c0_14, %c0_15, %c0_16], %18 {strides = array<i32>} : memref<1x32x128xbf16, #tpu.memory_space<vmem>>, vector<1x32x128xbf16>,
      %cst_17 = arith.constant dense<0.000000e+00> : vector<128xf32>
      %19 = vector.multi_reduction <add>, %14, %cst_17 [0] : vector<32x128xf32> to vector<128xf32>
      %20 = vector.shape_cast %19 : vector<128xf32> to vector<1x128xf32>
      %21 = arith.mulf %14, %14 : vector<32x128xf32>
      %cst_18 = arith.constant dense<0.000000e+00> : vector<128xf32>
      %22 = vector.multi_reduction <add>, %21, %cst_18 [0] : vector<32x128xf32> to vector<128xf32>
      %23 = vector.shape_cast %22 : vector<128xf32> to vector<1x128xf32>
      %24 = tpu.iota {dimensions = array<i32: 0>} : vector<8x128xi32>
      %c0_i32_19 = arith.constant 0 : i32
      %25 = vector.broadcast %c0_i32_19 : i32 to vector<8x128xi32>
      %26 = arith.cmpi eq, %24, %25 : vector<8x128xi32>
      %c1_i32 = arith.constant 1 : i32
      %27 = vector.broadcast %c1_i32 : i32 to vector<8x128xi32>
      %28 = arith.cmpi eq, %24, %27 : vector<8x128xi32>
      %cst_20 = arith.constant 0.000000e+00 : f32
      %29 = vector.shape_cast %23 : vector<1x128xf32> to vector<1x128xf32>
      %30 = vector.broadcast %29 : vector<1x128xf32> to vector<8x128xf32>
      %31 = vector.broadcast %cst_20 : f32 to vector<8x128xf32>
      %32 = arith.select %28, %30, %31 : vector<8x128xi1>, vector<8x128xf32>
      %33 = vector.shape_cast %20 : vector<1x128xf32> to vector<1x128xf32>
      %34 = vector.broadcast %33 : vector<1x128xf32> to vector<8x128xf32>
      %35 = arith.select %26, %34, %32 : vector<8x128xi1>, vector<8x128xf32>
      %c0_21 = arith.constant 0 : index
      %c0_22 = arith.constant 0 : index
      %c0_23 = arith.constant 0 : index
      %36 = vector.load %arg6[%c0_21, %c0_22, %c0_23] : memref<1x8x128xf32, #tpu.memory_space<vmem>>, vector<1x8x128xf32>
      %37 = vector.shape_cast %36 : vector<1x8x128xf32> to vector<8x128xf32>
      %38 = vector.shape_cast %35 : vector<8x128xf32> to vector<1x8x128xf32>
      tpu.vector_store %arg6[%c0_21, %c0_22, %c0_23], %38 {strides = array<i32>} : memref<1x8x128xf32, #tpu.memory_space<vmem>>, vector<1x8x128xf32>,
    } else {
    }
    return
  }
  func.func @transform_0(%arg0: i32, %arg1: i32, %arg2: i32) -> (i32, i32, i32) {
    %c0_i32 = arith.constant 0 : i32
    return %arg0, %arg1, %arg2 : i32, i32, i32
  }
  func.func @transform_1(%arg0: i32, %arg1: i32, %arg2: i32) -> (i32, i32, i32) {
    %c0_i32 = arith.constant 0 : i32
    %c0_i32_0 = arith.constant 0 : i32
    return %arg0, %arg2, %c0_i32 : i32, i32, i32
  }
  func.func @transform_2(%arg0: i32, %arg1: i32, %arg2: i32) -> (i32, i32, i32) {
    %c0_i32 = arith.constant 0 : i32
    %c0_i32_0 = arith.constant 0 : i32
    return %arg0, %arg1, %c0_i32 : i32, i32, i32
  }
  func.func @transform_3(%arg0: i32, %arg1: i32, %arg2: i32) -> (i32, i32, i32) {
    %c0_i32 = arith.constant 0 : i32
    %c0_i32_0 = arith.constant 0 : i32
    return %arg0, %arg1, %c0_i32 : i32, i32, i32
  }
}

module attributes {stable_mosaic.version = 11 : i64} {
  func.func @_bn_act_kernel(%arg0: i32, %arg1: memref<128x128xbf16, #tpu.memory_space<vmem>>, %arg2: memref<1x128xf32, #tpu.memory_space<vmem>>, %arg3: memref<1x128xf32, #tpu.memory_space<vmem>>, %arg4: memref<128x128xbf16, #tpu.memory_space<vmem>>) attributes {dimension_semantics = [#tpu.dimension_semantics<parallel>], iteration_bounds = array<i64: 1>, scalar_prefetch = 0 : i64, scratch_operands = 0 : i64, tpu.core_type = #tpu.core_type<tc>, window_params = [{transform_indices = @transform_0, window_bounds = array<i64: 128, 128>}, {pipeline_mode = #tpu.pipeline_mode<synchronous>, transform_indices = @transform_1, window_bounds = array<i64: 1, 128>}, {pipeline_mode = #tpu.pipeline_mode<synchronous>, transform_indices = @transform_2, window_bounds = array<i64: 1, 128>}, {transform_indices = @transform_3, window_bounds = array<i64: 128, 128>}]} {
    %c0 = arith.constant 0 : index
    %c0_0 = arith.constant 0 : index
    %0 = vector.load %arg1[%c0, %c0_0] : memref<128x128xbf16, #tpu.memory_space<vmem>>, vector<128x128xbf16>
    %1 = arith.extf %0 : vector<128x128xbf16> to vector<128x128xf32>
    %c0_1 = arith.constant 0 : index
    %c0_2 = arith.constant 0 : index
    %2 = vector.load %arg2[%c0_1, %c0_2] : memref<1x128xf32, #tpu.memory_space<vmem>>, vector<1x128xf32>
    %3 = vector.broadcast %2 : vector<1x128xf32> to vector<128x128xf32>
    %4 = arith.mulf %1, %3 : vector<128x128xf32>
    %c0_3 = arith.constant 0 : index
    %c0_4 = arith.constant 0 : index
    %5 = vector.load %arg3[%c0_3, %c0_4] : memref<1x128xf32, #tpu.memory_space<vmem>>, vector<1x128xf32>
    %6 = vector.broadcast %5 : vector<1x128xf32> to vector<128x128xf32>
    %7 = arith.addf %4, %6 : vector<128x128xf32>
    %cst = arith.constant 0.000000e+00 : f32
    %8 = vector.broadcast %cst : f32 to vector<128x128xf32>
    %9 = arith.maximumf %7, %8 : vector<128x128xf32>
    %10 = arith.truncf %9 : vector<128x128xf32> to vector<128x128xbf16>
    %c0_5 = arith.constant 0 : index
    %c0_6 = arith.constant 0 : index
    %11 = vector.load %arg4[%c0_5, %c0_6] : memref<128x128xbf16, #tpu.memory_space<vmem>>, vector<128x128xbf16>
    tpu.vector_store %arg4[%c0_5, %c0_6], %10 {strides = array<i32>} : memref<128x128xbf16, #tpu.memory_space<vmem>>, vector<128x128xbf16>,
    return
  }
  func.func @transform_0(%arg0: i32) -> (i32, i32) {
    %c0_i32 = arith.constant 0 : i32
    %c0_i32_0 = arith.constant 0 : i32
    return %arg0, %c0_i32 : i32, i32
  }
  func.func @transform_1(%arg0: i32) -> (i32, i32) {
    %c0_i32 = arith.constant 0 : i32
    %c0_i32_0 = arith.constant 0 : i32
    %c0_i32_1 = arith.constant 0 : i32
    return %c0_i32, %c0_i32_0 : i32, i32
  }
  func.func @transform_2(%arg0: i32) -> (i32, i32) {
    %c0_i32 = arith.constant 0 : i32
    %c0_i32_0 = arith.constant 0 : i32
    %c0_i32_1 = arith.constant 0 : i32
    return %c0_i32, %c0_i32_0 : i32, i32
  }
  func.func @transform_3(%arg0: i32) -> (i32, i32) {
    %c0_i32 = arith.constant 0 : i32
    %c0_i32_0 = arith.constant 0 : i32
    return %arg0, %c0_i32 : i32, i32
  }
}

module attributes {stable_mosaic.version = 11 : i64} {
  func.func @_mm_bn_kernel(%arg0: i32, %arg1: i32, %arg2: i32, %arg3: memref<1x128x128xbf16, #tpu.memory_space<vmem>>, %arg4: memref<1x128x128xbf16, #tpu.memory_space<vmem>>, %arg5: memref<1x128x128xbf16, #tpu.memory_space<vmem>>, %arg6: memref<1x8x128xf32, #tpu.memory_space<vmem>>, %arg7: memref<128x128xf32, #tpu.memory_space<vmem>>) attributes {dimension_semantics = [#tpu.dimension_semantics<parallel>, #tpu.dimension_semantics<parallel>, #tpu.dimension_semantics<arbitrary>], iteration_bounds = array<i64: 4, 1, 1>, scalar_prefetch = 0 : i64, scratch_operands = 1 : i64, tpu.core_type = #tpu.core_type<tc>, window_params = [{transform_indices = @transform_0, window_bounds = array<i64: 1, 128, 128>}, {transform_indices = @transform_1, window_bounds = array<i64: 1, 128, 128>}, {transform_indices = @transform_2, window_bounds = array<i64: 1, 128, 128>}, {transform_indices = @transform_3, window_bounds = array<i64: 1, 8, 128>}]} {
    %c0_i32 = arith.constant 0 : i32
    %0 = arith.cmpi eq, %arg2, %c0_i32 : i32
    %1 = arith.extui %0 : i1 to i32
    %c0_i32_0 = arith.constant 0 : i32
    %2 = arith.cmpi ne, %1, %c0_i32_0 : i32
    scf.if %2 {
      %cst_12 = arith.constant 0.000000e+00 : f32
      %14 = vector.broadcast %cst_12 : f32 to vector<128x128xf32>
      %c0_13 = arith.constant 0 : index
      %c0_14 = arith.constant 0 : index
      %15 = vector.load %arg7[%c0_13, %c0_14] : memref<128x128xf32, #tpu.memory_space<vmem>>, vector<128x128xf32>
      tpu.vector_store %arg7[%c0_13, %c0_14], %14 {strides = array<i32>} : memref<128x128xf32, #tpu.memory_space<vmem>>, vector<128x128xf32>,
    } else {
    }
    %c0 = arith.constant 0 : index
    %c0_1 = arith.constant 0 : index
    %3 = vector.load %arg7[%c0, %c0_1] : memref<128x128xf32, #tpu.memory_space<vmem>>, vector<128x128xf32>
    %c0_2 = arith.constant 0 : index
    %c0_3 = arith.constant 0 : index
    %c0_4 = arith.constant 0 : index
    %4 = vector.load %arg3[%c0_2, %c0_3, %c0_4] : memref<1x128x128xbf16, #tpu.memory_space<vmem>>, vector<1x128x128xbf16>
    %5 = vector.shape_cast %4 : vector<1x128x128xbf16> to vector<128x128xbf16>
    %c0_5 = arith.constant 0 : index
    %c0_6 = arith.constant 0 : index
    %c0_7 = arith.constant 0 : index
    %6 = vector.load %arg4[%c0_5, %c0_6, %c0_7] : memref<1x128x128xbf16, #tpu.memory_space<vmem>>, vector<1x128x128xbf16>
    %7 = vector.shape_cast %6 : vector<1x128x128xbf16> to vector<128x128xbf16>
    %cst = arith.constant dense<0.000000e+00> : vector<128x128xf32>
    %8 = tpu.matmul %5, %7, %cst {dimension_numbers = #tpu.dot_dimension_numbers<[1], [0], [0], [1], [0, 0, 1, 1], [], []>} : vector<128x128xbf16>, vector<128x128xbf16>, vector<128x128xf32> -> vector<128x128xf32>
    %9 = arith.addf %3, %8 : vector<128x128xf32>
    %c0_8 = arith.constant 0 : index
    %c0_9 = arith.constant 0 : index
    %10 = vector.load %arg7[%c0_8, %c0_9] : memref<128x128xf32, #tpu.memory_space<vmem>>, vector<128x128xf32>
    tpu.vector_store %arg7[%c0_8, %c0_9], %9 {strides = array<i32>} : memref<128x128xf32, #tpu.memory_space<vmem>>, vector<128x128xf32>,
    %c0_i32_10 = arith.constant 0 : i32
    %11 = arith.cmpi eq, %arg2, %c0_i32_10 : i32
    %12 = arith.extui %11 : i1 to i32
    %c0_i32_11 = arith.constant 0 : i32
    %13 = arith.cmpi ne, %12, %c0_i32_11 : i32
    scf.if %13 {
      %c0_12 = arith.constant 0 : index
      %c0_13 = arith.constant 0 : index
      %14 = vector.load %arg7[%c0_12, %c0_13] : memref<128x128xf32, #tpu.memory_space<vmem>>, vector<128x128xf32>
      %15 = arith.truncf %14 : vector<128x128xf32> to vector<128x128xbf16>
      %c0_14 = arith.constant 0 : index
      %c0_15 = arith.constant 0 : index
      %c0_16 = arith.constant 0 : index
      %16 = vector.load %arg5[%c0_14, %c0_15, %c0_16] : memref<1x128x128xbf16, #tpu.memory_space<vmem>>, vector<1x128x128xbf16>
      %17 = vector.shape_cast %16 : vector<1x128x128xbf16> to vector<128x128xbf16>
      %18 = vector.shape_cast %15 : vector<128x128xbf16> to vector<1x128x128xbf16>
      tpu.vector_store %arg5[%c0_14, %c0_15, %c0_16], %18 {strides = array<i32>} : memref<1x128x128xbf16, #tpu.memory_space<vmem>>, vector<1x128x128xbf16>,
      %cst_17 = arith.constant dense<0.000000e+00> : vector<128xf32>
      %19 = vector.multi_reduction <add>, %14, %cst_17 [0] : vector<128x128xf32> to vector<128xf32>
      %20 = vector.shape_cast %19 : vector<128xf32> to vector<1x128xf32>
      %21 = arith.mulf %14, %14 : vector<128x128xf32>
      %cst_18 = arith.constant dense<0.000000e+00> : vector<128xf32>
      %22 = vector.multi_reduction <add>, %21, %cst_18 [0] : vector<128x128xf32> to vector<128xf32>
      %23 = vector.shape_cast %22 : vector<128xf32> to vector<1x128xf32>
      %24 = tpu.iota {dimensions = array<i32: 0>} : vector<8x128xi32>
      %c0_i32_19 = arith.constant 0 : i32
      %25 = vector.broadcast %c0_i32_19 : i32 to vector<8x128xi32>
      %26 = arith.cmpi eq, %24, %25 : vector<8x128xi32>
      %c1_i32 = arith.constant 1 : i32
      %27 = vector.broadcast %c1_i32 : i32 to vector<8x128xi32>
      %28 = arith.cmpi eq, %24, %27 : vector<8x128xi32>
      %cst_20 = arith.constant 0.000000e+00 : f32
      %29 = vector.shape_cast %23 : vector<1x128xf32> to vector<1x128xf32>
      %30 = vector.broadcast %29 : vector<1x128xf32> to vector<8x128xf32>
      %31 = vector.broadcast %cst_20 : f32 to vector<8x128xf32>
      %32 = arith.select %28, %30, %31 : vector<8x128xi1>, vector<8x128xf32>
      %33 = vector.shape_cast %20 : vector<1x128xf32> to vector<1x128xf32>
      %34 = vector.broadcast %33 : vector<1x128xf32> to vector<8x128xf32>
      %35 = arith.select %26, %34, %32 : vector<8x128xi1>, vector<8x128xf32>
      %c0_21 = arith.constant 0 : index
      %c0_22 = arith.constant 0 : index
      %c0_23 = arith.constant 0 : index
      %36 = vector.load %arg6[%c0_21, %c0_22, %c0_23] : memref<1x8x128xf32, #tpu.memory_space<vmem>>, vector<1x8x128xf32>
      %37 = vector.shape_cast %36 : vector<1x8x128xf32> to vector<8x128xf32>
      %38 = vector.shape_cast %35 : vector<8x128xf32> to vector<1x8x128xf32>
      tpu.vector_store %arg6[%c0_21, %c0_22, %c0_23], %38 {strides = array<i32>} : memref<1x8x128xf32, #tpu.memory_space<vmem>>, vector<1x8x128xf32>,
    } else {
    }
    return
  }
  func.func @transform_0(%arg0: i32, %arg1: i32, %arg2: i32) -> (i32, i32, i32) {
    %c0_i32 = arith.constant 0 : i32
    return %arg0, %arg1, %arg2 : i32, i32, i32
  }
  func.func @transform_1(%arg0: i32, %arg1: i32, %arg2: i32) -> (i32, i32, i32) {
    %c0_i32 = arith.constant 0 : i32
    %c0_i32_0 = arith.constant 0 : i32
    return %arg0, %arg2, %c0_i32 : i32, i32, i32
  }
  func.func @transform_2(%arg0: i32, %arg1: i32, %arg2: i32) -> (i32, i32, i32) {
    %c0_i32 = arith.constant 0 : i32
    %c0_i32_0 = arith.constant 0 : i32
    return %arg0, %arg1, %c0_i32 : i32, i32, i32
  }
  func.func @transform_3(%arg0: i32, %arg1: i32, %arg2: i32) -> (i32, i32, i32) {
    %c0_i32 = arith.constant 0 : i32
    %c0_i32_0 = arith.constant 0 : i32
    return %arg0, %arg1, %c0_i32 : i32, i32, i32
  }
}

module attributes {stable_mosaic.version = 11 : i64} {
  func.func @_bn_act_kernel(%arg0: i32, %arg1: memref<512x128xbf16, #tpu.memory_space<vmem>>, %arg2: memref<1x128xf32, #tpu.memory_space<vmem>>, %arg3: memref<1x128xf32, #tpu.memory_space<vmem>>, %arg4: memref<512x128xbf16, #tpu.memory_space<vmem>>) attributes {dimension_semantics = [#tpu.dimension_semantics<parallel>], iteration_bounds = array<i64: 1>, scalar_prefetch = 0 : i64, scratch_operands = 0 : i64, tpu.core_type = #tpu.core_type<tc>, window_params = [{transform_indices = @transform_0, window_bounds = array<i64: 512, 128>}, {pipeline_mode = #tpu.pipeline_mode<synchronous>, transform_indices = @transform_1, window_bounds = array<i64: 1, 128>}, {pipeline_mode = #tpu.pipeline_mode<synchronous>, transform_indices = @transform_2, window_bounds = array<i64: 1, 128>}, {transform_indices = @transform_3, window_bounds = array<i64: 512, 128>}]} {
    %c0 = arith.constant 0 : index
    %c0_0 = arith.constant 0 : index
    %0 = vector.load %arg1[%c0, %c0_0] : memref<512x128xbf16, #tpu.memory_space<vmem>>, vector<512x128xbf16>
    %1 = arith.extf %0 : vector<512x128xbf16> to vector<512x128xf32>
    %c0_1 = arith.constant 0 : index
    %c0_2 = arith.constant 0 : index
    %2 = vector.load %arg2[%c0_1, %c0_2] : memref<1x128xf32, #tpu.memory_space<vmem>>, vector<1x128xf32>
    %3 = vector.broadcast %2 : vector<1x128xf32> to vector<512x128xf32>
    %4 = arith.mulf %1, %3 : vector<512x128xf32>
    %c0_3 = arith.constant 0 : index
    %c0_4 = arith.constant 0 : index
    %5 = vector.load %arg3[%c0_3, %c0_4] : memref<1x128xf32, #tpu.memory_space<vmem>>, vector<1x128xf32>
    %6 = vector.broadcast %5 : vector<1x128xf32> to vector<512x128xf32>
    %7 = arith.addf %4, %6 : vector<512x128xf32>
    %cst = arith.constant 0.000000e+00 : f32
    %8 = vector.broadcast %cst : f32 to vector<512x128xf32>
    %9 = arith.maximumf %7, %8 : vector<512x128xf32>
    %10 = arith.truncf %9 : vector<512x128xf32> to vector<512x128xbf16>
    %c0_5 = arith.constant 0 : index
    %c0_6 = arith.constant 0 : index
    %11 = vector.load %arg4[%c0_5, %c0_6] : memref<512x128xbf16, #tpu.memory_space<vmem>>, vector<512x128xbf16>
    tpu.vector_store %arg4[%c0_5, %c0_6], %10 {strides = array<i32>} : memref<512x128xbf16, #tpu.memory_space<vmem>>, vector<512x128xbf16>,
    return
  }
  func.func @transform_0(%arg0: i32) -> (i32, i32) {
    %c0_i32 = arith.constant 0 : i32
    %c0_i32_0 = arith.constant 0 : i32
    return %arg0, %c0_i32 : i32, i32
  }
  func.func @transform_1(%arg0: i32) -> (i32, i32) {
    %c0_i32 = arith.constant 0 : i32
    %c0_i32_0 = arith.constant 0 : i32
    %c0_i32_1 = arith.constant 0 : i32
    return %c0_i32, %c0_i32_0 : i32, i32
  }
  func.func @transform_2(%arg0: i32) -> (i32, i32) {
    %c0_i32 = arith.constant 0 : i32
    %c0_i32_0 = arith.constant 0 : i32
    %c0_i32_1 = arith.constant 0 : i32
    return %c0_i32, %c0_i32_0 : i32, i32
  }
  func.func @transform_3(%arg0: i32) -> (i32, i32) {
    %c0_i32 = arith.constant 0 : i32
    %c0_i32_0 = arith.constant 0 : i32
    return %arg0, %c0_i32 : i32, i32
  }
}

module attributes {stable_mosaic.version = 11 : i64} {
  func.func @_mm_act_kernel(%arg0: i32, %arg1: i32, %arg2: i32, %arg3: memref<1x512x128xbf16, #tpu.memory_space<vmem>>, %arg4: memref<1x128x128xbf16, #tpu.memory_space<vmem>>, %arg5: memref<1x128xf32, #tpu.memory_space<vmem>>, %arg6: memref<1x512x128xbf16, #tpu.memory_space<vmem>>, %arg7: memref<512x128xf32, #tpu.memory_space<vmem>>) attributes {dimension_semantics = [#tpu.dimension_semantics<parallel>, #tpu.dimension_semantics<parallel>, #tpu.dimension_semantics<arbitrary>], iteration_bounds = array<i64: 4, 1, 1>, scalar_prefetch = 0 : i64, scratch_operands = 1 : i64, tpu.core_type = #tpu.core_type<tc>, window_params = [{transform_indices = @transform_0, window_bounds = array<i64: 1, 512, 128>}, {transform_indices = @transform_1, window_bounds = array<i64: 1, 128, 128>}, {pipeline_mode = #tpu.pipeline_mode<synchronous>, transform_indices = @transform_2, window_bounds = array<i64: 1, 128>}, {transform_indices = @transform_3, window_bounds = array<i64: 1, 512, 128>}]} {
    %c0_i32 = arith.constant 0 : i32
    %0 = arith.cmpi eq, %arg2, %c0_i32 : i32
    %1 = arith.extui %0 : i1 to i32
    %c0_i32_0 = arith.constant 0 : i32
    %2 = arith.cmpi ne, %1, %c0_i32_0 : i32
    scf.if %2 {
      %cst_12 = arith.constant 0.000000e+00 : f32
      %14 = vector.broadcast %cst_12 : f32 to vector<512x128xf32>
      %c0_13 = arith.constant 0 : index
      %c0_14 = arith.constant 0 : index
      %15 = vector.load %arg7[%c0_13, %c0_14] : memref<512x128xf32, #tpu.memory_space<vmem>>, vector<512x128xf32>
      tpu.vector_store %arg7[%c0_13, %c0_14], %14 {strides = array<i32>} : memref<512x128xf32, #tpu.memory_space<vmem>>, vector<512x128xf32>,
    } else {
    }
    %c0 = arith.constant 0 : index
    %c0_1 = arith.constant 0 : index
    %3 = vector.load %arg7[%c0, %c0_1] : memref<512x128xf32, #tpu.memory_space<vmem>>, vector<512x128xf32>
    %c0_2 = arith.constant 0 : index
    %c0_3 = arith.constant 0 : index
    %c0_4 = arith.constant 0 : index
    %4 = vector.load %arg3[%c0_2, %c0_3, %c0_4] : memref<1x512x128xbf16, #tpu.memory_space<vmem>>, vector<1x512x128xbf16>
    %5 = vector.shape_cast %4 : vector<1x512x128xbf16> to vector<512x128xbf16>
    %c0_5 = arith.constant 0 : index
    %c0_6 = arith.constant 0 : index
    %c0_7 = arith.constant 0 : index
    %6 = vector.load %arg4[%c0_5, %c0_6, %c0_7] : memref<1x128x128xbf16, #tpu.memory_space<vmem>>, vector<1x128x128xbf16>
    %7 = vector.shape_cast %6 : vector<1x128x128xbf16> to vector<128x128xbf16>
    %cst = arith.constant dense<0.000000e+00> : vector<512x128xf32>
    %8 = tpu.matmul %5, %7, %cst {dimension_numbers = #tpu.dot_dimension_numbers<[1], [0], [0], [1], [0, 0, 1, 1], [], []>} : vector<512x128xbf16>, vector<128x128xbf16>, vector<512x128xf32> -> vector<512x128xf32>
    %9 = arith.addf %3, %8 : vector<512x128xf32>
    %c0_8 = arith.constant 0 : index
    %c0_9 = arith.constant 0 : index
    %10 = vector.load %arg7[%c0_8, %c0_9] : memref<512x128xf32, #tpu.memory_space<vmem>>, vector<512x128xf32>
    tpu.vector_store %arg7[%c0_8, %c0_9], %9 {strides = array<i32>} : memref<512x128xf32, #tpu.memory_space<vmem>>, vector<512x128xf32>,
    %c0_i32_10 = arith.constant 0 : i32
    %11 = arith.cmpi eq, %arg2, %c0_i32_10 : i32
    %12 = arith.extui %11 : i1 to i32
    %c0_i32_11 = arith.constant 0 : i32
    %13 = arith.cmpi ne, %12, %c0_i32_11 : i32
    scf.if %13 {
      %c0_12 = arith.constant 0 : index
      %c0_13 = arith.constant 0 : index
      %14 = vector.load %arg7[%c0_12, %c0_13] : memref<512x128xf32, #tpu.memory_space<vmem>>, vector<512x128xf32>
      %c0_14 = arith.constant 0 : index
      %c0_15 = arith.constant 0 : index
      %15 = vector.load %arg5[%c0_14, %c0_15] : memref<1x128xf32, #tpu.memory_space<vmem>>, vector<1x128xf32>
      %16 = vector.broadcast %15 : vector<1x128xf32> to vector<512x128xf32>
      %17 = arith.addf %14, %16 : vector<512x128xf32>
      %cst_16 = arith.constant 0.000000e+00 : f32
      %18 = vector.broadcast %cst_16 : f32 to vector<512x128xf32>
      %19 = arith.subf %18, %17 : vector<512x128xf32>
      %20 = math.exp %19 : vector<512x128xf32>
      %cst_17 = arith.constant 1.000000e+00 : f32
      %21 = vector.broadcast %cst_17 : f32 to vector<512x128xf32>
      %22 = arith.addf %21, %20 : vector<512x128xf32>
      %cst_18 = arith.constant 1.000000e+00 : f32
      %23 = vector.broadcast %cst_18 : f32 to vector<512x128xf32>
      %24 = arith.divf %23, %22 : vector<512x128xf32>
      %25 = arith.truncf %24 : vector<512x128xf32> to vector<512x128xbf16>
      %c0_19 = arith.constant 0 : index
      %c0_20 = arith.constant 0 : index
      %c0_21 = arith.constant 0 : index
      %26 = vector.load %arg6[%c0_19, %c0_20, %c0_21] : memref<1x512x128xbf16, #tpu.memory_space<vmem>>, vector<1x512x128xbf16>
      %27 = vector.shape_cast %26 : vector<1x512x128xbf16> to vector<512x128xbf16>
      %28 = vector.shape_cast %25 : vector<512x128xbf16> to vector<1x512x128xbf16>
      tpu.vector_store %arg6[%c0_19, %c0_20, %c0_21], %28 {strides = array<i32>} : memref<1x512x128xbf16, #tpu.memory_space<vmem>>, vector<1x512x128xbf16>,
    } else {
    }
    return
  }
  func.func @transform_0(%arg0: i32, %arg1: i32, %arg2: i32) -> (i32, i32, i32) {
    %c0_i32 = arith.constant 0 : i32
    return %arg0, %arg1, %arg2 : i32, i32, i32
  }
  func.func @transform_1(%arg0: i32, %arg1: i32, %arg2: i32) -> (i32, i32, i32) {
    %c0_i32 = arith.constant 0 : i32
    %c0_i32_0 = arith.constant 0 : i32
    return %arg0, %arg2, %c0_i32 : i32, i32, i32
  }
  func.func @transform_2(%arg0: i32, %arg1: i32, %arg2: i32) -> (i32, i32) {
    %c0_i32 = arith.constant 0 : i32
    %c0_i32_0 = arith.constant 0 : i32
    %c0_i32_1 = arith.constant 0 : i32
    return %c0_i32, %c0_i32_0 : i32, i32
  }
  func.func @transform_3(%arg0: i32, %arg1: i32, %arg2: i32) -> (i32, i32, i32) {
    %c0_i32 = arith.constant 0 : i32
    %c0_i32_0 = arith.constant 0 : i32
    return %arg0, %arg1, %c0_i32 : i32, i32, i32
  }
}

</mosaic_0001>

<llo_original>
// kernel: tile.8
$region0: #{tile.8}
  #allocation0 [shape = 's32[1]{0}', space=sflag, size = 0x4, scoped, tag = 'scoped memory for tile.8']
  %s0 = inlined_call_operand.vmem [shape: f32[64], index: 0, kind: input, shape index: {}]
  %s1 = inlined_call_operand.vmem [shape: f32[4,64], index: 1, kind: output, shape index: {}]
  // Predicated region
  $region2: #{tile.8} parent=0 // pred_check
    _
  $region3: #{tile.8} parent=0 // pred_check_branch
    %3 = sbr.rel (0) target = $region5
  $region4: #{tile.8} parent=0 // pred_region
    _
  $region5: #{tile.8} parent=0 // pred_fallthru
    _
  %v4 = vld [vmem:[%s0] ss:$0 sm:$0xff]
  %5 = vst [vmem:[%s1] sm:$0xf] %v4

// kernel: tile.9
$region0: #{tile.9}
  %s0 = inlined_call_operand.vmem [shape: f32[4,64], index: 0, kind: input, shape index: {}]
  %s1 = inlined_call_operand.vmem [shape: f32[1,256], index: 1, kind: output, shape index: {}]
  $region1: #{tile.9} parent=0
    #allocation0 [shape = 'u8[8192]{0}', space=vmem, size = 0x2000, scoped, tag = 'scoped mem for output reshape']
    #allocation1 [shape = 'u8[4096]{0}', space=vmem, size = 0x1000, scoped, tag = 'scoped mem for input reshape']
    %s3 = sshll.u32 1, 4
    %s4 = ssub.s32 %s3, 1
    %v5 = vld [vmem:[%s0] sm:%s4]
    %6 = vst [vmem:[#allocation1] sm:%s4] %v5
    %s7 = smov 3
    %v8 = vld [vmem:[#allocation1] ss:$2 sm:%s7]
    %vm9 = vcmask 523264
    %10 = vst.msk [vmem:[#allocation0] ss:$8 sm:$0x3] %vm9, %v8
    %s11 = scalar_lea.vmem [#allocation1], 1
    %s12 = smov 3
    %v13 = vld [vmem:[%s11] ss:$2 sm:%s12]
    %14 = vrot.lane.b32.xlu0 %v13, 64
    %v15 = vpop.permute.xlu0 %14
    %vm16 = vcmask 1048064
    %17 = vst.msk [vmem:[#allocation0] ss:$8 sm:$0x3] %vm16, %v15
    %s19 = sshll.u32 1, 1
    %s20 = ssub.s32 %s19, 1
    %v22 = vld [vmem:[#allocation0] sm:%s20]
    %s23 = sshll.u32 1, 1
    %s24 = ssub.s32 %s23, 1
    %25 = vst [vmem:[%s1] sm:%s24] %v22
    %s26 = scalar_lea.vmem [#allocation0], 8
    %v27 = vld [vmem:[%s26] sm:%s20]
    %s28 = sshll.u32 1, 1
    %s29 = ssub.s32 %s28, 1
    %s30 = scalar_lea.vmem %s1, 1
    %31 = vst [vmem:[%s30] sm:%s29] %v27

// kernel: generator_forward.8
$region0: #{generator_forward.8}
  #allocation0 [shape = 'u32[]', space=smem, size = 0x4, offset = 0x4, fixed_abs, tag = 'smem constant byte address 0x4 - core index']
  #allocation1 [shape = 'u32[144,128]{1,0:T(1,128)}', space=vmem, size = 0x12000, scoped, tag = 'internal scratch']
  %s0 = inlined_call_operand.vmem [shape: bf16[8,128], index: 0, kind: input, shape index: {}]
  %s1 = inlined_call_operand.vmem [shape: bf16[128,256], index: 1, kind: input, shape index: {}]
  %s2 = inlined_call_operand.vmem [shape: f32[1,256], index: 2, kind: input, shape index: {}]
  %s3 = inlined_call_operand.vmem [shape: bf16[8,256], index: 3, kind: output, shape index: {}]
  %s4 = sld [smem:[#allocation0]]
  $region22: #{generator_forward.8} parent=0
    _
  %s6 = ssub.s32 1, %s4
  %s7 = scalar_select 0, %s6, %s4
  // Predicated region
  $region2: #{generator_forward.8} parent=0 // pred_check
    _
  $region3: #{generator_forward.8} parent=0 // pred_check_branch
    %9 = sbr.rel (0) target = $region5
  $region4: #{generator_forward.8} parent=0 // pred_region
    _
  $region5: #{generator_forward.8} parent=0 // pred_fallthru
    _
  // Predicated region
  $region6: #{generator_forward.8} parent=0 // pred_check
    _
  $region7: #{generator_forward.8} parent=0 // pred_check_branch
    %11 = sbr.rel (0) target = $region9
  $region8: #{generator_forward.8} parent=0 // pred_region
    _
  $region9: #{generator_forward.8} parent=0 // pred_fallthru
    _
  // Predicated region
  $region10: #{generator_forward.8} parent=0 // pred_check
    _
  $region11: #{generator_forward.8} parent=0 // pred_check_branch
    %13 = sbr.rel (0) target = $region13
  $region12: #{generator_forward.8} parent=0 // pred_region
    _
  $region13: #{generator_forward.8} parent=0 // pred_fallthru
    _
  %v15 = vld [vmem:[%s0] sm:$0xf]
  %v16 = vld [vmem:[%s1] sm:$0xff]
  %v17 = vld [vmem:[%s1 + $0x8] sm:$0xff]
  %v18 = vld [vmem:[%s1 + $0x10] sm:$0xff]
  %v19 = vld [vmem:[%s1 + $0x18] sm:$0xff]
  %v20 = vld [vmem:[%s1 + $0x20] sm:$0xff]
  %v21 = vld [vmem:[%s1 + $0x28] sm:$0xff]
  %v22 = vld [vmem:[%s1 + $0x30] sm:$0xff]
  %v23 = vld [vmem:[%s1 + $0x38] sm:$0xff]
  %v24 = vld [vmem:[%s1 + $0x40] sm:$0xff]
  %v25 = vld [vmem:[%s1 + $0x48] sm:$0xff]
  %v26 = vld [vmem:[%s1 + $0x50] sm:$0xff]
  %v27 = vld [vmem:[%s1 + $0x58] sm:$0xff]
  %v28 = vld [vmem:[%s1 + $0x60] sm:$0xff]
  %v29 = vld [vmem:[%s1 + $0x68] sm:$0xff]
  %v30 = vld [vmem:[%s1 + $0x70] sm:$0xff]
  %v31 = vld [vmem:[%s1 + $0x78] sm:$0xff]
  %v32 = vld [vmem:[%s2] sm:$0x3]
  %v34 = vlaneseq
  %v35 = vshrl.u32 %v34, 7
  %v36 = vsub.s32 0, %v35
  %v37 = vrot.slane %v32, %v36
  %v38 = vlaneseq
  %v39 = vshrl.u32 %v38, 7
  %v40 = vsub.s32 1, %v39
  %v41 = vrot.slane %v32, %v40
  %v60 = vunpack.c.l.b16 %v16
  %v61 = vunpack.c.h.b16 %v16
  %v62 = vunpack.c.l.b16 %v17
  %v63 = vunpack.c.h.b16 %v17
  %v64 = vunpack.c.l.b16 %v18
  %v65 = vunpack.c.h.b16 %v18
  %v66 = vunpack.c.l.b16 %v19
  %v67 = vunpack.c.h.b16 %v19
  %v68 = vunpack.c.l.b16 %v20
  %v69 = vunpack.c.h.b16 %v20
  %v70 = vunpack.c.l.b16 %v21
  %v71 = vunpack.c.h.b16 %v21
  %v72 = vunpack.c.l.b16 %v22
  %v73 = vunpack.c.h.b16 %v22
  %v74 = vunpack.c.l.b16 %v23
  %v75 = vunpack.c.h.b16 %v23
  %v76 = vunpack.c.l.b16 %v24
  %v77 = vunpack.c.h.b16 %v24
  %v78 = vunpack.c.l.b16 %v25
  %v79 = vunpack.c.h.b16 %v25
  %v80 = vunpack.c.l.b16 %v26
  %v81 = vunpack.c.h.b16 %v26
  %v82 = vunpack.c.l.b16 %v27
  %v83 = vunpack.c.h.b16 %v27
  %v84 = vunpack.c.l.b16 %v28
  %v85 = vunpack.c.h.b16 %v28
  %v86 = vunpack.c.l.b16 %v29
  %v87 = vunpack.c.h.b16 %v29
  %v88 = vunpack.c.l.b16 %v30
  %v89 = vunpack.c.h.b16 %v30
  %v90 = vunpack.c.l.b16 %v31
  %v91 = vunpack.c.h.b16 %v31
  %v92 = vpack.c.b16 %v62, %v60
  %v93 = vpack.c.b16 %v63, %v61
  %v94 = vpack.c.b16 %v66, %v64
  %v95 = vpack.c.b16 %v67, %v65
  %v96 = vpack.c.b16 %v70, %v68
  %v97 = vpack.c.b16 %v71, %v69
  %v98 = vpack.c.b16 %v74, %v72
  %v99 = vpack.c.b16 %v75, %v73
  %v100 = vpack.c.b16 %v78, %v76
  %v101 = vpack.c.b16 %v79, %v77
  %v102 = vpack.c.b16 %v82, %v80
  %v103 = vpack.c.b16 %v83, %v81
  %v104 = vpack.c.b16 %v86, %v84
  %v105 = vpack.c.b16 %v87, %v85
  %v106 = vpack.c.b16 %v90, %v88
  %v107 = vpack.c.b16 %v91, %v89
  %124 = vmatprep.subr.bf16.mxu0 %v107
  %125 = vmatpush1.bf16.msra.mxu0 %v106
  %126 = vmatprep.subr.bf16.mxu0 %v105
  %127 = vmatpush1.bf16.msra.mxu0 %v104
  %128 = vmatprep.subr.bf16.mxu0 %v103
  %129 = vmatpush1.bf16.msra.mxu0 %v102
  %130 = vmatprep.subr.bf16.mxu0 %v101
  %131 = vmatpush1.bf16.msra.mxu0 %v100
  %132 = vmatprep.subr.bf16.mxu0 %v99
  %133 = vmatpush1.bf16.msra.mxu0 %v98
  %134 = vmatprep.subr.bf16.mxu0 %v97
  %135 = vmatpush1.bf16.msra.mxu0 %v96
  %136 = vmatprep.subr.bf16.mxu0 %v95
  %137 = vmatpush1.bf16.msra.mxu0 %v94
  %138 = vmatprep.subr.bf16.mxu0 %v93
  %139 = vmatpush1.bf16.msra.mxu0 %v92
  %140 = vmatprep.subr.bf16.mxu0 0
  %141 = vmatpush2.bf16.msra.mxu0 0
  %142 = vmatprep.subr.bf16.mxu0 0
  %143 = vmatpush2.bf16.msra.mxu0 0
  %144 = vmatprep.subr.bf16.mxu0 0
  %145 = vmatpush2.bf16.msra.mxu0 0
  %146 = vmatprep.subr.bf16.mxu0 0
  %147 = vmatpush2.bf16.msra.mxu0 0
  %148 = vmatprep.subr.bf16.mxu0 0
  %149 = vmatpush2.bf16.msra.mxu0 0
  %150 = vmatprep.subr.bf16.mxu0 0
  %151 = vmatpush2.bf16.msra.mxu0 0
  %152 = vmatprep.subr.bf16.mxu0 0
  %153 = vmatpush2.bf16.msra.mxu0 0
  %154 = vmatprep.subr.bf16.mxu0 0
  %155 = vmatpush2.bf16.msra.mxu0 0
  %156 = vmatprep.mubr.bf16.mxu0 0
  %157 = vmatmul.mubr.bf16.gmra.mxu0 %v15
  %v158 = vpop.f32.mrf.mxu0
  %v159 = vadd.f32 %v37, %v158
  %v160 = vpop.f32.mrf.mxu0
  %v161 = vadd.f32 %v41, %v160
  %v162 = vpop.f32.mrf.mxu0
  %v163 = vpop.f32.mrf.mxu0
  %164 = vdwg.mxu0
  %v165 = vpack.c.bf16 %v159, %v159
  %v166 = vpack.c.bf16 %v161, %v161
  %v169 = vunpack.c.l.b16 %v165
  %v170 = vunpack.c.l.b16 %v166
  %v171 = vpack.c.b16 %v170, %v169
  %173 = vst [vmem:[%s3] sm:$0xff] %v171
  // Predicated region
  $region14: #{generator_forward.8} parent=0 // pred_check
    _
  $region15: #{generator_forward.8} parent=0 // pred_check_branch
    %175 = sbr.rel (0) target = $region17
  $region16: #{generator_forward.8} parent=0 // pred_region
    _
  $region17: #{generator_forward.8} parent=0 // pred_fallthru
    _
  // Predicated region
  $region18: #{generator_forward.8} parent=0 // pred_check
    _
  $region19: #{generator_forward.8} parent=0 // pred_check_branch
    %177 = sbr.rel (0) target = $region21
  $region20: #{generator_forward.8} parent=0 // pred_region
    _
  $region21: #{generator_forward.8} parent=0 // pred_fallthru
    _

// kernel: generator_forward.10
$region0: #{generator_forward.10}
  #allocation0 [shape = 'u32[]', space=smem, size = 0x4, offset = 0x4, fixed_abs, tag = 'smem constant byte address 0x4 - core index']
  #allocation1 [shape = 'u32[144,128]{1,0:T(1,128)}', space=vmem, size = 0x12000, scoped, tag = 'internal scratch']
  %s0 = inlined_call_operand.vmem [shape: bf16[32,128], index: 0, kind: input, shape index: {}]
  %s1 = inlined_call_operand.vmem [shape: f32[1,128], index: 1, kind: input, shape index: {}]
  %s2 = inlined_call_operand.vmem [shape: f32[1,128], index: 2, kind: input, shape index: {}]
  %s3 = inlined_call_operand.vmem [shape: bf16[32,128], index: 3, kind: output, shape index: {}]
  %s4 = sld [smem:[#allocation0]]
  $region22: #{generator_forward.10} parent=0
    _
  %s6 = ssub.s32 1, %s4
  %s7 = scalar_select 0, %s6, %s4
  // Predicated region
  $region2: #{generator_forward.10} parent=0 // pred_check
    _
  $region3: #{generator_forward.10} parent=0 // pred_check_branch
    %9 = sbr.rel (0) target = $region5
  $region4: #{generator_forward.10} parent=0 // pred_region
    _
  $region5: #{generator_forward.10} parent=0 // pred_fallthru
    _
  // Predicated region
  $region6: #{generator_forward.10} parent=0 // pred_check
    _
  $region7: #{generator_forward.10} parent=0 // pred_check_branch
    %11 = sbr.rel (0) target = $region9
  $region8: #{generator_forward.10} parent=0 // pred_region
    _
  $region9: #{generator_forward.10} parent=0 // pred_fallthru
    _
  // Predicated region
  $region10: #{generator_forward.10} parent=0 // pred_check
    _
  $region11: #{generator_forward.10} parent=0 // pred_check_branch
    %13 = sbr.rel (0) target = $region13
  $region12: #{generator_forward.10} parent=0 // pred_region
    _
  $region13: #{generator_forward.10} parent=0 // pred_fallthru
    _
  %v14 = vld [vmem:[%s0] sm:$0xf]
  %v15 = vld [vmem:[%s0 + $0x4] sm:$0xf]
  %v16 = vld [vmem:[%s0 + $0x8] sm:$0xf]
  %v17 = vld [vmem:[%s0 + $0xc] sm:$0xf]
  %v18 = vunpack.c.l.bf16 %v14
  %v19 = vunpack.c.l.bf16 %v15
  %v20 = vunpack.c.l.bf16 %v16
  %v21 = vunpack.c.l.bf16 %v17
  %v22 = vld [vmem:[%s1] sm:$0x1]
  %v24 = vlaneseq
  %v25 = vshrl.u32 %v24, 7
  %v26 = vsub.s32 0, %v25
  %v27 = vrot.slane %v22, %v26
  %v29 = vmul.f32 %v18, %v27
  %v30 = vmul.f32 %v19, %v27
  %v31 = vmul.f32 %v20, %v27
  %v32 = vmul.f32 %v21, %v27
  %v33 = vld [vmem:[%s2] sm:$0x1]
  %v35 = vlaneseq
  %v36 = vshrl.u32 %v35, 7
  %v37 = vsub.s32 0, %v36
  %v38 = vrot.slane %v33, %v37
  %v40 = vadd.f32 %v29, %v38
  %v41 = vadd.f32 %v30, %v38
  %v42 = vadd.f32 %v31, %v38
  %v43 = vadd.f32 %v32, %v38
  %v44 = vmax.f32 %v40, 0.0
  %v45 = vmax.f32 %v41, 0.0
  %v46 = vmax.f32 %v42, 0.0
  %v47 = vmax.f32 %v43, 0.0
  %v48 = vpack.c.bf16 %v45, %v44
  %v49 = vpack.c.bf16 %v47, %v46
  %v52 = vunpack.c.l.b16 %v48
  %v53 = vunpack.c.h.b16 %v48
  %v54 = vunpack.c.l.b16 %v49
  %v55 = vunpack.c.h.b16 %v49
  %v56 = vpack.c.b16 %v52, %v52
  %v57 = vpack.c.b16 %v53, %v53
  %v58 = vpack.c.b16 %v54, %v54
  %v59 = vpack.c.b16 %v55, %v55
  %64 = vst [vmem:[%s3] sm:$0xf] %v56
  %65 = vst [vmem:[%s3 + $0x4] sm:$0xf] %v57
  %66 = vst [vmem:[%s3 + $0x8] sm:$0xf] %v58
  %67 = vst [vmem:[%s3 + $0xc] sm:$0xf] %v59
  // Predicated region
  $region14: #{generator_forward.10} parent=0 // pred_check
    _
  $region15: #{generator_forward.10} parent=0 // pred_check_branch
    %69 = sbr.rel (0) target = $region17
  $region16: #{generator_forward.10} parent=0 // pred_region
    _
  $region17: #{generator_forward.10} parent=0 // pred_fallthru
    _
  // Predicated region
  $region18: #{generator_forward.10} parent=0 // pred_check
    _
  $region19: #{generator_forward.10} parent=0 // pred_check_branch
    %71 = sbr.rel (0) target = $region21
  $region20: #{generator_forward.10} parent=0 // pred_region
    _
  $region21: #{generator_forward.10} parent=0 // pred_fallthru
    _

// kernel: generator_forward.9
$region0: #{generator_forward.9}
  #allocation0 [shape = 'u32[]', space=smem, size = 0x4, offset = 0x4, fixed_abs, tag = 'smem constant byte address 0x4 - core index']
  #allocation1 [shape = 'u32[144,128]{1,0:T(1,128)}', space=vmem, size = 0x12000, scoped, tag = 'internal scratch']
  #allocation2 [shape = 'f32[8,128]{1,0:T(8,128)}', space=vmem, size = 0x1000, scoped, tag = 'scratch operand']
  %s0 = inlined_call_operand.vmem [shape: bf16[4,8,256], index: 0, kind: input, shape index: {}]
  %s1 = inlined_call_operand.vmem [shape: bf16[4,256,128], index: 1, kind: input, shape index: {}]
  %s2 = inlined_call_operand.vmem [shape: bf16[4,8,128], index: 2, kind: output, shape index: {0}]
  %s3 = inlined_call_operand.vmem [shape: f32[4,8,128], index: 3, kind: output, shape index: {1}]
  %4 = xla_tuple %s2, %s3
  %s5 = sld [smem:[#allocation0]]
  $region57: #{generator_forward.9} parent=0
    _
  %s7 = ssub.s32 1, %s5
  %s8 = scalar_select 0, %s7, %s5
  loop: start=0, step=1, limit=6
  $region2: #{generator_forward.9} parent=0 // loop_pre_header
    _
  $region3: #{generator_forward.9} parent=0 // loop_header
    %s10 = sphi 0, %s14
    %p11 = scmp.ge.s32.totalorder %s10, 6
    %s17 = sphi 0, %s36
    %s18 = sphi 0, %s32
    %s19 = sphi 0, %s28
    %s20 = sphi 0, %s17
    %s21 = sphi 0, %s18
    %s22 = sphi 0, %s19
    %s23 = sphi 0, %s20
    %s24 = sphi 0, %s21
    %s25 = sphi 0, %s22
    %s43 = sphi 0, %s45
    %s46 = sphi 0, %s43
    %s47 = sphi 0, %s46
    %s63 = sphi 0, %s47
    %s71 = sphi 0, %s73
    %s74 = sphi 0, %s71
    %s75 = sphi 0, %s74
    %s91 = sphi 0, %s75
    %s99 = sphi 0, %s101
    %s102 = sphi 0, %s99
    %s103 = sphi 0, %s102
    %s119 = sphi 0, %s103
    %s127 = sphi 0, %s129
    %s130 = sphi 0, %s127
    %s131 = sphi 0, %s130
    %s147 = sphi 0, %s131
  $region4: #{generator_forward.9} parent=0 // loop_header_branch
    %13 = sbr.rel (%p11) target = $region8
  $region5: #{generator_forward.9} parent=0 // loop_body
    %s15 = ssub.s32 %s10, 1
    %s16 = ssub.s32 %s10, 2
    %s26 = sadd.s32 1, %s19
    %p27 = scmp.ge.s32.totalorder %s26, 1
    %s28 = scalar_select %p27, 0, %s26
    %s29 = sadd.s32 1, %s18
    %s30 = scalar_select %p27, %s29, %s18
    %p31 = scmp.ge.s32.totalorder %s30, 1
    %s32 = scalar_select %p31, 0, %s30
    %s33 = sadd.s32 1, %s17
    %s34 = scalar_select %p31, %s33, %s17
    %p35 = scmp.ge.s32.totalorder %s34, 4
    %s36 = scalar_select %p35, 0, %s34
    %s37 = ssub.s32 %s17, %s36
    %s38 = ssub.s32 %s18, %s32
    %s39 = sor.u32 %s37, %s38
    %s40 = ssub.s32 %s19, %s28
    %s41 = sor.u32 %s39, %s40
    %p42 = scmp.eq.s32.totalorder %s41, 0
    %s44 = sadd.s32 %s43, 1
    %s45 = scalar_select %p42, %s43, %s44
    %p48 = pneg %p42
    %p49 = scmp.eq.s32.totalorder %s10, 3
    %p50 = por %p48, %p49
    %p51 = scmp.ne.s32.totalorder %s43, %s46
    %p52 = scmp.eq.s32.totalorder %s10, 0
    %p53 = por %p51, %p52
    %p54 = scmp.ne.s32.totalorder %s43, %s46
    %p55 = scmp.eq.s32.totalorder %s15, 3
    %p56 = por %p54, %p55
    %p57 = scmp.ne.s32.totalorder %s46, %s47
    %p58 = scmp.eq.s32.totalorder %s15, 0
    %p59 = por %p57, %p58
    %p60 = scmp.ne.s32.totalorder %s46, %s47
    %p61 = scmp.eq.s32.totalorder %s16, 3
    %p62 = por %p60, %p61
    %p64 = scmp.ne.s32.totalorder %s47, %s63
    %p65 = scmp.eq.s32.totalorder %s16, 0
    %p66 = por %p64, %p65
    %s67 = ssub.s32 %s17, %s36
    %s68 = ssub.s32 %s19, %s28
    %s69 = sor.u32 %s67, %s68
    %p70 = scmp.eq.s32.totalorder %s69, 0
    %s72 = sadd.s32 %s71, 1
    %s73 = scalar_select %p70, %s71, %s72
    %p76 = pneg %p70
    %p77 = scmp.eq.s32.totalorder %s10, 3
    %p78 = por %p76, %p77
    %p79 = scmp.ne.s32.totalorder %s71, %s74
    %p80 = scmp.eq.s32.totalorder %s10, 0
    %p81 = por %p79, %p80
    %p82 = scmp.ne.s32.totalorder %s71, %s74
    %p83 = scmp.eq.s32.totalorder %s15, 3
    %p84 = por %p82, %p83
    %p85 = scmp.ne.s32.totalorder %s74, %s75
    %p86 = scmp.eq.s32.totalorder %s15, 0
    %p87 = por %p85, %p86
    %p88 = scmp.ne.s32.totalorder %s74, %s75
    %p89 = scmp.eq.s32.totalorder %s16, 3
    %p90 = por %p88, %p89
    %p92 = scmp.ne.s32.totalorder %s75, %s91
    %p93 = scmp.eq.s32.totalorder %s16, 0
    %p94 = por %p92, %p93
    %s95 = ssub.s32 %s17, %s36
    %s96 = ssub.s32 %s18, %s32
    %s97 = sor.u32 %s95, %s96
    %p98 = scmp.eq.s32.totalorder %s97, 0
    %s100 = sadd.s32 %s99, 1
    %s101 = scalar_select %p98, %s99, %s100
    %p104 = pneg %p98
    %p105 = scmp.eq.s32.totalorder %s10, 3
    %p106 = por %p104, %p105
    %p107 = scmp.ne.s32.totalorder %s99, %s102
    %p108 = scmp.eq.s32.totalorder %s10, 0
    %p109 = por %p107, %p108
    %p110 = scmp.ne.s32.totalorder %s99, %s102
    %p111 = scmp.eq.s32.totalorder %s15, 3
    %p112 = por %p110, %p111
    %p113 = scmp.ne.s32.totalorder %s102, %s103
    %p114 = scmp.eq.s32.totalorder %s15, 0
    %p115 = por %p113, %p114
    %p116 = scmp.ne.s32.totalorder %s102, %s103
    %p117 = scmp.eq.s32.totalorder %s16, 3
    %p118 = por %p116, %p117
    %p120 = scmp.ne.s32.totalorder %s103, %s119
    %p121 = scmp.eq.s32.totalorder %s16, 0
    %p122 = por %p120, %p121
    %s123 = ssub.s32 %s17, %s36
    %s124 = ssub.s32 %s18, %s32
    %s125 = sor.u32 %s123, %s124
    %p126 = scmp.eq.s32.totalorder %s125, 0
    %s128 = sadd.s32 %s127, 1
    %s129 = scalar_select %p126, %s127, %s128
    %p132 = pneg %p126
    %p133 = scmp.eq.s32.totalorder %s10, 3
    %p134 = por %p132, %p133
    %p135 = scmp.ne.s32.totalorder %s127, %s130
    %p136 = scmp.eq.s32.totalorder %s10, 0
    %p137 = por %p135, %p136
    %p138 = scmp.ne.s32.totalorder %s127, %s130
    %p139 = scmp.eq.s32.totalorder %s15, 3
    %p140 = por %p138, %p139
    %p141 = scmp.ne.s32.totalorder %s130, %s131
    %p142 = scmp.eq.s32.totalorder %s15, 0
    %p143 = por %p141, %p142
    %p144 = scmp.ne.s32.totalorder %s130, %s131
    %p145 = scmp.eq.s32.totalorder %s16, 3
    %p146 = por %p144, %p145
    %p148 = scmp.ne.s32.totalorder %s131, %s147
    %p149 = scmp.eq.s32.totalorder %s16, 0
    %p150 = por %p148, %p149
    %p151 = scmp.le.s32.totalorder 1, %s10
    %p152 = scmp.lt.s32.totalorder %s10, 5
    %p153 = pnand %p151, %p152
    %p154 = pneg %p153
    // Predicated region
    $region9: #{generator_forward.9} parent=5 // pred_check
      _
    $region10: #{generator_forward.9} parent=5 // pred_check_branch
      %156 = sbr.rel (%p153) target = $region12
    $region11: #{generator_forward.9} parent=5 // pred_region
      %s157 = ssub.s32 %s10, 1
    $region12: #{generator_forward.9} parent=5 // pred_fallthru
      _
    %p158 = scmp.lt.s32.totalorder %s10, 4
    // Predicated region
    $region13: #{generator_forward.9} parent=5 // pred_check
      %p159 = pneg %p158
    $region14: #{generator_forward.9} parent=5 // pred_check_branch
      %161 = sbr.rel (%p159) target = $region16
    $region15: #{generator_forward.9} parent=5 // pred_region
      // Predicated region
      $region17: #{generator_forward.9} parent=15 // pred_check
        %p162 = pneg %p53
      $region18: #{generator_forward.9} parent=15 // pred_check_branch
        %164 = sbr.rel (%p162) target = $region20
      $region19: #{generator_forward.9} parent=15 // pred_region
        %s165 = smul.u32 2, %s19
        %p166 = scmp.lt.s32.totalorder %s17, 3
        %s167 = scalar_select %p166, %s17, 3
        %p168 = scmp.lt.s32.totalorder %s18, 0
        %s169 = scalar_select %p168, %s18, 0
        %p170 = scmp.lt.s32.totalorder %s165, 1
        %s171 = scalar_select %p170, %s165, 1
        %s172 = smul.addr %s169, 2
        %s173 = sadd.s32 %s171, %s172
        %s174 = smul.addr %s167, 2
        %s175 = sadd.s32 %s173, %s174
        %s176 = smul.addr %s175, 4
        %s177 = scalar_lea.vmem %s0, %s176
        %s178 = smul.u32 2, %s19
      $region20: #{generator_forward.9} parent=15 // pred_fallthru
        _
      // Predicated region
      $region21: #{generator_forward.9} parent=15 // pred_check
        %p179 = pneg %p81
      $region22: #{generator_forward.9} parent=15 // pred_check_branch
        %181 = sbr.rel (%p179) target = $region24
      $region23: #{generator_forward.9} parent=15 // pred_region
        %s182 = smul.u32 32, %s19
        %p183 = scmp.lt.s32.totalorder %s17, 3
        %s184 = scalar_select %p183, %s17, 3
        %p185 = scmp.lt.s32.totalorder %s182, 31
        %s186 = scalar_select %p185, %s182, 31
        %s187 = smul.addr %s184, 32
        %s188 = sadd.s32 %s186, %s187
        %s189 = smul.addr %s188, 4
        %s190 = scalar_lea.vmem %s1, %s189
        %s191 = smul.u32 32, %s19
      $region24: #{generator_forward.9} parent=15 // pred_fallthru
        _
    $region16: #{generator_forward.9} parent=5 // pred_fallthru
      _
    %p192 = scmp.le.s32.totalorder 1, %s10
    %p193 = scmp.lt.s32.totalorder %s10, 5
    %p194 = pnand %p192, %p193
    %p195 = pneg %p194
    // Predicated region
    $region25: #{generator_forward.9} parent=5 // pred_check
      _
    $region26: #{generator_forward.9} parent=5 // pred_check_branch
      %197 = sbr.rel (%p194) target = $region28
    $region27: #{generator_forward.9} parent=5 // pred_region
      %s198 = ssub.s32 %s10, 1
      %s199 = smul.u32 2, %s22
      %p200 = scmp.lt.s32.totalorder %s20, 3
      %s201 = scalar_select %p200, %s20, 3
      %p202 = scmp.lt.s32.totalorder %s21, 0
      %s203 = scalar_select %p202, %s21, 0
      %p204 = scmp.lt.s32.totalorder %s199, 1
      %s205 = scalar_select %p204, %s199, 1
      %s206 = smul.addr %s203, 2
      %s207 = sadd.s32 %s205, %s206
      %s208 = smul.addr %s201, 2
      %s209 = sadd.s32 %s207, %s208
      %s210 = smul.addr %s209, 4
      %s211 = scalar_lea.vmem %s0, %s210
      %p212 = pneg %p59
      %p213 = pneg %p56
      %s214 = smul.u32 32, %s22
      %p215 = scmp.lt.s32.totalorder %s20, 3
      %s216 = scalar_select %p215, %s20, 3
      %p217 = scmp.lt.s32.totalorder %s214, 31
      %s218 = scalar_select %p217, %s214, 31
      %s219 = smul.addr %s216, 32
      %s220 = sadd.s32 %s218, %s219
      %s221 = smul.addr %s220, 4
      %s222 = scalar_lea.vmem %s1, %s221
      %p223 = pneg %p87
      %p224 = pneg %p84
      %p225 = pneg %p115
      %p226 = pneg %p112
      %p227 = scmp.lt.s32.totalorder %s20, 3
      %s228 = scalar_select %p227, %s20, 3
      %p229 = scmp.lt.s32.totalorder %s21, 0
      %s230 = scalar_select %p229, %s21, 0
      %s231 = sadd.s32 %s230, %s228
      %s232 = smul.addr %s231, 4
      %s233 = scalar_lea.vmem %s2, %s232
      %p234 = pneg %p143
      %p235 = pneg %p140
      %p236 = scmp.lt.s32.totalorder %s20, 3
      %s237 = scalar_select %p236, %s20, 3
      %p238 = scmp.lt.s32.totalorder %s21, 0
      %s239 = scalar_select %p238, %s21, 0
      %s240 = sadd.s32 %s239, %s237
      %s241 = smul.addr %s240, 8
      %s242 = scalar_lea.vmem %s3, %s241
      %s243 = smul.u32 2, %s22
      %p244 = scmp.lt.s32.totalorder %s20, 3
      %s245 = scalar_select %p244, %s20, 3
      %p246 = scmp.lt.s32.totalorder %s21, 0
      %s247 = scalar_select %p246, %s21, 0
      %p248 = scmp.lt.s32.totalorder %s243, 1
      %s249 = scalar_select %p248, %s243, 1
      %s250 = smul.addr %s247, 2
      %s251 = sadd.s32 %s249, %s250
      %s252 = smul.addr %s245, 2
      %s253 = sadd.s32 %s251, %s252
      %s254 = smul.addr %s253, 4
      %s255 = scalar_lea.vmem %s0, %s254
      %s256 = smul.u32 2, %s22
      %s257 = smul.u32 32, %s22
      %p258 = scmp.lt.s32.totalorder %s20, 3
      %s259 = scalar_select %p258, %s20, 3
      %p260 = scmp.lt.s32.totalorder %s257, 31
      %s261 = scalar_select %p260, %s257, 31
      %s262 = smul.addr %s259, 32
      %s263 = sadd.s32 %s261, %s262
      %s264 = smul.addr %s263, 4
      %s265 = scalar_lea.vmem %s1, %s264
      %s266 = smul.u32 32, %s22
      %p267 = scmp.lt.s32.totalorder %s20, 3
      %s268 = scalar_select %p267, %s20, 3
      %p269 = scmp.lt.s32.totalorder %s21, 0
      %s270 = scalar_select %p269, %s21, 0
      %s271 = sadd.s32 %s270, %s268
      %s272 = smul.addr %s271, 4
      %s273 = scalar_lea.vmem %s2, %s272
      %p274 = scmp.lt.s32.totalorder %s20, 3
      %s275 = scalar_select %p274, %s20, 3
      %p276 = scmp.lt.s32.totalorder %s21, 0
      %s277 = scalar_select %p276, %s21, 0
      %s278 = sadd.s32 %s277, %s275
      %s279 = smul.addr %s278, 8
      %s280 = scalar_lea.vmem %s3, %s279
      %p282 = scmp.eq.s32.totalorder %s22, 0
      // Predicated region
      $region29: #{generator_forward.9} parent=27 // pred_check
        %p283 = pneg %p282
      $region30: #{generator_forward.9} parent=27 // pred_check_branch
        %285 = sbr.rel (%p283) target = $region32
      $region31: #{generator_forward.9} parent=27 // pred_region
        %286 = vst [vmem:[#allocation2] sm:$0xff] 0.0
      $region32: #{generator_forward.9} parent=27 // pred_fallthru
        _
      %v287 = vld [vmem:[#allocation2] sm:$0xff]
      %v288 = vld [vmem:[%s255] sm:$0xff]
      %v289 = vld [vmem:[%s265] sm:$0xf]
      %v290 = vld [vmem:[%s265 + $0x4] sm:$0xf]
      %v291 = vld [vmem:[%s265 + $0x8] sm:$0xf]
      %v292 = vld [vmem:[%s265 + $0xc] sm:$0xf]
      %v293 = vld [vmem:[%s265 + $0x10] sm:$0xf]
      %v294 = vld [vmem:[%s265 + $0x14] sm:$0xf]
      %v295 = vld [vmem:[%s265 + $0x18] sm:$0xf]
      %v296 = vld [vmem:[%s265 + $0x1c] sm:$0xf]
      %v297 = vld [vmem:[%s265 + $0x20] sm:$0xf]
      %v298 = vld [vmem:[%s265 + $0x24] sm:$0xf]
      %v299 = vld [vmem:[%s265 + $0x28] sm:$0xf]
      %v300 = vld [vmem:[%s265 + $0x2c] sm:$0xf]
      %v301 = vld [vmem:[%s265 + $0x30] sm:$0xf]
      %v302 = vld [vmem:[%s265 + $0x34] sm:$0xf]
      %v303 = vld [vmem:[%s265 + $0x38] sm:$0xf]
      %v304 = vld [vmem:[%s265 + $0x3c] sm:$0xf]
      %v305 = vld [vmem:[%s265 + $0x40] sm:$0xf]
      %v306 = vld [vmem:[%s265 + $0x44] sm:$0xf]
      %v307 = vld [vmem:[%s265 + $0x48] sm:$0xf]
      %v308 = vld [vmem:[%s265 + $0x4c] sm:$0xf]
      %v309 = vld [vmem:[%s265 + $0x50] sm:$0xf]
      %v310 = vld [vmem:[%s265 + $0x54] sm:$0xf]
      %v311 = vld [vmem:[%s265 + $0x58] sm:$0xf]
      %v312 = vld [vmem:[%s265 + $0x5c] sm:$0xf]
      %v313 = vld [vmem:[%s265 + $0x60] sm:$0xf]
      %v314 = vld [vmem:[%s265 + $0x64] sm:$0xf]
      %v315 = vld [vmem:[%s265 + $0x68] sm:$0xf]
      %v316 = vld [vmem:[%s265 + $0x6c] sm:$0xf]
      %v317 = vld [vmem:[%s265 + $0x70] sm:$0xf]
      %v318 = vld [vmem:[%s265 + $0x74] sm:$0xf]
      %v319 = vld [vmem:[%s265 + $0x78] sm:$0xf]
      %v320 = vld [vmem:[%s265 + $0x7c] sm:$0xf]
      %v322 = vunpack.c.l.b16 %v288
      %v323 = vunpack.c.h.b16 %v288
      %v324 = vpack.c.b16 %v322, %v322
      %v325 = vpack.c.b16 %v323, %v323
      %v360 = vunpack.c.l.b16 %v289
      %v361 = vunpack.c.l.b16 %v290
      %v362 = vunpack.c.l.b16 %v291
      %v363 = vunpack.c.l.b16 %v292
      %v364 = vunpack.c.l.b16 %v293
      %v365 = vunpack.c.l.b16 %v294
      %v366 = vunpack.c.l.b16 %v295
      %v367 = vunpack.c.l.b16 %v296
      %v368 = vunpack.c.l.b16 %v297
      %v369 = vunpack.c.l.b16 %v298
      %v370 = vunpack.c.l.b16 %v299
      %v371 = vunpack.c.l.b16 %v300
      %v372 = vunpack.c.l.b16 %v301
      %v373 = vunpack.c.l.b16 %v302
      %v374 = vunpack.c.l.b16 %v303
      %v375 = vunpack.c.l.b16 %v304
      %v376 = vunpack.c.l.b16 %v305
      %v377 = vunpack.c.l.b16 %v306
      %v378 = vunpack.c.l.b16 %v307
      %v379 = vunpack.c.l.b16 %v308
      %v380 = vunpack.c.l.b16 %v309
      %v381 = vunpack.c.l.b16 %v310
      %v382 = vunpack.c.l.b16 %v311
      %v383 = vunpack.c.l.b16 %v312
      %v384 = vunpack.c.l.b16 %v313
      %v385 = vunpack.c.l.b16 %v314
      %v386 = vunpack.c.l.b16 %v315
      %v387 = vunpack.c.l.b16 %v316
      %v388 = vunpack.c.l.b16 %v317
      %v389 = vunpack.c.l.b16 %v318
      %v390 = vunpack.c.l.b16 %v319
      %v391 = vunpack.c.l.b16 %v320
      %v392 = vpack.c.b16 %v361, %v360
      %v393 = vpack.c.b16 %v363, %v362
      %v394 = vpack.c.b16 %v365, %v364
      %v395 = vpack.c.b16 %v367, %v366
      %v396 = vpack.c.b16 %v369, %v368
      %v397 = vpack.c.b16 %v371, %v370
      %v398 = vpack.c.b16 %v373, %v372
      %v399 = vpack.c.b16 %v375, %v374
      %v400 = vpack.c.b16 %v377, %v376
      %v401 = vpack.c.b16 %v379, %v378
      %v402 = vpack.c.b16 %v381, %v380
      %v403 = vpack.c.b16 %v383, %v382
      %v404 = vpack.c.b16 %v385, %v384
      %v405 = vpack.c.b16 %v387, %v386
      %v406 = vpack.c.b16 %v389, %v388
      %v407 = vpack.c.b16 %v391, %v390
      %424 = vmatprep.subr.bf16.mxu0 0
      %425 = vmatpush1.bf16.msra.mxu0 %v399
      %426 = vmatprep.subr.bf16.mxu0 0
      %427 = vmatpush1.bf16.msra.mxu0 %v398
      %428 = vmatprep.subr.bf16.mxu0 0
      %429 = vmatpush1.bf16.msra.mxu0 %v397
      %430 = vmatprep.subr.bf16.mxu0 0
      %431 = vmatpush1.bf16.msra.mxu0 %v396
      %432 = vmatprep.subr.bf16.mxu0 0
      %433 = vmatpush1.bf16.msra.mxu0 %v395
      %434 = vmatprep.subr.bf16.mxu0 0
      %435 = vmatpush1.bf16.msra.mxu0 %v394
      %436 = vmatprep.subr.bf16.mxu0 0
      %437 = vmatpush1.bf16.msra.mxu0 %v393
      %438 = vmatprep.subr.bf16.mxu0 0
      %439 = vmatpush1.bf16.msra.mxu0 %v392
      %440 = vmatprep.subr.bf16.mxu0 0
      %441 = vmatpush2.bf16.msra.mxu0 %v407
      %442 = vmatprep.subr.bf16.mxu0 0
      %443 = vmatpush2.bf16.msra.mxu0 %v406
      %444 = vmatprep.subr.bf16.mxu0 0
      %445 = vmatpush2.bf16.msra.mxu0 %v405
      %446 = vmatprep.subr.bf16.mxu0 0
      %447 = vmatpush2.bf16.msra.mxu0 %v404
      %448 = vmatprep.subr.bf16.mxu0 0
      %449 = vmatpush2.bf16.msra.mxu0 %v403
      %450 = vmatprep.subr.bf16.mxu0 0
      %451 = vmatpush2.bf16.msra.mxu0 %v402
      %452 = vmatprep.subr.bf16.mxu0 0
      %453 = vmatpush2.bf16.msra.mxu0 %v401
      %454 = vmatprep.subr.bf16.mxu0 0
      %455 = vmatpush2.bf16.msra.mxu0 %v400
      %456 = vmatprep.mubr.bf16.mxu0 %v325
      %457 = vmatmul.mubr.bf16.gmra.mxu0 %v324
      %v458 = vpop.f32.mrf.mxu0
      %v459 = vadd.f32 0.0, %v458
      %v460 = vpop.f32.mrf.mxu0
      %v461 = vpop.f32.mrf.mxu0
      %v462 = vpop.f32.mrf.mxu0
      %463 = vdwg.mxu0
      %v464 = vadd.f32 %v287, %v459
      %465 = vst [vmem:[#allocation2] sm:$0xff] %v464
      // Predicated region
      $region33: #{generator_forward.9} parent=27 // pred_check
        %p466 = pneg %p282
      $region34: #{generator_forward.9} parent=27 // pred_check_branch
        %468 = sbr.rel (%p466) target = $region36
      $region35: #{generator_forward.9} parent=27 // pred_region
        %v469 = vld [vmem:[#allocation2] sm:$0xff]
        %v470 = vpack.c.bf16 %v469, %v469
        %471 = vst [vmem:[%s273] sm:$0xf] %v470
        %v472 = vrot.slane %v469, 4
        %v473 = vadd.f32 %v469, %v472
        %v474 = vrot.slane %v473, 2
        %v475 = vadd.f32 %v473, %v474
        %v476 = vrot.slane %v475, 1
        %v477 = vadd.f32 %v475, %v476
        %v478 = vmul.f32 %v469, %v469
        %v479 = vrot.slane %v478, 4
        %v480 = vadd.f32 %v478, %v479
        %v481 = vrot.slane %v480, 2
        %v482 = vadd.f32 %v480, %v481
        %v483 = vrot.slane %v482, 1
        %v484 = vadd.f32 %v482, %v483
        %v485 = vlaneseq
        %v486 = vshrl.u32 %v485, 7
        %vm487 = vcmp.eq.s32.totalorder %v486, 0
        %vm488 = vcmp.eq.s32.totalorder %v486, 1
        %v489 = vsel %vm488, %v484, 0.0
        %v490 = vsel %vm487, %v477, %v489
        %491 = vst [vmem:[%s280] sm:$0xff] %v490
      $region36: #{generator_forward.9} parent=27 // pred_fallthru
        _
      %p492 = scmp.lt.s32.totalorder %s20, 3
      %s493 = scalar_select %p492, %s20, 3
      %p494 = scmp.lt.s32.totalorder %s21, 0
      %s495 = scalar_select %p494, %s21, 0
      %s496 = sadd.s32 %s495, %s493
      %s497 = smul.addr %s496, 4
      %s498 = scalar_lea.vmem %s2, %s497
      %p499 = scmp.lt.s32.totalorder %s20, 3
      %s500 = scalar_select %p499, %s20, 3
      %p501 = scmp.lt.s32.totalorder %s21, 0
      %s502 = scalar_select %p501, %s21, 0
      %s503 = sadd.s32 %s502, %s500
      %s504 = smul.addr %s503, 8
      %s505 = scalar_lea.vmem %s3, %s504
      // Predicated region
      $region37: #{generator_forward.9} parent=27 // pred_check
        %p506 = pneg %p112
      $region38: #{generator_forward.9} parent=27 // pred_check_branch
        %508 = sbr.rel (%p506) target = $region40
      $region39: #{generator_forward.9} parent=27 // pred_region
        _
      $region40: #{generator_forward.9} parent=27 // pred_fallthru
        _
      // Predicated region
      $region41: #{generator_forward.9} parent=27 // pred_check
        %p509 = pneg %p140
      $region42: #{generator_forward.9} parent=27 // pred_check_branch
        %511 = sbr.rel (%p509) target = $region44
      $region43: #{generator_forward.9} parent=27 // pred_region
        _
      $region44: #{generator_forward.9} parent=27 // pred_fallthru
        _
    $region28: #{generator_forward.9} parent=5 // pred_fallthru
      _
    %p512 = scmp.le.s32.totalorder 2, %s10
    // Predicated region
    $region45: #{generator_forward.9} parent=5 // pred_check
      %p513 = pneg %p512
    $region46: #{generator_forward.9} parent=5 // pred_check_branch
      %515 = sbr.rel (%p513) target = $region48
    $region47: #{generator_forward.9} parent=5 // pred_region
      %s516 = ssub.s32 %s10, 2
      // Predicated region
      $region49: #{generator_forward.9} parent=47 // pred_check
        %p517 = pneg %p118
      $region50: #{generator_forward.9} parent=47 // pred_check_branch
        %519 = sbr.rel (%p517) target = $region52
      $region51: #{generator_forward.9} parent=47 // pred_region
        %p520 = scmp.lt.s32.totalorder %s23, 3
        %s521 = scalar_select %p520, %s23, 3
        %p522 = scmp.lt.s32.totalorder %s24, 0
        %s523 = scalar_select %p522, %s24, 0
        %s524 = sadd.s32 %s523, %s521
        %s525 = smul.addr %s524, 4
        %s526 = scalar_lea.vmem %s2, %s525
      $region52: #{generator_forward.9} parent=47 // pred_fallthru
        _
      // Predicated region
      $region53: #{generator_forward.9} parent=47 // pred_check
        %p527 = pneg %p146
      $region54: #{generator_forward.9} parent=47 // pred_check_branch
        %529 = sbr.rel (%p527) target = $region56
      $region55: #{generator_forward.9} parent=47 // pred_region
        %p530 = scmp.lt.s32.totalorder %s23, 3
        %s531 = scalar_select %p530, %s23, 3
        %p532 = scmp.lt.s32.totalorder %s24, 0
        %s533 = scalar_select %p532, %s24, 0
        %s534 = sadd.s32 %s533, %s531
        %s535 = smul.addr %s534, 8
        %s536 = scalar_lea.vmem %s3, %s535
      $region56: #{generator_forward.9} parent=47 // pred_fallthru
        _
    $region48: #{generator_forward.9} parent=5 // pred_fallthru
      _
  $region6: #{generator_forward.9} parent=0 // loop_footer
    %s14 = sadd.s32 1, %s10
  $region7: #{generator_forward.9} parent=0 // loop_footer_branch
    %9 = sbr.rel target = $region3
  $region8: #{generator_forward.9} parent=0 // loop_exit
    _

// kernel: generator_forward.11
$region0: #{generator_forward.11}
  #allocation0 [shape = 'u32[]', space=smem, size = 0x4, offset = 0x4, fixed_abs, tag = 'smem constant byte address 0x4 - core index']
  #allocation1 [shape = 'u32[144,128]{1,0:T(1,128)}', space=vmem, size = 0x12000, scoped, tag = 'internal scratch']
  #allocation2 [shape = 'f32[32,128]{1,0:T(8,128)}', space=vmem, size = 0x4000, scoped, tag = 'scratch operand']
  %s0 = inlined_call_operand.vmem [shape: bf16[4,32,128], index: 0, kind: input, shape index: {}]
  %s1 = inlined_call_operand.vmem [shape: bf16[4,128,128], index: 1, kind: input, shape index: {}]
  %s2 = inlined_call_operand.vmem [shape: bf16[4,32,128], index: 2, kind: output, shape index: {0}]
  %s3 = inlined_call_operand.vmem [shape: f32[4,8,128], index: 3, kind: output, shape index: {1}]
  %4 = xla_tuple %s2, %s3
  %s5 = sld [smem:[#allocation0]]
  $region57: #{generator_forward.11} parent=0
    _
  %s7 = ssub.s32 1, %s5
  %s8 = scalar_select 0, %s7, %s5
  loop: start=0, step=1, limit=6
  $region2: #{generator_forward.11} parent=0 // loop_pre_header
    _
  $region3: #{generator_forward.11} parent=0 // loop_header
    %s10 = sphi 0, %s14
    %p11 = scmp.ge.s32.totalorder %s10, 6
    %s17 = sphi 0, %s36
    %s18 = sphi 0, %s32
    %s19 = sphi 0, %s28
    %s20 = sphi 0, %s17
    %s21 = sphi 0, %s18
    %s22 = sphi 0, %s19
    %s23 = sphi 0, %s20
    %s24 = sphi 0, %s21
    %s25 = sphi 0, %s22
    %s43 = sphi 0, %s45
    %s46 = sphi 0, %s43
    %s47 = sphi 0, %s46
    %s63 = sphi 0, %s47
    %s71 = sphi 0, %s73
    %s74 = sphi 0, %s71
    %s75 = sphi 0, %s74
    %s91 = sphi 0, %s75
    %s99 = sphi 0, %s101
    %s102 = sphi 0, %s99
    %s103 = sphi 0, %s102
    %s119 = sphi 0, %s103
    %s127 = sphi 0, %s129
    %s130 = sphi 0, %s127
    %s131 = sphi 0, %s130
    %s147 = sphi 0, %s131
  $region4: #{generator_forward.11} parent=0 // loop_header_branch
    %13 = sbr.rel (%p11) target = $region8
  $region5: #{generator_forward.11} parent=0 // loop_body
    %s15 = ssub.s32 %s10, 1
    %s16 = ssub.s32 %s10, 2
    %s26 = sadd.s32 1, %s19
    %p27 = scmp.ge.s32.totalorder %s26, 1
    %s28 = scalar_select %p27, 0, %s26
    %s29 = sadd.s32 1, %s18
    %s30 = scalar_select %p27, %s29, %s18
    %p31 = scmp.ge.s32.totalorder %s30, 1
    %s32 = scalar_select %p31, 0, %s30
    %s33 = sadd.s32 1, %s17
    %s34 = scalar_select %p31, %s33, %s17
    %p35 = scmp.ge.s32.totalorder %s34, 4
    %s36 = scalar_select %p35, 0, %s34
    %s37 = ssub.s32 %s17, %s36
    %s38 = ssub.s32 %s18, %s32
    %s39 = sor.u32 %s37, %s38
    %s40 = ssub.s32 %s19, %s28
    %s41 = sor.u32 %s39, %s40
    %p42 = scmp.eq.s32.totalorder %s41, 0
    %s44 = sadd.s32 %s43, 1
    %s45 = scalar_select %p42, %s43, %s44
    %p48 = pneg %p42
    %p49 = scmp.eq.s32.totalorder %s10, 3
    %p50 = por %p48, %p49
    %p51 = scmp.ne.s32.totalorder %s43, %s46
    %p52 = scmp.eq.s32.totalorder %s10, 0
    %p53 = por %p51, %p52
    %p54 = scmp.ne.s32.totalorder %s43, %s46
    %p55 = scmp.eq.s32.totalorder %s15, 3
    %p56 = por %p54, %p55
    %p57 = scmp.ne.s32.totalorder %s46, %s47
    %p58 = scmp.eq.s32.totalorder %s15, 0
    %p59 = por %p57, %p58
    %p60 = scmp.ne.s32.totalorder %s46, %s47
    %p61 = scmp.eq.s32.totalorder %s16, 3
    %p62 = por %p60, %p61
    %p64 = scmp.ne.s32.totalorder %s47, %s63
    %p65 = scmp.eq.s32.totalorder %s16, 0
    %p66 = por %p64, %p65
    %s67 = ssub.s32 %s17, %s36
    %s68 = ssub.s32 %s19, %s28
    %s69 = sor.u32 %s67, %s68
    %p70 = scmp.eq.s32.totalorder %s69, 0
    %s72 = sadd.s32 %s71, 1
    %s73 = scalar_select %p70, %s71, %s72
    %p76 = pneg %p70
    %p77 = scmp.eq.s32.totalorder %s10, 3
    %p78 = por %p76, %p77
    %p79 = scmp.ne.s32.totalorder %s71, %s74
    %p80 = scmp.eq.s32.totalorder %s10, 0
    %p81 = por %p79, %p80
    %p82 = scmp.ne.s32.totalorder %s71, %s74
    %p83 = scmp.eq.s32.totalorder %s15, 3
    %p84 = por %p82, %p83
    %p85 = scmp.ne.s32.totalorder %s74, %s75
    %p86 = scmp.eq.s32.totalorder %s15, 0
    %p87 = por %p85, %p86
    %p88 = scmp.ne.s32.totalorder %s74, %s75
    %p89 = scmp.eq.s32.totalorder %s16, 3
    %p90 = por %p88, %p89
    %p92 = scmp.ne.s32.totalorder %s75, %s91
    %p93 = scmp.eq.s32.totalorder %s16, 0
    %p94 = por %p92, %p93
    %s95 = ssub.s32 %s17, %s36
    %s96 = ssub.s32 %s18, %s32
    %s97 = sor.u32 %s95, %s96
    %p98 = scmp.eq.s32.totalorder %s97, 0
    %s100 = sadd.s32 %s99, 1
    %s101 = scalar_select %p98, %s99, %s100
    %p104 = pneg %p98
    %p105 = scmp.eq.s32.totalorder %s10, 3
    %p106 = por %p104, %p105
    %p107 = scmp.ne.s32.totalorder %s99, %s102
    %p108 = scmp.eq.s32.totalorder %s10, 0
    %p109 = por %p107, %p108
    %p110 = scmp.ne.s32.totalorder %s99, %s102
    %p111 = scmp.eq.s32.totalorder %s15, 3
    %p112 = por %p110, %p111
    %p113 = scmp.ne.s32.totalorder %s102, %s103
    %p114 = scmp.eq.s32.totalorder %s15, 0
    %p115 = por %p113, %p114
    %p116 = scmp.ne.s32.totalorder %s102, %s103
    %p117 = scmp.eq.s32.totalorder %s16, 3
    %p118 = por %p116, %p117
    %p120 = scmp.ne.s32.totalorder %s103, %s119
    %p121 = scmp.eq.s32.totalorder %s16, 0
    %p122 = por %p120, %p121
    %s123 = ssub.s32 %s17, %s36
    %s124 = ssub.s32 %s18, %s32
    %s125 = sor.u32 %s123, %s124
    %p126 = scmp.eq.s32.totalorder %s125, 0
    %s128 = sadd.s32 %s127, 1
    %s129 = scalar_select %p126, %s127, %s128
    %p132 = pneg %p126
    %p133 = scmp.eq.s32.totalorder %s10, 3
    %p134 = por %p132, %p133
    %p135 = scmp.ne.s32.totalorder %s127, %s130
    %p136 = scmp.eq.s32.totalorder %s10, 0
    %p137 = por %p135, %p136
    %p138 = scmp.ne.s32.totalorder %s127, %s130
    %p139 = scmp.eq.s32.totalorder %s15, 3
    %p140 = por %p138, %p139
    %p141 = scmp.ne.s32.totalorder %s130, %s131
    %p142 = scmp.eq.s32.totalorder %s15, 0
    %p143 = por %p141, %p142
    %p144 = scmp.ne.s32.totalorder %s130, %s131
    %p145 = scmp.eq.s32.totalorder %s16, 3
    %p146 = por %p144, %p145
    %p148 = scmp.ne.s32.totalorder %s131, %s147
    %p149 = scmp.eq.s32.totalorder %s16, 0
    %p150 = por %p148, %p149
    %p151 = scmp.le.s32.totalorder 1, %s10
    %p152 = scmp.lt.s32.totalorder %s10, 5
    %p153 = pnand %p151, %p152
    %p154 = pneg %p153
    // Predicated region
    $region9: #{generator_forward.11} parent=5 // pred_check
      _
    $region10: #{generator_forward.11} parent=5 // pred_check_branch
      %156 = sbr.rel (%p153) target = $region12
    $region11: #{generator_forward.11} parent=5 // pred_region
      %s157 = ssub.s32 %s10, 1
    $region12: #{generator_forward.11} parent=5 // pred_fallthru
      _
    %p158 = scmp.lt.s32.totalorder %s10, 4
    // Predicated region
    $region13: #{generator_forward.11} parent=5 // pred_check
      %p159 = pneg %p158
    $region14: #{generator_forward.11} parent=5 // pred_check_branch
      %161 = sbr.rel (%p159) target = $region16
    $region15: #{generator_forward.11} parent=5 // pred_region
      // Predicated region
      $region17: #{generator_forward.11} parent=15 // pred_check
        %p162 = pneg %p53
      $region18: #{generator_forward.11} parent=15 // pred_check_branch
        %164 = sbr.rel (%p162) target = $region20
      $region19: #{generator_forward.11} parent=15 // pred_region
        %s165 = smul.u32 4, %s18
        %p166 = scmp.lt.s32.totalorder %s17, 3
        %s167 = scalar_select %p166, %s17, 3
        %p168 = scmp.lt.s32.totalorder %s165, 3
        %s169 = scalar_select %p168, %s165, 3
        %p170 = scmp.lt.s32.totalorder %s19, 0
        %s171 = scalar_select %p170, %s19, 0
        %s172 = sadd.s32 %s171, %s169
        %s173 = smul.addr %s167, 4
        %s174 = sadd.s32 %s172, %s173
        %s175 = smul.addr %s174, 4
        %s176 = scalar_lea.vmem %s0, %s175
        %s177 = smul.u32 4, %s18
      $region20: #{generator_forward.11} parent=15 // pred_fallthru
        _
      // Predicated region
      $region21: #{generator_forward.11} parent=15 // pred_check
        %p178 = pneg %p81
      $region22: #{generator_forward.11} parent=15 // pred_check_branch
        %180 = sbr.rel (%p178) target = $region24
      $region23: #{generator_forward.11} parent=15 // pred_region
        %s181 = smul.u32 16, %s19
        %p182 = scmp.lt.s32.totalorder %s17, 3
        %s183 = scalar_select %p182, %s17, 3
        %p184 = scmp.lt.s32.totalorder %s181, 15
        %s185 = scalar_select %p184, %s181, 15
        %s186 = smul.addr %s183, 16
        %s187 = sadd.s32 %s185, %s186
        %s188 = smul.addr %s187, 4
        %s189 = scalar_lea.vmem %s1, %s188
        %s190 = smul.u32 16, %s19
      $region24: #{generator_forward.11} parent=15 // pred_fallthru
        _
    $region16: #{generator_forward.11} parent=5 // pred_fallthru
      _
    %p191 = scmp.le.s32.totalorder 1, %s10
    %p192 = scmp.lt.s32.totalorder %s10, 5
    %p193 = pnand %p191, %p192
    %p194 = pneg %p193
    // Predicated region
    $region25: #{generator_forward.11} parent=5 // pred_check
      _
    $region26: #{generator_forward.11} parent=5 // pred_check_branch
      %196 = sbr.rel (%p193) target = $region28
    $region27: #{generator_forward.11} parent=5 // pred_region
      %s197 = ssub.s32 %s10, 1
      %s198 = smul.u32 4, %s21
      %p199 = scmp.lt.s32.totalorder %s20, 3
      %s200 = scalar_select %p199, %s20, 3
      %p201 = scmp.lt.s32.totalorder %s198, 3
      %s202 = scalar_select %p201, %s198, 3
      %p203 = scmp.lt.s32.totalorder %s22, 0
      %s204 = scalar_select %p203, %s22, 0
      %s205 = sadd.s32 %s204, %s202
      %s206 = smul.addr %s200, 4
      %s207 = sadd.s32 %s205, %s206
      %s208 = smul.addr %s207, 4
      %s209 = scalar_lea.vmem %s0, %s208
      %p210 = pneg %p59
      %p211 = pneg %p56
      %s212 = smul.u32 16, %s22
      %p213 = scmp.lt.s32.totalorder %s20, 3
      %s214 = scalar_select %p213, %s20, 3
      %p215 = scmp.lt.s32.totalorder %s212, 15
      %s216 = scalar_select %p215, %s212, 15
      %s217 = smul.addr %s214, 16
      %s218 = sadd.s32 %s216, %s217
      %s219 = smul.addr %s218, 4
      %s220 = scalar_lea.vmem %s1, %s219
      %p221 = pneg %p87
      %p222 = pneg %p84
      %p223 = pneg %p115
      %p224 = pneg %p112
      %s225 = smul.u32 4, %s21
      %p226 = scmp.lt.s32.totalorder %s20, 3
      %s227 = scalar_select %p226, %s20, 3
      %p228 = scmp.lt.s32.totalorder %s225, 3
      %s229 = scalar_select %p228, %s225, 3
      %s230 = smul.addr %s227, 4
      %s231 = sadd.s32 %s229, %s230
      %s232 = smul.addr %s231, 4
      %s233 = scalar_lea.vmem %s2, %s232
      %p234 = pneg %p143
      %p235 = pneg %p140
      %p236 = scmp.lt.s32.totalorder %s20, 3
      %s237 = scalar_select %p236, %s20, 3
      %p238 = scmp.lt.s32.totalorder %s21, 0
      %s239 = scalar_select %p238, %s21, 0
      %s240 = sadd.s32 %s239, %s237
      %s241 = smul.addr %s240, 8
      %s242 = scalar_lea.vmem %s3, %s241
      %s243 = smul.u32 4, %s21
      %p244 = scmp.lt.s32.totalorder %s20, 3
      %s245 = scalar_select %p244, %s20, 3
      %p246 = scmp.lt.s32.totalorder %s243, 3
      %s247 = scalar_select %p246, %s243, 3
      %p248 = scmp.lt.s32.totalorder %s22, 0
      %s249 = scalar_select %p248, %s22, 0
      %s250 = sadd.s32 %s249, %s247
      %s251 = smul.addr %s245, 4
      %s252 = sadd.s32 %s250, %s251
      %s253 = smul.addr %s252, 4
      %s254 = scalar_lea.vmem %s0, %s253
      %s255 = smul.u32 4, %s21
      %s256 = smul.u32 16, %s22
      %p257 = scmp.lt.s32.totalorder %s20, 3
      %s258 = scalar_select %p257, %s20, 3
      %p259 = scmp.lt.s32.totalorder %s256, 15
      %s260 = scalar_select %p259, %s256, 15
      %s261 = smul.addr %s258, 16
      %s262 = sadd.s32 %s260, %s261
      %s263 = smul.addr %s262, 4
      %s264 = scalar_lea.vmem %s1, %s263
      %s265 = smul.u32 16, %s22
      %s266 = smul.u32 4, %s21
      %p267 = scmp.lt.s32.totalorder %s20, 3
      %s268 = scalar_select %p267, %s20, 3
      %p269 = scmp.lt.s32.totalorder %s266, 3
      %s270 = scalar_select %p269, %s266, 3
      %s271 = smul.addr %s268, 4
      %s272 = sadd.s32 %s270, %s271
      %s273 = smul.addr %s272, 4
      %s274 = scalar_lea.vmem %s2, %s273
      %s275 = smul.u32 4, %s21
      %p276 = scmp.lt.s32.totalorder %s20, 3
      %s277 = scalar_select %p276, %s20, 3
      %p278 = scmp.lt.s32.totalorder %s21, 0
      %s279 = scalar_select %p278, %s21, 0
      %s280 = sadd.s32 %s279, %s277
      %s281 = smul.addr %s280, 8
      %s282 = scalar_lea.vmem %s3, %s281
      %p284 = scmp.eq.s32.totalorder %s22, 0
      // Predicated region
      $region29: #{generator_forward.11} parent=27 // pred_check
        %p285 = pneg %p284
      $region30: #{generator_forward.11} parent=27 // pred_check_branch
        %287 = sbr.rel (%p285) target = $region32
      $region31: #{generator_forward.11} parent=27 // pred_region
        %288 = vst [vmem:[#allocation2] sm:$0xff] 0.0
        %289 = vst [vmem:[#allocation2 + $0x8] sm:$0xff] 0.0
        %290 = vst [vmem:[#allocation2 + $0x10] sm:$0xff] 0.0
        %291 = vst [vmem:[#allocation2 + $0x18] sm:$0xff] 0.0
      $region32: #{generator_forward.11} parent=27 // pred_fallthru
        _
      %v292 = vld [vmem:[#allocation2] sm:$0xff]
      %v293 = vld [vmem:[#allocation2 + $0x8] sm:$0xff]
      %v294 = vld [vmem:[#allocation2 + $0x10] sm:$0xff]
      %v295 = vld [vmem:[#allocation2 + $0x18] sm:$0xff]
      %v296 = vld [vmem:[%s254] sm:$0xf]
      %v297 = vld [vmem:[%s254 + $0x4] sm:$0xf]
      %v298 = vld [vmem:[%s254 + $0x8] sm:$0xf]
      %v299 = vld [vmem:[%s254 + $0xc] sm:$0xf]
      %v300 = vld [vmem:[%s264] sm:$0xf]
      %v301 = vld [vmem:[%s264 + $0x4] sm:$0xf]
      %v302 = vld [vmem:[%s264 + $0x8] sm:$0xf]
      %v303 = vld [vmem:[%s264 + $0xc] sm:$0xf]
      %v304 = vld [vmem:[%s264 + $0x10] sm:$0xf]
      %v305 = vld [vmem:[%s264 + $0x14] sm:$0xf]
      %v306 = vld [vmem:[%s264 + $0x18] sm:$0xf]
      %v307 = vld [vmem:[%s264 + $0x1c] sm:$0xf]
      %v308 = vld [vmem:[%s264 + $0x20] sm:$0xf]
      %v309 = vld [vmem:[%s264 + $0x24] sm:$0xf]
      %v310 = vld [vmem:[%s264 + $0x28] sm:$0xf]
      %v311 = vld [vmem:[%s264 + $0x2c] sm:$0xf]
      %v312 = vld [vmem:[%s264 + $0x30] sm:$0xf]
      %v313 = vld [vmem:[%s264 + $0x34] sm:$0xf]
      %v314 = vld [vmem:[%s264 + $0x38] sm:$0xf]
      %v315 = vld [vmem:[%s264 + $0x3c] sm:$0xf]
      %v320 = vunpack.c.l.b16 %v296
      %v321 = vunpack.c.l.b16 %v297
      %v322 = vunpack.c.l.b16 %v298
      %v323 = vunpack.c.l.b16 %v299
      %v324 = vpack.c.b16 %v321, %v320
      %v325 = vpack.c.b16 %v323, %v322
      %v344 = vunpack.c.l.b16 %v300
      %v345 = vunpack.c.l.b16 %v301
      %v346 = vunpack.c.l.b16 %v302
      %v347 = vunpack.c.l.b16 %v303
      %v348 = vunpack.c.l.b16 %v304
      %v349 = vunpack.c.l.b16 %v305
      %v350 = vunpack.c.l.b16 %v306
      %v351 = vunpack.c.l.b16 %v307
      %v352 = vunpack.c.l.b16 %v308
      %v353 = vunpack.c.l.b16 %v309
      %v354 = vunpack.c.l.b16 %v310
      %v355 = vunpack.c.l.b16 %v311
      %v356 = vunpack.c.l.b16 %v312
      %v357 = vunpack.c.l.b16 %v313
      %v358 = vunpack.c.l.b16 %v314
      %v359 = vunpack.c.l.b16 %v315
      %v360 = vpack.c.b16 %v345, %v344
      %v361 = vpack.c.b16 %v347, %v346
      %v362 = vpack.c.b16 %v349, %v348
      %v363 = vpack.c.b16 %v351, %v350
      %v364 = vpack.c.b16 %v353, %v352
      %v365 = vpack.c.b16 %v355, %v354
      %v366 = vpack.c.b16 %v357, %v356
      %v367 = vpack.c.b16 %v359, %v358
      %376 = vmatprep.subr.bf16.mxu0 0
      %377 = vmatpush1.bf16.msra.mxu0 %v367
      %378 = vmatprep.subr.bf16.mxu0 0
      %379 = vmatpush1.bf16.msra.mxu0 %v366
      %380 = vmatprep.subr.bf16.mxu0 0
      %381 = vmatpush1.bf16.msra.mxu0 %v365
      %382 = vmatprep.subr.bf16.mxu0 0
      %383 = vmatpush1.bf16.msra.mxu0 %v364
      %384 = vmatprep.subr.bf16.mxu0 0
      %385 = vmatpush1.bf16.msra.mxu0 %v363
      %386 = vmatprep.subr.bf16.mxu0 0
      %387 = vmatpush1.bf16.msra.mxu0 %v362
      %388 = vmatprep.subr.bf16.mxu0 0
      %389 = vmatpush1.bf16.msra.mxu0 %v361
      %390 = vmatprep.subr.bf16.mxu0 0
      %391 = vmatpush1.bf16.msra.mxu0 %v360
      %392 = vmatprep.subr.bf16.mxu0 0
      %393 = vmatpush2.bf16.msra.mxu0 0
      %394 = vmatprep.subr.bf16.mxu0 0
      %395 = vmatpush2.bf16.msra.mxu0 0
      %396 = vmatprep.subr.bf16.mxu0 0
      %397 = vmatpush2.bf16.msra.mxu0 0
      %398 = vmatprep.subr.bf16.mxu0 0
      %399 = vmatpush2.bf16.msra.mxu0 0
      %400 = vmatprep.subr.bf16.mxu0 0
      %401 = vmatpush2.bf16.msra.mxu0 0
      %402 = vmatprep.subr.bf16.mxu0 0
      %403 = vmatpush2.bf16.msra.mxu0 0
      %404 = vmatprep.subr.bf16.mxu0 0
      %405 = vmatpush2.bf16.msra.mxu0 0
      %406 = vmatprep.subr.bf16.mxu0 0
      %407 = vmatpush2.bf16.msra.mxu0 0
      %408 = vmatprep.mubr.bf16.mxu0 0
      %409 = vmatmul.mubr.bf16.gmra.mxu0 %v324
      %v410 = vpop.f32.mrf.mxu0
      %v411 = vadd.f32 0.0, %v410
      %v412 = vpop.f32.mrf.mxu0
      %v413 = vpop.f32.mrf.mxu0
      %v414 = vadd.f32 0.0, %v413
      %v415 = vpop.f32.mrf.mxu0
      %416 = vmatprep.mubr.bf16.mxu0 0
      %417 = vmatmul.mubr.bf16.gmra.mxu0 %v325
      %v418 = vpop.f32.mrf.mxu0
      %v419 = vadd.f32 0.0, %v418
      %v420 = vpop.f32.mrf.mxu0
      %v421 = vpop.f32.mrf.mxu0
      %v422 = vadd.f32 0.0, %v421
      %v423 = vpop.f32.mrf.mxu0
      %424 = vdwg.mxu0
      %v425 = vadd.f32 %v292, %v411
      %v426 = vadd.f32 %v293, %v414
      %v427 = vadd.f32 %v294, %v419
      %v428 = vadd.f32 %v295, %v422
      %429 = vst [vmem:[#allocation2] sm:$0xff] %v425
      %430 = vst [vmem:[#allocation2 + $0x8] sm:$0xff] %v426
      %431 = vst [vmem:[#allocation2 + $0x10] sm:$0xff] %v427
      %432 = vst [vmem:[#allocation2 + $0x18] sm:$0xff] %v428
      // Predicated region
      $region33: #{generator_forward.11} parent=27 // pred_check
        %p433 = pneg %p284
      $region34: #{generator_forward.11} parent=27 // pred_check_branch
        %435 = sbr.rel (%p433) target = $region36
      $region35: #{generator_forward.11} parent=27 // pred_region
        %v436 = vld [vmem:[#allocation2] sm:$0xff]
        %v437 = vld [vmem:[#allocation2 + $0x8] sm:$0xff]
        %v438 = vld [vmem:[#allocation2 + $0x10] sm:$0xff]
        %v439 = vld [vmem:[#allocation2 + $0x18] sm:$0xff]
        %v440 = vpack.c.bf16 %v437, %v436
        %v441 = vpack.c.bf16 %v439, %v438
        %v444 = vunpack.c.l.b16 %v440
        %v445 = vunpack.c.h.b16 %v440
        %v446 = vunpack.c.l.b16 %v441
        %v447 = vunpack.c.h.b16 %v441
        %v448 = vpack.c.b16 %v444, %v444
        %v449 = vpack.c.b16 %v445, %v445
        %v450 = vpack.c.b16 %v446, %v446
        %v451 = vpack.c.b16 %v447, %v447
        %456 = vst [vmem:[%s274] sm:$0xf] %v448
        %457 = vst [vmem:[%s274 + $0x4] sm:$0xf] %v449
        %458 = vst [vmem:[%s274 + $0x8] sm:$0xf] %v450
        %459 = vst [vmem:[%s274 + $0xc] sm:$0xf] %v451
        %v460 = vadd.f32 %v436, %v437
        %v461 = vadd.f32 %v460, %v438
        %v462 = vadd.f32 %v461, %v439
        %v463 = vrot.slane %v462, 4
        %v464 = vadd.f32 %v462, %v463
        %v465 = vrot.slane %v464, 2
        %v466 = vadd.f32 %v464, %v465
        %v467 = vrot.slane %v466, 1
        %v468 = vadd.f32 %v466, %v467
        %v469 = vmul.f32 %v436, %v436
        %v470 = vmul.f32 %v437, %v437
        %v471 = vmul.f32 %v438, %v438
        %v472 = vmul.f32 %v439, %v439
        %v473 = vadd.f32 %v469, %v470
        %v474 = vadd.f32 %v473, %v471
        %v475 = vadd.f32 %v474, %v472
        %v476 = vrot.slane %v475, 4
        %v477 = vadd.f32 %v475, %v476
        %v478 = vrot.slane %v477, 2
        %v479 = vadd.f32 %v477, %v478
        %v480 = vrot.slane %v479, 1
        %v481 = vadd.f32 %v479, %v480
        %v482 = vlaneseq
        %v483 = vshrl.u32 %v482, 7
        %vm484 = vcmp.eq.s32.totalorder %v483, 0
        %vm485 = vcmp.eq.s32.totalorder %v483, 1
        %v486 = vsel %vm485, %v481, 0.0
        %v487 = vsel %vm484, %v468, %v486
        %488 = vst [vmem:[%s282] sm:$0xff] %v487
      $region36: #{generator_forward.11} parent=27 // pred_fallthru
        _
      %s489 = smul.u32 4, %s21
      %p490 = scmp.lt.s32.totalorder %s20, 3
      %s491 = scalar_select %p490, %s20, 3
      %p492 = scmp.lt.s32.totalorder %s489, 3
      %s493 = scalar_select %p492, %s489, 3
      %s494 = smul.addr %s491, 4
      %s495 = sadd.s32 %s493, %s494
      %s496 = smul.addr %s495, 4
      %s497 = scalar_lea.vmem %s2, %s496
      %p498 = scmp.lt.s32.totalorder %s20, 3
      %s499 = scalar_select %p498, %s20, 3
      %p500 = scmp.lt.s32.totalorder %s21, 0
      %s501 = scalar_select %p500, %s21, 0
      %s502 = sadd.s32 %s501, %s499
      %s503 = smul.addr %s502, 8
      %s504 = scalar_lea.vmem %s3, %s503
      // Predicated region
      $region37: #{generator_forward.11} parent=27 // pred_check
        %p505 = pneg %p112
      $region38: #{generator_forward.11} parent=27 // pred_check_branch
        %507 = sbr.rel (%p505) target = $region40
      $region39: #{generator_forward.11} parent=27 // pred_region
        %s508 = smul.u32 4, %s21
      $region40: #{generator_forward.11} parent=27 // pred_fallthru
        _
      // Predicated region
      $region41: #{generator_forward.11} parent=27 // pred_check
        %p509 = pneg %p140
      $region42: #{generator_forward.11} parent=27 // pred_check_branch
        %511 = sbr.rel (%p509) target = $region44
      $region43: #{generator_forward.11} parent=27 // pred_region
        _
      $region44: #{generator_forward.11} parent=27 // pred_fallthru
        _
    $region28: #{generator_forward.11} parent=5 // pred_fallthru
      _
    %p512 = scmp.le.s32.totalorder 2, %s10
    // Predicated region
    $region45: #{generator_forward.11} parent=5 // pred_check
      %p513 = pneg %p512
    $region46: #{generator_forward.11} parent=5 // pred_check_branch
      %515 = sbr.rel (%p513) target = $region48
    $region47: #{generator_forward.11} parent=5 // pred_region
      %s516 = ssub.s32 %s10, 2
      // Predicated region
      $region49: #{generator_forward.11} parent=47 // pred_check
        %p517 = pneg %p118
      $region50: #{generator_forward.11} parent=47 // pred_check_branch
        %519 = sbr.rel (%p517) target = $region52
      $region51: #{generator_forward.11} parent=47 // pred_region
        %s520 = smul.u32 4, %s24
        %p521 = scmp.lt.s32.totalorder %s23, 3
        %s522 = scalar_select %p521, %s23, 3
        %p523 = scmp.lt.s32.totalorder %s520, 3
        %s524 = scalar_select %p523, %s520, 3
        %s525 = smul.addr %s522, 4
        %s526 = sadd.s32 %s524, %s525
        %s527 = smul.addr %s526, 4
        %s528 = scalar_lea.vmem %s2, %s527
      $region52: #{generator_forward.11} parent=47 // pred_fallthru
        _
      // Predicated region
      $region53: #{generator_forward.11} parent=47 // pred_check
        %p529 = pneg %p146
      $region54: #{generator_forward.11} parent=47 // pred_check_branch
        %531 = sbr.rel (%p529) target = $region56
      $region55: #{generator_forward.11} parent=47 // pred_region
        %p532 = scmp.lt.s32.totalorder %s23, 3
        %s533 = scalar_select %p532, %s23, 3
        %p534 = scmp.lt.s32.totalorder %s24, 0
        %s535 = scalar_select %p534, %s24, 0
        %s536 = sadd.s32 %s535, %s533
        %s537 = smul.addr %s536, 8
        %s538 = scalar_lea.vmem %s3, %s537
      $region56: #{generator_forward.11} parent=47 // pred_fallthru
        _
    $region48: #{generator_forward.11} parent=5 // pred_fallthru
      _
  $region6: #{generator_forward.11} parent=0 // loop_footer
    %s14 = sadd.s32 1, %s10
  $region7: #{generator_forward.11} parent=0 // loop_footer_branch
    %9 = sbr.rel target = $region3
  $region8: #{generator_forward.11} parent=0 // loop_exit
    _

// kernel: generator_forward.12
$region0: #{generator_forward.12}
  #allocation0 [shape = 'u32[]', space=smem, size = 0x4, offset = 0x4, fixed_abs, tag = 'smem constant byte address 0x4 - core index']
  #allocation1 [shape = 'u32[144,128]{1,0:T(1,128)}', space=vmem, size = 0x12000, scoped, tag = 'internal scratch']
  %s0 = inlined_call_operand.vmem [shape: bf16[128,128], index: 0, kind: input, shape index: {}]
  %s1 = inlined_call_operand.vmem [shape: f32[1,128], index: 1, kind: input, shape index: {}]
  %s2 = inlined_call_operand.vmem [shape: f32[1,128], index: 2, kind: input, shape index: {}]
  %s3 = inlined_call_operand.vmem [shape: bf16[128,128], index: 3, kind: output, shape index: {}]
  %s4 = sld [smem:[#allocation0]]
  $region22: #{generator_forward.12} parent=0
    _
  %s6 = ssub.s32 1, %s4
  %s7 = scalar_select 0, %s6, %s4
  // Predicated region
  $region2: #{generator_forward.12} parent=0 // pred_check
    _
  $region3: #{generator_forward.12} parent=0 // pred_check_branch
    %9 = sbr.rel (0) target = $region5
  $region4: #{generator_forward.12} parent=0 // pred_region
    _
  $region5: #{generator_forward.12} parent=0 // pred_fallthru
    _
  // Predicated region
  $region6: #{generator_forward.12} parent=0 // pred_check
    _
  $region7: #{generator_forward.12} parent=0 // pred_check_branch
    %11 = sbr.rel (0) target = $region9
  $region8: #{generator_forward.12} parent=0 // pred_region
    _
  $region9: #{generator_forward.12} parent=0 // pred_fallthru
    _
  // Predicated region
  $region10: #{generator_forward.12} parent=0 // pred_check
    _
  $region11: #{generator_forward.12} parent=0 // pred_check_branch
    %13 = sbr.rel (0) target = $region13
  $region12: #{generator_forward.12} parent=0 // pred_region
    _
  $region13: #{generator_forward.12} parent=0 // pred_fallthru
    _
  %v14 = vld [vmem:[%s0] sm:$0xf]
  %v15 = vld [vmem:[%s0 + $0x4] sm:$0xf]
  %v16 = vld [vmem:[%s0 + $0x8] sm:$0xf]
  %v17 = vld [vmem:[%s0 + $0xc] sm:$0xf]
  %v18 = vld [vmem:[%s0 + $0x10] sm:$0xf]
  %v19 = vld [vmem:[%s0 + $0x14] sm:$0xf]
  %v20 = vld [vmem:[%s0 + $0x18] sm:$0xf]
  %v21 = vld [vmem:[%s0 + $0x1c] sm:$0xf]
  %v22 = vld [vmem:[%s0 + $0x20] sm:$0xf]
  %v23 = vld [vmem:[%s0 + $0x24] sm:$0xf]
  %v24 = vld [vmem:[%s0 + $0x28] sm:$0xf]
  %v25 = vld [vmem:[%s0 + $0x2c] sm:$0xf]
  %v26 = vld [vmem:[%s0 + $0x30] sm:$0xf]
  %v27 = vld [vmem:[%s0 + $0x34] sm:$0xf]
  %v28 = vld [vmem:[%s0 + $0x38] sm:$0xf]
  %v29 = vld [vmem:[%s0 + $0x3c] sm:$0xf]
  %v30 = vunpack.c.l.bf16 %v14
  %v31 = vunpack.c.l.bf16 %v15
  %v32 = vunpack.c.l.bf16 %v16
  %v33 = vunpack.c.l.bf16 %v17
  %v34 = vunpack.c.l.bf16 %v18
  %v35 = vunpack.c.l.bf16 %v19
  %v36 = vunpack.c.l.bf16 %v20
  %v37 = vunpack.c.l.bf16 %v21
  %v38 = vunpack.c.l.bf16 %v22
  %v39 = vunpack.c.l.bf16 %v23
  %v40 = vunpack.c.l.bf16 %v24
  %v41 = vunpack.c.l.bf16 %v25
  %v42 = vunpack.c.l.bf16 %v26
  %v43 = vunpack.c.l.bf16 %v27
  %v44 = vunpack.c.l.bf16 %v28
  %v45 = vunpack.c.l.bf16 %v29
  %v46 = vld [vmem:[%s1] sm:$0x1]
  %v48 = vlaneseq
  %v49 = vshrl.u32 %v48, 7
  %v50 = vsub.s32 0, %v49
  %v51 = vrot.slane %v46, %v50
  %v53 = vmul.f32 %v30, %v51
  %v54 = vmul.f32 %v31, %v51
  %v55 = vmul.f32 %v32, %v51
  %v56 = vmul.f32 %v33, %v51
  %v57 = vmul.f32 %v34, %v51
  %v58 = vmul.f32 %v35, %v51
  %v59 = vmul.f32 %v36, %v51
  %v60 = vmul.f32 %v37, %v51
  %v61 = vmul.f32 %v38, %v51
  %v62 = vmul.f32 %v39, %v51
  %v63 = vmul.f32 %v40, %v51
  %v64 = vmul.f32 %v41, %v51
  %v65 = vmul.f32 %v42, %v51
  %v66 = vmul.f32 %v43, %v51
  %v67 = vmul.f32 %v44, %v51
  %v68 = vmul.f32 %v45, %v51
  %v69 = vld [vmem:[%s2] sm:$0x1]
  %v71 = vlaneseq
  %v72 = vshrl.u32 %v71, 7
  %v73 = vsub.s32 0, %v72
  %v74 = vrot.slane %v69, %v73
  %v76 = vadd.f32 %v53, %v74
  %v77 = vadd.f32 %v54, %v74
  %v78 = vadd.f32 %v55, %v74
  %v79 = vadd.f32 %v56, %v74
  %v80 = vadd.f32 %v57, %v74
  %v81 = vadd.f32 %v58, %v74
  %v82 = vadd.f32 %v59, %v74
  %v83 = vadd.f32 %v60, %v74
  %v84 = vadd.f32 %v61, %v74
  %v85 = vadd.f32 %v62, %v74
  %v86 = vadd.f32 %v63, %v74
  %v87 = vadd.f32 %v64, %v74
  %v88 = vadd.f32 %v65, %v74
  %v89 = vadd.f32 %v66, %v74
  %v90 = vadd.f32 %v67, %v74
  %v91 = vadd.f32 %v68, %v74
  %v92 = vmax.f32 %v76, 0.0
  %v93 = vmax.f32 %v77, 0.0
  %v94 = vmax.f32 %v78, 0.0
  %v95 = vmax.f32 %v79, 0.0
  %v96 = vmax.f32 %v80, 0.0
  %v97 = vmax.f32 %v81, 0.0
  %v98 = vmax.f32 %v82, 0.0
  %v99 = vmax.f32 %v83, 0.0
  %v100 = vmax.f32 %v84, 0.0
  %v101 = vmax.f32 %v85, 0.0
  %v102 = vmax.f32 %v86, 0.0
  %v103 = vmax.f32 %v87, 0.0
  %v104 = vmax.f32 %v88, 0.0
  %v105 = vmax.f32 %v89, 0.0
  %v106 = vmax.f32 %v90, 0.0
  %v107 = vmax.f32 %v91, 0.0
  %v108 = vpack.c.bf16 %v93, %v92
  %v109 = vpack.c.bf16 %v95, %v94
  %v110 = vpack.c.bf16 %v97, %v96
  %v111 = vpack.c.bf16 %v99, %v98
  %v112 = vpack.c.bf16 %v101, %v100
  %v113 = vpack.c.bf16 %v103, %v102
  %v114 = vpack.c.bf16 %v105, %v104
  %v115 = vpack.c.bf16 %v107, %v106
  %v124 = vunpack.c.l.b16 %v108
  %v125 = vunpack.c.h.b16 %v108
  %v126 = vunpack.c.l.b16 %v109
  %v127 = vunpack.c.h.b16 %v109
  %v128 = vunpack.c.l.b16 %v110
  %v129 = vunpack.c.h.b16 %v110
  %v130 = vunpack.c.l.b16 %v111
  %v131 = vunpack.c.h.b16 %v111
  %v132 = vunpack.c.l.b16 %v112
  %v133 = vunpack.c.h.b16 %v112
  %v134 = vunpack.c.l.b16 %v113
  %v135 = vunpack.c.h.b16 %v113
  %v136 = vunpack.c.l.b16 %v114
  %v137 = vunpack.c.h.b16 %v114
  %v138 = vunpack.c.l.b16 %v115
  %v139 = vunpack.c.h.b16 %v115
  %v140 = vpack.c.b16 %v124, %v124
  %v141 = vpack.c.b16 %v125, %v125
  %v142 = vpack.c.b16 %v126, %v126
  %v143 = vpack.c.b16 %v127, %v127
  %v144 = vpack.c.b16 %v128, %v128
  %v145 = vpack.c.b16 %v129, %v129
  %v146 = vpack.c.b16 %v130, %v130
  %v147 = vpack.c.b16 %v131, %v131
  %v148 = vpack.c.b16 %v132, %v132
  %v149 = vpack.c.b16 %v133, %v133
  %v150 = vpack.c.b16 %v134, %v134
  %v151 = vpack.c.b16 %v135, %v135
  %v152 = vpack.c.b16 %v136, %v136
  %v153 = vpack.c.b16 %v137, %v137
  %v154 = vpack.c.b16 %v138, %v138
  %v155 = vpack.c.b16 %v139, %v139
  %172 = vst [vmem:[%s3] sm:$0xf] %v140
  %173 = vst [vmem:[%s3 + $0x4] sm:$0xf] %v141
  %174 = vst [vmem:[%s3 + $0x8] sm:$0xf] %v142
  %175 = vst [vmem:[%s3 + $0xc] sm:$0xf] %v143
  %176 = vst [vmem:[%s3 + $0x10] sm:$0xf] %v144
  %177 = vst [vmem:[%s3 + $0x14] sm:$0xf] %v145
  %178 = vst [vmem:[%s3 + $0x18] sm:$0xf] %v146
  %179 = vst [vmem:[%s3 + $0x1c] sm:$0xf] %v147
  %180 = vst [vmem:[%s3 + $0x20] sm:$0xf] %v148
  %181 = vst [vmem:[%s3 + $0x24] sm:$0xf] %v149
  %182 = vst [vmem:[%s3 + $0x28] sm:$0xf] %v150
  %183 = vst [vmem:[%s3 + $0x2c] sm:$0xf] %v151
  %184 = vst [vmem:[%s3 + $0x30] sm:$0xf] %v152
  %185 = vst [vmem:[%s3 + $0x34] sm:$0xf] %v153
  %186 = vst [vmem:[%s3 + $0x38] sm:$0xf] %v154
  %187 = vst [vmem:[%s3 + $0x3c] sm:$0xf] %v155
  // Predicated region
  $region14: #{generator_forward.12} parent=0 // pred_check
    _
  $region15: #{generator_forward.12} parent=0 // pred_check_branch
    %189 = sbr.rel (0) target = $region17
  $region16: #{generator_forward.12} parent=0 // pred_region
    _
  $region17: #{generator_forward.12} parent=0 // pred_fallthru
    _
  // Predicated region
  $region18: #{generator_forward.12} parent=0 // pred_check
    _
  $region19: #{generator_forward.12} parent=0 // pred_check_branch
    %191 = sbr.rel (0) target = $region21
  $region20: #{generator_forward.12} parent=0 // pred_region
    _
  $region21: #{generator_forward.12} parent=0 // pred_fallthru
    _

// kernel: generator_forward.13
$region0: #{generator_forward.13}
  #allocation0 [shape = 'u32[]', space=smem, size = 0x4, offset = 0x4, fixed_abs, tag = 'smem constant byte address 0x4 - core index']
  #allocation1 [shape = 'u32[144,128]{1,0:T(1,128)}', space=vmem, size = 0x12000, scoped, tag = 'internal scratch']
  #allocation2 [shape = 'f32[128,128]{1,0:T(8,128)}', space=vmem, size = 0x10000, scoped, tag = 'scratch operand']
  %s0 = inlined_call_operand.vmem [shape: bf16[4,128,128], index: 0, kind: input, shape index: {}]
  %s1 = inlined_call_operand.vmem [shape: bf16[4,128,128], index: 1, kind: input, shape index: {}]
  %s2 = inlined_call_operand.vmem [shape: bf16[4,128,128], index: 2, kind: output, shape index: {0}]
  %s3 = inlined_call_operand.vmem [shape: f32[4,8,128], index: 3, kind: output, shape index: {1}]
  %4 = xla_tuple %s2, %s3
  %s5 = sld [smem:[#allocation0]]
  $region57: #{generator_forward.13} parent=0
    _
  %s7 = ssub.s32 1, %s5
  %s8 = scalar_select 0, %s7, %s5
  loop: start=0, step=1, limit=6
  $region2: #{generator_forward.13} parent=0 // loop_pre_header
    _
  $region3: #{generator_forward.13} parent=0 // loop_header
    %s10 = sphi 0, %s14
    %p11 = scmp.ge.s32.totalorder %s10, 6
    %s17 = sphi 0, %s36
    %s18 = sphi 0, %s32
    %s19 = sphi 0, %s28
    %s20 = sphi 0, %s17
    %s21 = sphi 0, %s18
    %s22 = sphi 0, %s19
    %s23 = sphi 0, %s20
    %s24 = sphi 0, %s21
    %s25 = sphi 0, %s22
    %s43 = sphi 0, %s45
    %s46 = sphi 0, %s43
    %s47 = sphi 0, %s46
    %s63 = sphi 0, %s47
    %s71 = sphi 0, %s73
    %s74 = sphi 0, %s71
    %s75 = sphi 0, %s74
    %s91 = sphi 0, %s75
    %s99 = sphi 0, %s101
    %s102 = sphi 0, %s99
    %s103 = sphi 0, %s102
    %s119 = sphi 0, %s103
    %s127 = sphi 0, %s129
    %s130 = sphi 0, %s127
    %s131 = sphi 0, %s130
    %s147 = sphi 0, %s131
  $region4: #{generator_forward.13} parent=0 // loop_header_branch
    %13 = sbr.rel (%p11) target = $region8
  $region5: #{generator_forward.13} parent=0 // loop_body
    %s15 = ssub.s32 %s10, 1
    %s16 = ssub.s32 %s10, 2
    %s26 = sadd.s32 1, %s19
    %p27 = scmp.ge.s32.totalorder %s26, 1
    %s28 = scalar_select %p27, 0, %s26
    %s29 = sadd.s32 1, %s18
    %s30 = scalar_select %p27, %s29, %s18
    %p31 = scmp.ge.s32.totalorder %s30, 1
    %s32 = scalar_select %p31, 0, %s30
    %s33 = sadd.s32 1, %s17
    %s34 = scalar_select %p31, %s33, %s17
    %p35 = scmp.ge.s32.totalorder %s34, 4
    %s36 = scalar_select %p35, 0, %s34
    %s37 = ssub.s32 %s17, %s36
    %s38 = ssub.s32 %s18, %s32
    %s39 = sor.u32 %s37, %s38
    %s40 = ssub.s32 %s19, %s28
    %s41 = sor.u32 %s39, %s40
    %p42 = scmp.eq.s32.totalorder %s41, 0
    %s44 = sadd.s32 %s43, 1
    %s45 = scalar_select %p42, %s43, %s44
    %p48 = pneg %p42
    %p49 = scmp.eq.s32.totalorder %s10, 3
    %p50 = por %p48, %p49
    %p51 = scmp.ne.s32.totalorder %s43, %s46
    %p52 = scmp.eq.s32.totalorder %s10, 0
    %p53 = por %p51, %p52
    %p54 = scmp.ne.s32.totalorder %s43, %s46
    %p55 = scmp.eq.s32.totalorder %s15, 3
    %p56 = por %p54, %p55
    %p57 = scmp.ne.s32.totalorder %s46, %s47
    %p58 = scmp.eq.s32.totalorder %s15, 0
    %p59 = por %p57, %p58
    %p60 = scmp.ne.s32.totalorder %s46, %s47
    %p61 = scmp.eq.s32.totalorder %s16, 3
    %p62 = por %p60, %p61
    %p64 = scmp.ne.s32.totalorder %s47, %s63
    %p65 = scmp.eq.s32.totalorder %s16, 0
    %p66 = por %p64, %p65
    %s67 = ssub.s32 %s17, %s36
    %s68 = ssub.s32 %s19, %s28
    %s69 = sor.u32 %s67, %s68
    %p70 = scmp.eq.s32.totalorder %s69, 0
    %s72 = sadd.s32 %s71, 1
    %s73 = scalar_select %p70, %s71, %s72
    %p76 = pneg %p70
    %p77 = scmp.eq.s32.totalorder %s10, 3
    %p78 = por %p76, %p77
    %p79 = scmp.ne.s32.totalorder %s71, %s74
    %p80 = scmp.eq.s32.totalorder %s10, 0
    %p81 = por %p79, %p80
    %p82 = scmp.ne.s32.totalorder %s71, %s74
    %p83 = scmp.eq.s32.totalorder %s15, 3
    %p84 = por %p82, %p83
    %p85 = scmp.ne.s32.totalorder %s74, %s75
    %p86 = scmp.eq.s32.totalorder %s15, 0
    %p87 = por %p85, %p86
    %p88 = scmp.ne.s32.totalorder %s74, %s75
    %p89 = scmp.eq.s32.totalorder %s16, 3
    %p90 = por %p88, %p89
    %p92 = scmp.ne.s32.totalorder %s75, %s91
    %p93 = scmp.eq.s32.totalorder %s16, 0
    %p94 = por %p92, %p93
    %s95 = ssub.s32 %s17, %s36
    %s96 = ssub.s32 %s18, %s32
    %s97 = sor.u32 %s95, %s96
    %p98 = scmp.eq.s32.totalorder %s97, 0
    %s100 = sadd.s32 %s99, 1
    %s101 = scalar_select %p98, %s99, %s100
    %p104 = pneg %p98
    %p105 = scmp.eq.s32.totalorder %s10, 3
    %p106 = por %p104, %p105
    %p107 = scmp.ne.s32.totalorder %s99, %s102
    %p108 = scmp.eq.s32.totalorder %s10, 0
    %p109 = por %p107, %p108
    %p110 = scmp.ne.s32.totalorder %s99, %s102
    %p111 = scmp.eq.s32.totalorder %s15, 3
    %p112 = por %p110, %p111
    %p113 = scmp.ne.s32.totalorder %s102, %s103
    %p114 = scmp.eq.s32.totalorder %s15, 0
    %p115 = por %p113, %p114
    %p116 = scmp.ne.s32.totalorder %s102, %s103
    %p117 = scmp.eq.s32.totalorder %s16, 3
    %p118 = por %p116, %p117
    %p120 = scmp.ne.s32.totalorder %s103, %s119
    %p121 = scmp.eq.s32.totalorder %s16, 0
    %p122 = por %p120, %p121
    %s123 = ssub.s32 %s17, %s36
    %s124 = ssub.s32 %s18, %s32
    %s125 = sor.u32 %s123, %s124
    %p126 = scmp.eq.s32.totalorder %s125, 0
    %s128 = sadd.s32 %s127, 1
    %s129 = scalar_select %p126, %s127, %s128
    %p132 = pneg %p126
    %p133 = scmp.eq.s32.totalorder %s10, 3
    %p134 = por %p132, %p133
    %p135 = scmp.ne.s32.totalorder %s127, %s130
    %p136 = scmp.eq.s32.totalorder %s10, 0
    %p137 = por %p135, %p136
    %p138 = scmp.ne.s32.totalorder %s127, %s130
    %p139 = scmp.eq.s32.totalorder %s15, 3
    %p140 = por %p138, %p139
    %p141 = scmp.ne.s32.totalorder %s130, %s131
    %p142 = scmp.eq.s32.totalorder %s15, 0
    %p143 = por %p141, %p142
    %p144 = scmp.ne.s32.totalorder %s130, %s131
    %p145 = scmp.eq.s32.totalorder %s16, 3
    %p146 = por %p144, %p145
    %p148 = scmp.ne.s32.totalorder %s131, %s147
    %p149 = scmp.eq.s32.totalorder %s16, 0
    %p150 = por %p148, %p149
    %p151 = scmp.le.s32.totalorder 1, %s10
    %p152 = scmp.lt.s32.totalorder %s10, 5
    %p153 = pnand %p151, %p152
    %p154 = pneg %p153
    // Predicated region
    $region9: #{generator_forward.13} parent=5 // pred_check
      _
    $region10: #{generator_forward.13} parent=5 // pred_check_branch
      %156 = sbr.rel (%p153) target = $region12
    $region11: #{generator_forward.13} parent=5 // pred_region
      %s157 = ssub.s32 %s10, 1
    $region12: #{generator_forward.13} parent=5 // pred_fallthru
      _
    %p158 = scmp.lt.s32.totalorder %s10, 4
    // Predicated region
    $region13: #{generator_forward.13} parent=5 // pred_check
      %p159 = pneg %p158
    $region14: #{generator_forward.13} parent=5 // pred_check_branch
      %161 = sbr.rel (%p159) target = $region16
    $region15: #{generator_forward.13} parent=5 // pred_region
      // Predicated region
      $region17: #{generator_forward.13} parent=15 // pred_check
        %p162 = pneg %p53
      $region18: #{generator_forward.13} parent=15 // pred_check_branch
        %164 = sbr.rel (%p162) target = $region20
      $region19: #{generator_forward.13} parent=15 // pred_region
        %s165 = smul.u32 16, %s18
        %p166 = scmp.lt.s32.totalorder %s17, 3
        %s167 = scalar_select %p166, %s17, 3
        %p168 = scmp.lt.s32.totalorder %s165, 15
        %s169 = scalar_select %p168, %s165, 15
        %p170 = scmp.lt.s32.totalorder %s19, 0
        %s171 = scalar_select %p170, %s19, 0
        %s172 = sadd.s32 %s171, %s169
        %s173 = smul.addr %s167, 16
        %s174 = sadd.s32 %s172, %s173
        %s175 = smul.addr %s174, 4
        %s176 = scalar_lea.vmem %s0, %s175
        %s177 = smul.u32 16, %s18
      $region20: #{generator_forward.13} parent=15 // pred_fallthru
        _
      // Predicated region
      $region21: #{generator_forward.13} parent=15 // pred_check
        %p178 = pneg %p81
      $region22: #{generator_forward.13} parent=15 // pred_check_branch
        %180 = sbr.rel (%p178) target = $region24
      $region23: #{generator_forward.13} parent=15 // pred_region
        %s181 = smul.u32 16, %s19
        %p182 = scmp.lt.s32.totalorder %s17, 3
        %s183 = scalar_select %p182, %s17, 3
        %p184 = scmp.lt.s32.totalorder %s181, 15
        %s185 = scalar_select %p184, %s181, 15
        %s186 = smul.addr %s183, 16
        %s187 = sadd.s32 %s185, %s186
        %s188 = smul.addr %s187, 4
        %s189 = scalar_lea.vmem %s1, %s188
        %s190 = smul.u32 16, %s19
      $region24: #{generator_forward.13} parent=15 // pred_fallthru
        _
    $region16: #{generator_forward.13} parent=5 // pred_fallthru
      _
    %p191 = scmp.le.s32.totalorder 1, %s10
    %p192 = scmp.lt.s32.totalorder %s10, 5
    %p193 = pnand %p191, %p192
    %p194 = pneg %p193
    // Predicated region
    $region25: #{generator_forward.13} parent=5 // pred_check
      _
    $region26: #{generator_forward.13} parent=5 // pred_check_branch
      %196 = sbr.rel (%p193) target = $region28
    $region27: #{generator_forward.13} parent=5 // pred_region
      %s197 = ssub.s32 %s10, 1
      %s198 = smul.u32 16, %s21
      %p199 = scmp.lt.s32.totalorder %s20, 3
      %s200 = scalar_select %p199, %s20, 3
      %p201 = scmp.lt.s32.totalorder %s198, 15
      %s202 = scalar_select %p201, %s198, 15
      %p203 = scmp.lt.s32.totalorder %s22, 0
      %s204 = scalar_select %p203, %s22, 0
      %s205 = sadd.s32 %s204, %s202
      %s206 = smul.addr %s200, 16
      %s207 = sadd.s32 %s205, %s206
      %s208 = smul.addr %s207, 4
      %s209 = scalar_lea.vmem %s0, %s208
      %p210 = pneg %p59
      %p211 = pneg %p56
      %s212 = smul.u32 16, %s22
      %p213 = scmp.lt.s32.totalorder %s20, 3
      %s214 = scalar_select %p213, %s20, 3
      %p215 = scmp.lt.s32.totalorder %s212, 15
      %s216 = scalar_select %p215, %s212, 15
      %s217 = smul.addr %s214, 16
      %s218 = sadd.s32 %s216, %s217
      %s219 = smul.addr %s218, 4
      %s220 = scalar_lea.vmem %s1, %s219
      %p221 = pneg %p87
      %p222 = pneg %p84
      %p223 = pneg %p115
      %p224 = pneg %p112
      %s225 = smul.u32 16, %s21
      %p226 = scmp.lt.s32.totalorder %s20, 3
      %s227 = scalar_select %p226, %s20, 3
      %p228 = scmp.lt.s32.totalorder %s225, 15
      %s229 = scalar_select %p228, %s225, 15
      %s230 = smul.addr %s227, 16
      %s231 = sadd.s32 %s229, %s230
      %s232 = smul.addr %s231, 4
      %s233 = scalar_lea.vmem %s2, %s232
      %p234 = pneg %p143
      %p235 = pneg %p140
      %p236 = scmp.lt.s32.totalorder %s20, 3
      %s237 = scalar_select %p236, %s20, 3
      %p238 = scmp.lt.s32.totalorder %s21, 0
      %s239 = scalar_select %p238, %s21, 0
      %s240 = sadd.s32 %s239, %s237
      %s241 = smul.addr %s240, 8
      %s242 = scalar_lea.vmem %s3, %s241
      %s243 = smul.u32 16, %s21
      %p244 = scmp.lt.s32.totalorder %s20, 3
      %s245 = scalar_select %p244, %s20, 3
      %p246 = scmp.lt.s32.totalorder %s243, 15
      %s247 = scalar_select %p246, %s243, 15
      %p248 = scmp.lt.s32.totalorder %s22, 0
      %s249 = scalar_select %p248, %s22, 0
      %s250 = sadd.s32 %s249, %s247
      %s251 = smul.addr %s245, 16
      %s252 = sadd.s32 %s250, %s251
      %s253 = smul.addr %s252, 4
      %s254 = scalar_lea.vmem %s0, %s253
      %s255 = smul.u32 16, %s21
      %s256 = smul.u32 16, %s22
      %p257 = scmp.lt.s32.totalorder %s20, 3
      %s258 = scalar_select %p257, %s20, 3
      %p259 = scmp.lt.s32.totalorder %s256, 15
      %s260 = scalar_select %p259, %s256, 15
      %s261 = smul.addr %s258, 16
      %s262 = sadd.s32 %s260, %s261
      %s263 = smul.addr %s262, 4
      %s264 = scalar_lea.vmem %s1, %s263
      %s265 = smul.u32 16, %s22
      %s266 = smul.u32 16, %s21
      %p267 = scmp.lt.s32.totalorder %s20, 3
      %s268 = scalar_select %p267, %s20, 3
      %p269 = scmp.lt.s32.totalorder %s266, 15
      %s270 = scalar_select %p269, %s266, 15
      %s271 = smul.addr %s268, 16
      %s272 = sadd.s32 %s270, %s271
      %s273 = smul.addr %s272, 4
      %s274 = scalar_lea.vmem %s2, %s273
      %s275 = smul.u32 16, %s21
      %p276 = scmp.lt.s32.totalorder %s20, 3
      %s277 = scalar_select %p276, %s20, 3
      %p278 = scmp.lt.s32.totalorder %s21, 0
      %s279 = scalar_select %p278, %s21, 0
      %s280 = sadd.s32 %s279, %s277
      %s281 = smul.addr %s280, 8
      %s282 = scalar_lea.vmem %s3, %s281
      %p284 = scmp.eq.s32.totalorder %s22, 0
      // Predicated region
      $region29: #{generator_forward.13} parent=27 // pred_check
        %p285 = pneg %p284
      $region30: #{generator_forward.13} parent=27 // pred_check_branch
        %287 = sbr.rel (%p285) target = $region32
      $region31: #{generator_forward.13} parent=27 // pred_region
        %288 = vst [vmem:[#allocation2] sm:$0xff] 0.0
        %289 = vst [vmem:[#allocation2 + $0x8] sm:$0xff] 0.0
        %290 = vst [vmem:[#allocation2 + $0x10] sm:$0xff] 0.0
        %291 = vst [vmem:[#allocation2 + $0x18] sm:$0xff] 0.0
        %292 = vst [vmem:[#allocation2 + $0x20] sm:$0xff] 0.0
        %293 = vst [vmem:[#allocation2 + $0x28] sm:$0xff] 0.0
        %294 = vst [vmem:[#allocation2 + $0x30] sm:$0xff] 0.0
        %295 = vst [vmem:[#allocation2 + $0x38] sm:$0xff] 0.0
        %296 = vst [vmem:[#allocation2 + $0x40] sm:$0xff] 0.0
        %297 = vst [vmem:[#allocation2 + $0x48] sm:$0xff] 0.0
        %298 = vst [vmem:[#allocation2 + $0x50] sm:$0xff] 0.0
        %299 = vst [vmem:[#allocation2 + $0x58] sm:$0xff] 0.0
        %300 = vst [vmem:[#allocation2 + $0x60] sm:$0xff] 0.0
        %301 = vst [vmem:[#allocation2 + $0x68] sm:$0xff] 0.0
        %302 = vst [vmem:[#allocation2 + $0x70] sm:$0xff] 0.0
        %303 = vst [vmem:[#allocation2 + $0x78] sm:$0xff] 0.0
      $region32: #{generator_forward.13} parent=27 // pred_fallthru
        _
      %v304 = vld [vmem:[#allocation2] sm:$0xff]
      %v305 = vld [vmem:[#allocation2 + $0x8] sm:$0xff]
      %v306 = vld [vmem:[#allocation2 + $0x10] sm:$0xff]
      %v307 = vld [vmem:[#allocation2 + $0x18] sm:$0xff]
      %v308 = vld [vmem:[#allocation2 + $0x20] sm:$0xff]
      %v309 = vld [vmem:[#allocation2 + $0x28] sm:$0xff]
      %v310 = vld [vmem:[#allocation2 + $0x30] sm:$0xff]
      %v311 = vld [vmem:[#allocation2 + $0x38] sm:$0xff]
      %v312 = vld [vmem:[#allocation2 + $0x40] sm:$0xff]
      %v313 = vld [vmem:[#allocation2 + $0x48] sm:$0xff]
      %v314 = vld [vmem:[#allocation2 + $0x50] sm:$0xff]
      %v315 = vld [vmem:[#allocation2 + $0x58] sm:$0xff]
      %v316 = vld [vmem:[#allocation2 + $0x60] sm:$0xff]
      %v317 = vld [vmem:[#allocation2 + $0x68] sm:$0xff]
      %v318 = vld [vmem:[#allocation2 + $0x70] sm:$0xff]
      %v319 = vld [vmem:[#allocation2 + $0x78] sm:$0xff]
      %v320 = vld [vmem:[%s254] sm:$0xf]
      %v321 = vld [vmem:[%s254 + $0x4] sm:$0xf]
      %v322 = vld [vmem:[%s254 + $0x8] sm:$0xf]
      %v323 = vld [vmem:[%s254 + $0xc] sm:$0xf]
      %v324 = vld [vmem:[%s254 + $0x10] sm:$0xf]
      %v325 = vld [vmem:[%s254 + $0x14] sm:$0xf]
      %v326 = vld [vmem:[%s254 + $0x18] sm:$0xf]
      %v327 = vld [vmem:[%s254 + $0x1c] sm:$0xf]
      %v328 = vld [vmem:[%s254 + $0x20] sm:$0xf]
      %v329 = vld [vmem:[%s254 + $0x24] sm:$0xf]
      %v330 = vld [vmem:[%s254 + $0x28] sm:$0xf]
      %v331 = vld [vmem:[%s254 + $0x2c] sm:$0xf]
      %v332 = vld [vmem:[%s254 + $0x30] sm:$0xf]
      %v333 = vld [vmem:[%s254 + $0x34] sm:$0xf]
      %v334 = vld [vmem:[%s254 + $0x38] sm:$0xf]
      %v335 = vld [vmem:[%s254 + $0x3c] sm:$0xf]
      %v336 = vld [vmem:[%s264] sm:$0xf]
      %v337 = vld [vmem:[%s264 + $0x4] sm:$0xf]
      %v338 = vld [vmem:[%s264 + $0x8] sm:$0xf]
      %v339 = vld [vmem:[%s264 + $0xc] sm:$0xf]
      %v340 = vld [vmem:[%s264 + $0x10] sm:$0xf]
      %v341 = vld [vmem:[%s264 + $0x14] sm:$0xf]
      %v342 = vld [vmem:[%s264 + $0x18] sm:$0xf]
      %v343 = vld [vmem:[%s264 + $0x1c] sm:$0xf]
      %v344 = vld [vmem:[%s264 + $0x20] sm:$0xf]
      %v345 = vld [vmem:[%s264 + $0x24] sm:$0xf]
      %v346 = vld [vmem:[%s264 + $0x28] sm:$0xf]
      %v347 = vld [vmem:[%s264 + $0x2c] sm:$0xf]
      %v348 = vld [vmem:[%s264 + $0x30] sm:$0xf]
      %v349 = vld [vmem:[%s264 + $0x34] sm:$0xf]
      %v350 = vld [vmem:[%s264 + $0x38] sm:$0xf]
      %v351 = vld [vmem:[%s264 + $0x3c] sm:$0xf]
      %v368 = vunpack.c.l.b16 %v320
      %v369 = vunpack.c.l.b16 %v321
      %v370 = vunpack.c.l.b16 %v322
      %v371 = vunpack.c.l.b16 %v323
      %v372 = vunpack.c.l.b16 %v324
      %v373 = vunpack.c.l.b16 %v325
      %v374 = vunpack.c.l.b16 %v326
      %v375 = vunpack.c.l.b16 %v327
      %v376 = vunpack.c.l.b16 %v328
      %v377 = vunpack.c.l.b16 %v329
      %v378 = vunpack.c.l.b16 %v330
      %v379 = vunpack.c.l.b16 %v331
      %v380 = vunpack.c.l.b16 %v332
      %v381 = vunpack.c.l.b16 %v333
      %v382 = vunpack.c.l.b16 %v334
      %v383 = vunpack.c.l.b16 %v335
      %v384 = vpack.c.b16 %v369, %v368
      %v385 = vpack.c.b16 %v371, %v370
      %v386 = vpack.c.b16 %v373, %v372
      %v387 = vpack.c.b16 %v375, %v374
      %v388 = vpack.c.b16 %v377, %v376
      %v389 = vpack.c.b16 %v379, %v378
      %v390 = vpack.c.b16 %v381, %v380
      %v391 = vpack.c.b16 %v383, %v382
      %v416 = vunpack.c.l.b16 %v336
      %v417 = vunpack.c.l.b16 %v337
      %v418 = vunpack.c.l.b16 %v338
      %v419 = vunpack.c.l.b16 %v339
      %v420 = vunpack.c.l.b16 %v340
      %v421 = vunpack.c.l.b16 %v341
      %v422 = vunpack.c.l.b16 %v342
      %v423 = vunpack.c.l.b16 %v343
      %v424 = vunpack.c.l.b16 %v344
      %v425 = vunpack.c.l.b16 %v345
      %v426 = vunpack.c.l.b16 %v346
      %v427 = vunpack.c.l.b16 %v347
      %v428 = vunpack.c.l.b16 %v348
      %v429 = vunpack.c.l.b16 %v349
      %v430 = vunpack.c.l.b16 %v350
      %v431 = vunpack.c.l.b16 %v351
      %v432 = vpack.c.b16 %v417, %v416
      %v433 = vpack.c.b16 %v419, %v418
      %v434 = vpack.c.b16 %v421, %v420
      %v435 = vpack.c.b16 %v423, %v422
      %v436 = vpack.c.b16 %v425, %v424
      %v437 = vpack.c.b16 %v427, %v426
      %v438 = vpack.c.b16 %v429, %v428
      %v439 = vpack.c.b16 %v431, %v430
      %448 = vmatprep.subr.bf16.mxu0 0
      %449 = vmatpush1.bf16.msra.mxu0 %v439
      %450 = vmatprep.subr.bf16.mxu0 0
      %451 = vmatpush1.bf16.msra.mxu0 %v438
      %452 = vmatprep.subr.bf16.mxu0 0
      %453 = vmatpush1.bf16.msra.mxu0 %v437
      %454 = vmatprep.subr.bf16.mxu0 0
      %455 = vmatpush1.bf16.msra.mxu0 %v436
      %456 = vmatprep.subr.bf16.mxu0 0
      %457 = vmatpush1.bf16.msra.mxu0 %v435
      %458 = vmatprep.subr.bf16.mxu0 0
      %459 = vmatpush1.bf16.msra.mxu0 %v434
      %460 = vmatprep.subr.bf16.mxu0 0
      %461 = vmatpush1.bf16.msra.mxu0 %v433
      %462 = vmatprep.subr.bf16.mxu0 0
      %463 = vmatpush1.bf16.msra.mxu0 %v432
      %464 = vmatprep.subr.bf16.mxu0 0
      %465 = vmatpush2.bf16.msra.mxu0 0
      %466 = vmatprep.subr.bf16.mxu0 0
      %467 = vmatpush2.bf16.msra.mxu0 0
      %468 = vmatprep.subr.bf16.mxu0 0
      %469 = vmatpush2.bf16.msra.mxu0 0
      %470 = vmatprep.subr.bf16.mxu0 0
      %471 = vmatpush2.bf16.msra.mxu0 0
      %472 = vmatprep.subr.bf16.mxu0 0
      %473 = vmatpush2.bf16.msra.mxu0 0
      %474 = vmatprep.subr.bf16.mxu0 0
      %475 = vmatpush2.bf16.msra.mxu0 0
      %476 = vmatprep.subr.bf16.mxu0 0
      %477 = vmatpush2.bf16.msra.mxu0 0
      %478 = vmatprep.subr.bf16.mxu0 0
      %479 = vmatpush2.bf16.msra.mxu0 0
      %480 = vmatprep.mubr.bf16.mxu0 0
      %481 = vmatmul.mubr.bf16.gmra.mxu0 %v384
      %v482 = vpop.f32.mrf.mxu0
      %v483 = vadd.f32 0.0, %v482
      %v484 = vpop.f32.mrf.mxu0
      %v485 = vpop.f32.mrf.mxu0
      %v486 = vadd.f32 0.0, %v485
      %v487 = vpop.f32.mrf.mxu0
      %488 = vmatprep.mubr.bf16.mxu0 0
      %489 = vmatmul.mubr.bf16.gmra.mxu0 %v385
      %v490 = vpop.f32.mrf.mxu0
      %v491 = vadd.f32 0.0, %v490
      %v492 = vpop.f32.mrf.mxu0
      %v493 = vpop.f32.mrf.mxu0
      %v494 = vadd.f32 0.0, %v493
      %v495 = vpop.f32.mrf.mxu0
      %496 = vmatprep.mubr.bf16.mxu0 0
      %497 = vmatmul.mubr.bf16.gmra.mxu0 %v386
      %v498 = vpop.f32.mrf.mxu0
      %v499 = vadd.f32 0.0, %v498
      %v500 = vpop.f32.mrf.mxu0
      %v501 = vpop.f32.mrf.mxu0
      %v502 = vadd.f32 0.0, %v501
      %v503 = vpop.f32.mrf.mxu0
      %504 = vmatprep.mubr.bf16.mxu0 0
      %505 = vmatmul.mubr.bf16.gmra.mxu0 %v387
      %v506 = vpop.f32.mrf.mxu0
      %v507 = vadd.f32 0.0, %v506
      %v508 = vpop.f32.mrf.mxu0
      %v509 = vpop.f32.mrf.mxu0
      %v510 = vadd.f32 0.0, %v509
      %v511 = vpop.f32.mrf.mxu0
      %512 = vmatprep.mubr.bf16.mxu0 0
      %513 = vmatmul.mubr.bf16.gmra.mxu0 %v388
      %v514 = vpop.f32.mrf.mxu0
      %v515 = vadd.f32 0.0, %v514
      %v516 = vpop.f32.mrf.mxu0
      %v517 = vpop.f32.mrf.mxu0
      %v518 = vadd.f32 0.0, %v517
      %v519 = vpop.f32.mrf.mxu0
      %520 = vmatprep.mubr.bf16.mxu0 0
      %521 = vmatmul.mubr.bf16.gmra.mxu0 %v389
      %v522 = vpop.f32.mrf.mxu0
      %v523 = vadd.f32 0.0, %v522
      %v524 = vpop.f32.mrf.mxu0
      %v525 = vpop.f32.mrf.mxu0
      %v526 = vadd.f32 0.0, %v525
      %v527 = vpop.f32.mrf.mxu0
      %528 = vmatprep.mubr.bf16.mxu0 0
      %529 = vmatmul.mubr.bf16.gmra.mxu0 %v390
      %v530 = vpop.f32.mrf.mxu0
      %v531 = vadd.f32 0.0, %v530
      %v532 = vpop.f32.mrf.mxu0
      %v533 = vpop.f32.mrf.mxu0
      %v534 = vadd.f32 0.0, %v533
      %v535 = vpop.f32.mrf.mxu0
      %536 = vmatprep.mubr.bf16.mxu0 0
      %537 = vmatmul.mubr.bf16.gmra.mxu0 %v391
      %v538 = vpop.f32.mrf.mxu0
      %v539 = vadd.f32 0.0, %v538
      %v540 = vpop.f32.mrf.mxu0
      %v541 = vpop.f32.mrf.mxu0
      %v542 = vadd.f32 0.0, %v541
      %v543 = vpop.f32.mrf.mxu0
      %544 = vdwg.mxu0
      %v545 = vadd.f32 %v304, %v483
      %v546 = vadd.f32 %v305, %v486
      %v547 = vadd.f32 %v306, %v491
      %v548 = vadd.f32 %v307, %v494
      %v549 = vadd.f32 %v308, %v499
      %v550 = vadd.f32 %v309, %v502
      %v551 = vadd.f32 %v310, %v507
      %v552 = vadd.f32 %v311, %v510
      %v553 = vadd.f32 %v312, %v515
      %v554 = vadd.f32 %v313, %v518
      %v555 = vadd.f32 %v314, %v523
      %v556 = vadd.f32 %v315, %v526
      %v557 = vadd.f32 %v316, %v531
      %v558 = vadd.f32 %v317, %v534
      %v559 = vadd.f32 %v318, %v539
      %v560 = vadd.f32 %v319, %v542
      %561 = vst [vmem:[#allocation2] sm:$0xff] %v545
      %562 = vst [vmem:[#allocation2 + $0x8] sm:$0xff] %v546
      %563 = vst [vmem:[#allocation2 + $0x10] sm:$0xff] %v547
      %564 = vst [vmem:[#allocation2 + $0x18] sm:$0xff] %v548
      %565 = vst [vmem:[#allocation2 + $0x20] sm:$0xff] %v549
      %566 = vst [vmem:[#allocation2 + $0x28] sm:$0xff] %v550
      %567 = vst [vmem:[#allocation2 + $0x30] sm:$0xff] %v551
      %568 = vst [vmem:[#allocation2 + $0x38] sm:$0xff] %v552
      %569 = vst [vmem:[#allocation2 + $0x40] sm:$0xff] %v553
      %570 = vst [vmem:[#allocation2 + $0x48] sm:$0xff] %v554
      %571 = vst [vmem:[#allocation2 + $0x50] sm:$0xff] %v555
      %572 = vst [vmem:[#allocation2 + $0x58] sm:$0xff] %v556
      %573 = vst [vmem:[#allocation2 + $0x60] sm:$0xff] %v557
      %574 = vst [vmem:[#allocation2 + $0x68] sm:$0xff] %v558
      %575 = vst [vmem:[#allocation2 + $0x70] sm:$0xff] %v559
      %576 = vst [vmem:[#allocation2 + $0x78] sm:$0xff] %v560
      // Predicated region
      $region33: #{generator_forward.13} parent=27 // pred_check
        %p577 = pneg %p284
      $region34: #{generator_forward.13} parent=27 // pred_check_branch
        %579 = sbr.rel (%p577) target = $region36
      $region35: #{generator_forward.13} parent=27 // pred_region
        %v580 = vld [vmem:[#allocation2] sm:$0xff]
        %v581 = vld [vmem:[#allocation2 + $0x8] sm:$0xff]
        %v582 = vld [vmem:[#allocation2 + $0x10] sm:$0xff]
        %v583 = vld [vmem:[#allocation2 + $0x18] sm:$0xff]
        %v584 = vld [vmem:[#allocation2 + $0x20] sm:$0xff]
        %v585 = vld [vmem:[#allocation2 + $0x28] sm:$0xff]
        %v586 = vld [vmem:[#allocation2 + $0x30] sm:$0xff]
        %v587 = vld [vmem:[#allocation2 + $0x38] sm:$0xff]
        %v588 = vld [vmem:[#allocation2 + $0x40] sm:$0xff]
        %v589 = vld [vmem:[#allocation2 + $0x48] sm:$0xff]
        %v590 = vld [vmem:[#allocation2 + $0x50] sm:$0xff]
        %v591 = vld [vmem:[#allocation2 + $0x58] sm:$0xff]
        %v592 = vld [vmem:[#allocation2 + $0x60] sm:$0xff]
        %v593 = vld [vmem:[#allocation2 + $0x68] sm:$0xff]
        %v594 = vld [vmem:[#allocation2 + $0x70] sm:$0xff]
        %v595 = vld [vmem:[#allocation2 + $0x78] sm:$0xff]
        %v596 = vpack.c.bf16 %v581, %v580
        %v597 = vpack.c.bf16 %v583, %v582
        %v598 = vpack.c.bf16 %v585, %v584
        %v599 = vpack.c.bf16 %v587, %v586
        %v600 = vpack.c.bf16 %v589, %v588
        %v601 = vpack.c.bf16 %v591, %v590
        %v602 = vpack.c.bf16 %v593, %v592
        %v603 = vpack.c.bf16 %v595, %v594
        %v612 = vunpack.c.l.b16 %v596
        %v613 = vunpack.c.h.b16 %v596
        %v614 = vunpack.c.l.b16 %v597
        %v615 = vunpack.c.h.b16 %v597
        %v616 = vunpack.c.l.b16 %v598
        %v617 = vunpack.c.h.b16 %v598
        %v618 = vunpack.c.l.b16 %v599
        %v619 = vunpack.c.h.b16 %v599
        %v620 = vunpack.c.l.b16 %v600
        %v621 = vunpack.c.h.b16 %v600
        %v622 = vunpack.c.l.b16 %v601
        %v623 = vunpack.c.h.b16 %v601
        %v624 = vunpack.c.l.b16 %v602
        %v625 = vunpack.c.h.b16 %v602
        %v626 = vunpack.c.l.b16 %v603
        %v627 = vunpack.c.h.b16 %v603
        %v628 = vpack.c.b16 %v612, %v612
        %v629 = vpack.c.b16 %v613, %v613
        %v630 = vpack.c.b16 %v614, %v614
        %v631 = vpack.c.b16 %v615, %v615
        %v632 = vpack.c.b16 %v616, %v616
        %v633 = vpack.c.b16 %v617, %v617
        %v634 = vpack.c.b16 %v618, %v618
        %v635 = vpack.c.b16 %v619, %v619
        %v636 = vpack.c.b16 %v620, %v620
        %v637 = vpack.c.b16 %v621, %v621
        %v638 = vpack.c.b16 %v622, %v622
        %v639 = vpack.c.b16 %v623, %v623
        %v640 = vpack.c.b16 %v624, %v624
        %v641 = vpack.c.b16 %v625, %v625
        %v642 = vpack.c.b16 %v626, %v626
        %v643 = vpack.c.b16 %v627, %v627
        %660 = vst [vmem:[%s274] sm:$0xf] %v628
        %661 = vst [vmem:[%s274 + $0x4] sm:$0xf] %v629
        %662 = vst [vmem:[%s274 + $0x8] sm:$0xf] %v630
        %663 = vst [vmem:[%s274 + $0xc] sm:$0xf] %v631
        %664 = vst [vmem:[%s274 + $0x10] sm:$0xf] %v632
        %665 = vst [vmem:[%s274 + $0x14] sm:$0xf] %v633
        %666 = vst [vmem:[%s274 + $0x18] sm:$0xf] %v634
        %667 = vst [vmem:[%s274 + $0x1c] sm:$0xf] %v635
        %668 = vst [vmem:[%s274 + $0x20] sm:$0xf] %v636
        %669 = vst [vmem:[%s274 + $0x24] sm:$0xf] %v637
        %670 = vst [vmem:[%s274 + $0x28] sm:$0xf] %v638
        %671 = vst [vmem:[%s274 + $0x2c] sm:$0xf] %v639
        %672 = vst [vmem:[%s274 + $0x30] sm:$0xf] %v640
        %673 = vst [vmem:[%s274 + $0x34] sm:$0xf] %v641
        %674 = vst [vmem:[%s274 + $0x38] sm:$0xf] %v642
        %675 = vst [vmem:[%s274 + $0x3c] sm:$0xf] %v643
        %v676 = vadd.f32 %v580, %v581
        %v677 = vadd.f32 %v676, %v582
        %v678 = vadd.f32 %v677, %v583
        %v679 = vadd.f32 %v678, %v584
        %v680 = vadd.f32 %v679, %v585
        %v681 = vadd.f32 %v680, %v586
        %v682 = vadd.f32 %v681, %v587
        %v683 = vadd.f32 %v682, %v588
        %v684 = vadd.f32 %v683, %v589
        %v685 = vadd.f32 %v684, %v590
        %v686 = vadd.f32 %v685, %v591
        %v687 = vadd.f32 %v686, %v592
        %v688 = vadd.f32 %v687, %v593
        %v689 = vadd.f32 %v688, %v594
        %v690 = vadd.f32 %v689, %v595
        %v691 = vrot.slane %v690, 4
        %v692 = vadd.f32 %v690, %v691
        %v693 = vrot.slane %v692, 2
        %v694 = vadd.f32 %v692, %v693
        %v695 = vrot.slane %v694, 1
        %v696 = vadd.f32 %v694, %v695
        %v697 = vmul.f32 %v580, %v580
        %v698 = vmul.f32 %v581, %v581
        %v699 = vmul.f32 %v582, %v582
        %v700 = vmul.f32 %v583, %v583
        %v701 = vmul.f32 %v584, %v584
        %v702 = vmul.f32 %v585, %v585
        %v703 = vmul.f32 %v586, %v586
        %v704 = vmul.f32 %v587, %v587
        %v705 = vmul.f32 %v588, %v588
        %v706 = vmul.f32 %v589, %v589
        %v707 = vmul.f32 %v590, %v590
        %v708 = vmul.f32 %v591, %v591
        %v709 = vmul.f32 %v592, %v592
        %v710 = vmul.f32 %v593, %v593
        %v711 = vmul.f32 %v594, %v594
        %v712 = vmul.f32 %v595, %v595
        %v713 = vadd.f32 %v697, %v698
        %v714 = vadd.f32 %v713, %v699
        %v715 = vadd.f32 %v714, %v700
        %v716 = vadd.f32 %v715, %v701
        %v717 = vadd.f32 %v716, %v702
        %v718 = vadd.f32 %v717, %v703
        %v719 = vadd.f32 %v718, %v704
        %v720 = vadd.f32 %v719, %v705
        %v721 = vadd.f32 %v720, %v706
        %v722 = vadd.f32 %v721, %v707
        %v723 = vadd.f32 %v722, %v708
        %v724 = vadd.f32 %v723, %v709
        %v725 = vadd.f32 %v724, %v710
        %v726 = vadd.f32 %v725, %v711
        %v727 = vadd.f32 %v726, %v712
        %v728 = vrot.slane %v727, 4
        %v729 = vadd.f32 %v727, %v728
        %v730 = vrot.slane %v729, 2
        %v731 = vadd.f32 %v729, %v730
        %v732 = vrot.slane %v731, 1
        %v733 = vadd.f32 %v731, %v732
        %v734 = vlaneseq
        %v735 = vshrl.u32 %v734, 7
        %vm736 = vcmp.eq.s32.totalorder %v735, 0
        %vm737 = vcmp.eq.s32.totalorder %v735, 1
        %v738 = vsel %vm737, %v733, 0.0
        %v739 = vsel %vm736, %v696, %v738
        %740 = vst [vmem:[%s282] sm:$0xff] %v739
      $region36: #{generator_forward.13} parent=27 // pred_fallthru
        _
      %s741 = smul.u32 16, %s21
      %p742 = scmp.lt.s32.totalorder %s20, 3
      %s743 = scalar_select %p742, %s20, 3
      %p744 = scmp.lt.s32.totalorder %s741, 15
      %s745 = scalar_select %p744, %s741, 15
      %s746 = smul.addr %s743, 16
      %s747 = sadd.s32 %s745, %s746
      %s748 = smul.addr %s747, 4
      %s749 = scalar_lea.vmem %s2, %s748
      %p750 = scmp.lt.s32.totalorder %s20, 3
      %s751 = scalar_select %p750, %s20, 3
      %p752 = scmp.lt.s32.totalorder %s21, 0
      %s753 = scalar_select %p752, %s21, 0
      %s754 = sadd.s32 %s753, %s751
      %s755 = smul.addr %s754, 8
      %s756 = scalar_lea.vmem %s3, %s755
      // Predicated region
      $region37: #{generator_forward.13} parent=27 // pred_check
        %p757 = pneg %p112
      $region38: #{generator_forward.13} parent=27 // pred_check_branch
        %759 = sbr.rel (%p757) target = $region40
      $region39: #{generator_forward.13} parent=27 // pred_region
        %s760 = smul.u32 16, %s21
      $region40: #{generator_forward.13} parent=27 // pred_fallthru
        _
      // Predicated region
      $region41: #{generator_forward.13} parent=27 // pred_check
        %p761 = pneg %p140
      $region42: #{generator_forward.13} parent=27 // pred_check_branch
        %763 = sbr.rel (%p761) target = $region44
      $region43: #{generator_forward.13} parent=27 // pred_region
        _
      $region44: #{generator_forward.13} parent=27 // pred_fallthru
        _
    $region28: #{generator_forward.13} parent=5 // pred_fallthru
      _
    %p764 = scmp.le.s32.totalorder 2, %s10
    // Predicated region
    $region45: #{generator_forward.13} parent=5 // pred_check
      %p765 = pneg %p764
    $region46: #{generator_forward.13} parent=5 // pred_check_branch
      %767 = sbr.rel (%p765) target = $region48
    $region47: #{generator_forward.13} parent=5 // pred_region
      %s768 = ssub.s32 %s10, 2
      // Predicated region
      $region49: #{generator_forward.13} parent=47 // pred_check
        %p769 = pneg %p118
      $region50: #{generator_forward.13} parent=47 // pred_check_branch
        %771 = sbr.rel (%p769) target = $region52
      $region51: #{generator_forward.13} parent=47 // pred_region
        %s772 = smul.u32 16, %s24
        %p773 = scmp.lt.s32.totalorder %s23, 3
        %s774 = scalar_select %p773, %s23, 3
        %p775 = scmp.lt.s32.totalorder %s772, 15
        %s776 = scalar_select %p775, %s772, 15
        %s777 = smul.addr %s774, 16
        %s778 = sadd.s32 %s776, %s777
        %s779 = smul.addr %s778, 4
        %s780 = scalar_lea.vmem %s2, %s779
      $region52: #{generator_forward.13} parent=47 // pred_fallthru
        _
      // Predicated region
      $region53: #{generator_forward.13} parent=47 // pred_check
        %p781 = pneg %p146
      $region54: #{generator_forward.13} parent=47 // pred_check_branch
        %783 = sbr.rel (%p781) target = $region56
      $region55: #{generator_forward.13} parent=47 // pred_region
        %p784 = scmp.lt.s32.totalorder %s23, 3
        %s785 = scalar_select %p784, %s23, 3
        %p786 = scmp.lt.s32.totalorder %s24, 0
        %s787 = scalar_select %p786, %s24, 0
        %s788 = sadd.s32 %s787, %s785
        %s789 = smul.addr %s788, 8
        %s790 = scalar_lea.vmem %s3, %s789
      $region56: #{generator_forward.13} parent=47 // pred_fallthru
        _
    $region48: #{generator_forward.13} parent=5 // pred_fallthru
      _
  $region6: #{generator_forward.13} parent=0 // loop_footer
    %s14 = sadd.s32 1, %s10
  $region7: #{generator_forward.13} parent=0 // loop_footer_branch
    %9 = sbr.rel target = $region3
  $region8: #{generator_forward.13} parent=0 // loop_exit
    _

// kernel: generator_forward.14
$region0: #{generator_forward.14}
  #allocation0 [shape = 'u32[]', space=smem, size = 0x4, offset = 0x4, fixed_abs, tag = 'smem constant byte address 0x4 - core index']
  #allocation1 [shape = 'u32[144,128]{1,0:T(1,128)}', space=vmem, size = 0x12000, scoped, tag = 'internal scratch']
  %s0 = inlined_call_operand.vmem [shape: bf16[512,128], index: 0, kind: input, shape index: {}]
  %s1 = inlined_call_operand.vmem [shape: f32[1,128], index: 1, kind: input, shape index: {}]
  %s2 = inlined_call_operand.vmem [shape: f32[1,128], index: 2, kind: input, shape index: {}]
  %s3 = inlined_call_operand.vmem [shape: bf16[512,128], index: 3, kind: output, shape index: {}]
  %s4 = sld [smem:[#allocation0]]
  $region22: #{generator_forward.14} parent=0
    _
  %s6 = ssub.s32 1, %s4
  %s7 = scalar_select 0, %s6, %s4
  // Predicated region
  $region2: #{generator_forward.14} parent=0 // pred_check
    _
  $region3: #{generator_forward.14} parent=0 // pred_check_branch
    %9 = sbr.rel (0) target = $region5
  $region4: #{generator_forward.14} parent=0 // pred_region
    _
  $region5: #{generator_forward.14} parent=0 // pred_fallthru
    _
  // Predicated region
  $region6: #{generator_forward.14} parent=0 // pred_check
    _
  $region7: #{generator_forward.14} parent=0 // pred_check_branch
    %11 = sbr.rel (0) target = $region9
  $region8: #{generator_forward.14} parent=0 // pred_region
    _
  $region9: #{generator_forward.14} parent=0 // pred_fallthru
    _
  // Predicated region
  $region10: #{generator_forward.14} parent=0 // pred_check
    _
  $region11: #{generator_forward.14} parent=0 // pred_check_branch
    %13 = sbr.rel (0) target = $region13
  $region12: #{generator_forward.14} parent=0 // pred_region
    _
  $region13: #{generator_forward.14} parent=0 // pred_fallthru
    _
  %v14 = vld [vmem:[%s0] sm:$0xf]
  %v15 = vld [vmem:[%s0 + $0x4] sm:$0xf]
  %v16 = vld [vmem:[%s0 + $0x8] sm:$0xf]
  %v17 = vld [vmem:[%s0 + $0xc] sm:$0xf]
  %v18 = vld [vmem:[%s0 + $0x10] sm:$0xf]
  %v19 = vld [vmem:[%s0 + $0x14] sm:$0xf]
  %v20 = vld [vmem:[%s0 + $0x18] sm:$0xf]
  %v21 = vld [vmem:[%s0 + $0x1c] sm:$0xf]
  %v22 = vld [vmem:[%s0 + $0x20] sm:$0xf]
  %v23 = vld [vmem:[%s0 + $0x24] sm:$0xf]
  %v24 = vld [vmem:[%s0 + $0x28] sm:$0xf]
  %v25 = vld [vmem:[%s0 + $0x2c] sm:$0xf]
  %v26 = vld [vmem:[%s0 + $0x30] sm:$0xf]
  %v27 = vld [vmem:[%s0 + $0x34] sm:$0xf]
  %v28 = vld [vmem:[%s0 + $0x38] sm:$0xf]
  %v29 = vld [vmem:[%s0 + $0x3c] sm:$0xf]
  %v30 = vld [vmem:[%s0 + $0x40] sm:$0xf]
  %v31 = vld [vmem:[%s0 + $0x44] sm:$0xf]
  %v32 = vld [vmem:[%s0 + $0x48] sm:$0xf]
  %v33 = vld [vmem:[%s0 + $0x4c] sm:$0xf]
  %v34 = vld [vmem:[%s0 + $0x50] sm:$0xf]
  %v35 = vld [vmem:[%s0 + $0x54] sm:$0xf]
  %v36 = vld [vmem:[%s0 + $0x58] sm:$0xf]
  %v37 = vld [vmem:[%s0 + $0x5c] sm:$0xf]
  %v38 = vld [vmem:[%s0 + $0x60] sm:$0xf]
  %v39 = vld [vmem:[%s0 + $0x64] sm:$0xf]
  %v40 = vld [vmem:[%s0 + $0x68] sm:$0xf]
  %v41 = vld [vmem:[%s0 + $0x6c] sm:$0xf]
  %v42 = vld [vmem:[%s0 + $0x70] sm:$0xf]
  %v43 = vld [vmem:[%s0 + $0x74] sm:$0xf]
  %v44 = vld [vmem:[%s0 + $0x78] sm:$0xf]
  %v45 = vld [vmem:[%s0 + $0x7c] sm:$0xf]
  %v46 = vld [vmem:[%s0 + $0x80] sm:$0xf]
  %v47 = vld [vmem:[%s0 + $0x84] sm:$0xf]
  %v48 = vld [vmem:[%s0 + $0x88] sm:$0xf]
  %v49 = vld [vmem:[%s0 + $0x8c] sm:$0xf]
  %v50 = vld [vmem:[%s0 + $0x90] sm:$0xf]
  %v51 = vld [vmem:[%s0 + $0x94] sm:$0xf]
  %v52 = vld [vmem:[%s0 + $0x98] sm:$0xf]
  %v53 = vld [vmem:[%s0 + $0x9c] sm:$0xf]
  %v54 = vld [vmem:[%s0 + $0xa0] sm:$0xf]
  %v55 = vld [vmem:[%s0 + $0xa4] sm:$0xf]
  %v56 = vld [vmem:[%s0 + $0xa8] sm:$0xf]
  %v57 = vld [vmem:[%s0 + $0xac] sm:$0xf]
  %v58 = vld [vmem:[%s0 + $0xb0] sm:$0xf]
  %v59 = vld [vmem:[%s0 + $0xb4] sm:$0xf]
  %v60 = vld [vmem:[%s0 + $0xb8] sm:$0xf]
  %v61 = vld [vmem:[%s0 + $0xbc] sm:$0xf]
  %v62 = vld [vmem:[%s0 + $0xc0] sm:$0xf]
  %v63 = vld [vmem:[%s0 + $0xc4] sm:$0xf]
  %v64 = vld [vmem:[%s0 + $0xc8] sm:$0xf]
  %v65 = vld [vmem:[%s0 + $0xcc] sm:$0xf]
  %v66 = vld [vmem:[%s0 + $0xd0] sm:$0xf]
  %v67 = vld [vmem:[%s0 + $0xd4] sm:$0xf]
  %v68 = vld [vmem:[%s0 + $0xd8] sm:$0xf]
  %v69 = vld [vmem:[%s0 + $0xdc] sm:$0xf]
  %v70 = vld [vmem:[%s0 + $0xe0] sm:$0xf]
  %v71 = vld [vmem:[%s0 + $0xe4] sm:$0xf]
  %v72 = vld [vmem:[%s0 + $0xe8] sm:$0xf]
  %v73 = vld [vmem:[%s0 + $0xec] sm:$0xf]
  %v74 = vld [vmem:[%s0 + $0xf0] sm:$0xf]
  %v75 = vld [vmem:[%s0 + $0xf4] sm:$0xf]
  %v76 = vld [vmem:[%s0 + $0xf8] sm:$0xf]
  %v77 = vld [vmem:[%s0 + $0xfc] sm:$0xf]
  %v78 = vunpack.c.l.bf16 %v14
  %v79 = vunpack.c.l.bf16 %v15
  %v80 = vunpack.c.l.bf16 %v16
  %v81 = vunpack.c.l.bf16 %v17
  %v82 = vunpack.c.l.bf16 %v18
  %v83 = vunpack.c.l.bf16 %v19
  %v84 = vunpack.c.l.bf16 %v20
  %v85 = vunpack.c.l.bf16 %v21
  %v86 = vunpack.c.l.bf16 %v22
  %v87 = vunpack.c.l.bf16 %v23
  %v88 = vunpack.c.l.bf16 %v24
  %v89 = vunpack.c.l.bf16 %v25
  %v90 = vunpack.c.l.bf16 %v26
  %v91 = vunpack.c.l.bf16 %v27
  %v92 = vunpack.c.l.bf16 %v28
  %v93 = vunpack.c.l.bf16 %v29
  %v94 = vunpack.c.l.bf16 %v30
  %v95 = vunpack.c.l.bf16 %v31
  %v96 = vunpack.c.l.bf16 %v32
  %v97 = vunpack.c.l.bf16 %v33
  %v98 = vunpack.c.l.bf16 %v34
  %v99 = vunpack.c.l.bf16 %v35
  %v100 = vunpack.c.l.bf16 %v36
  %v101 = vunpack.c.l.bf16 %v37
  %v102 = vunpack.c.l.bf16 %v38
  %v103 = vunpack.c.l.bf16 %v39
  %v104 = vunpack.c.l.bf16 %v40
  %v105 = vunpack.c.l.bf16 %v41
  %v106 = vunpack.c.l.bf16 %v42
  %v107 = vunpack.c.l.bf16 %v43
  %v108 = vunpack.c.l.bf16 %v44
  %v109 = vunpack.c.l.bf16 %v45
  %v110 = vunpack.c.l.bf16 %v46
  %v111 = vunpack.c.l.bf16 %v47
  %v112 = vunpack.c.l.bf16 %v48
  %v113 = vunpack.c.l.bf16 %v49
  %v114 = vunpack.c.l.bf16 %v50
  %v115 = vunpack.c.l.bf16 %v51
  %v116 = vunpack.c.l.bf16 %v52
  %v117 = vunpack.c.l.bf16 %v53
  %v118 = vunpack.c.l.bf16 %v54
  %v119 = vunpack.c.l.bf16 %v55
  %v120 = vunpack.c.l.bf16 %v56
  %v121 = vunpack.c.l.bf16 %v57
  %v122 = vunpack.c.l.bf16 %v58
  %v123 = vunpack.c.l.bf16 %v59
  %v124 = vunpack.c.l.bf16 %v60
  %v125 = vunpack.c.l.bf16 %v61
  %v126 = vunpack.c.l.bf16 %v62
  %v127 = vunpack.c.l.bf16 %v63
  %v128 = vunpack.c.l.bf16 %v64
  %v129 = vunpack.c.l.bf16 %v65
  %v130 = vunpack.c.l.bf16 %v66
  %v131 = vunpack.c.l.bf16 %v67
  %v132 = vunpack.c.l.bf16 %v68
  %v133 = vunpack.c.l.bf16 %v69
  %v134 = vunpack.c.l.bf16 %v70
  %v135 = vunpack.c.l.bf16 %v71
  %v136 = vunpack.c.l.bf16 %v72
  %v137 = vunpack.c.l.bf16 %v73
  %v138 = vunpack.c.l.bf16 %v74
  %v139 = vunpack.c.l.bf16 %v75
  %v140 = vunpack.c.l.bf16 %v76
  %v141 = vunpack.c.l.bf16 %v77
  %v142 = vld [vmem:[%s1] sm:$0x1]
  %v144 = vlaneseq
  %v145 = vshrl.u32 %v144, 7
  %v146 = vsub.s32 0, %v145
  %v147 = vrot.slane %v142, %v146
  %v149 = vmul.f32 %v78, %v147
  %v150 = vmul.f32 %v79, %v147
  %v151 = vmul.f32 %v80, %v147
  %v152 = vmul.f32 %v81, %v147
  %v153 = vmul.f32 %v82, %v147
  %v154 = vmul.f32 %v83, %v147
  %v155 = vmul.f32 %v84, %v147
  %v156 = vmul.f32 %v85, %v147
  %v157 = vmul.f32 %v86, %v147
  %v158 = vmul.f32 %v87, %v147
  %v159 = vmul.f32 %v88, %v147
  %v160 = vmul.f32 %v89, %v147
  %v161 = vmul.f32 %v90, %v147
  %v162 = vmul.f32 %v91, %v147
  %v163 = vmul.f32 %v92, %v147
  %v164 = vmul.f32 %v93, %v147
  %v165 = vmul.f32 %v94, %v147
  %v166 = vmul.f32 %v95, %v147
  %v167 = vmul.f32 %v96, %v147
  %v168 = vmul.f32 %v97, %v147
  %v169 = vmul.f32 %v98, %v147
  %v170 = vmul.f32 %v99, %v147
  %v171 = vmul.f32 %v100, %v147
  %v172 = vmul.f32 %v101, %v147
  %v173 = vmul.f32 %v102, %v147
  %v174 = vmul.f32 %v103, %v147
  %v175 = vmul.f32 %v104, %v147
  %v176 = vmul.f32 %v105, %v147
  %v177 = vmul.f32 %v106, %v147
  %v178 = vmul.f32 %v107, %v147
  %v179 = vmul.f32 %v108, %v147
  %v180 = vmul.f32 %v109, %v147
  %v181 = vmul.f32 %v110, %v147
  %v182 = vmul.f32 %v111, %v147
  %v183 = vmul.f32 %v112, %v147
  %v184 = vmul.f32 %v113, %v147
  %v185 = vmul.f32 %v114, %v147
  %v186 = vmul.f32 %v115, %v147
  %v187 = vmul.f32 %v116, %v147
  %v188 = vmul.f32 %v117, %v147
  %v189 = vmul.f32 %v118, %v147
  %v190 = vmul.f32 %v119, %v147
  %v191 = vmul.f32 %v120, %v147
  %v192 = vmul.f32 %v121, %v147
  %v193 = vmul.f32 %v122, %v147
  %v194 = vmul.f32 %v123, %v147
  %v195 = vmul.f32 %v124, %v147
  %v196 = vmul.f32 %v125, %v147
  %v197 = vmul.f32 %v126, %v147
  %v198 = vmul.f32 %v127, %v147
  %v199 = vmul.f32 %v128, %v147
  %v200 = vmul.f32 %v129, %v147
  %v201 = vmul.f32 %v130, %v147
  %v202 = vmul.f32 %v131, %v147
  %v203 = vmul.f32 %v132, %v147
  %v204 = vmul.f32 %v133, %v147
  %v205 = vmul.f32 %v134, %v147
  %v206 = vmul.f32 %v135, %v147
  %v207 = vmul.f32 %v136, %v147
  %v208 = vmul.f32 %v137, %v147
  %v209 = vmul.f32 %v138, %v147
  %v210 = vmul.f32 %v139, %v147
  %v211 = vmul.f32 %v140, %v147
  %v212 = vmul.f32 %v141, %v147
  %v213 = vld [vmem:[%s2] sm:$0x1]
  %v215 = vlaneseq
  %v216 = vshrl.u32 %v215, 7
  %v217 = vsub.s32 0, %v216
  %v218 = vrot.slane %v213, %v217
  %v220 = vadd.f32 %v149, %v218
  %v221 = vadd.f32 %v150, %v218
  %v222 = vadd.f32 %v151, %v218
  %v223 = vadd.f32 %v152, %v218
  %v224 = vadd.f32 %v153, %v218
  %v225 = vadd.f32 %v154, %v218
  %v226 = vadd.f32 %v155, %v218
  %v227 = vadd.f32 %v156, %v218
  %v228 = vadd.f32 %v157, %v218
  %v229 = vadd.f32 %v158, %v218
  %v230 = vadd.f32 %v159, %v218
  %v231 = vadd.f32 %v160, %v218
  %v232 = vadd.f32 %v161, %v218
  %v233 = vadd.f32 %v162, %v218
  %v234 = vadd.f32 %v163, %v218
  %v235 = vadd.f32 %v164, %v218
  %v236 = vadd.f32 %v165, %v218
  %v237 = vadd.f32 %v166, %v218
  %v238 = vadd.f32 %v167, %v218
  %v239 = vadd.f32 %v168, %v218
  %v240 = vadd.f32 %v169, %v218
  %v241 = vadd.f32 %v170, %v218
  %v242 = vadd.f32 %v171, %v218
  %v243 = vadd.f32 %v172, %v218
  %v244 = vadd.f32 %v173, %v218
  %v245 = vadd.f32 %v174, %v218
  %v246 = vadd.f32 %v175, %v218
  %v247 = vadd.f32 %v176, %v218
  %v248 = vadd.f32 %v177, %v218
  %v249 = vadd.f32 %v178, %v218
  %v250 = vadd.f32 %v179, %v218
  %v251 = vadd.f32 %v180, %v218
  %v252 = vadd.f32 %v181, %v218
  %v253 = vadd.f32 %v182, %v218
  %v254 = vadd.f32 %v183, %v218
  %v255 = vadd.f32 %v184, %v218
  %v256 = vadd.f32 %v185, %v218
  %v257 = vadd.f32 %v186, %v218
  %v258 = vadd.f32 %v187, %v218
  %v259 = vadd.f32 %v188, %v218
  %v260 = vadd.f32 %v189, %v218
  %v261 = vadd.f32 %v190, %v218
  %v262 = vadd.f32 %v191, %v218
  %v263 = vadd.f32 %v192, %v218
  %v264 = vadd.f32 %v193, %v218
  %v265 = vadd.f32 %v194, %v218
  %v266 = vadd.f32 %v195, %v218
  %v267 = vadd.f32 %v196, %v218
  %v268 = vadd.f32 %v197, %v218
  %v269 = vadd.f32 %v198, %v218
  %v270 = vadd.f32 %v199, %v218
  %v271 = vadd.f32 %v200, %v218
  %v272 = vadd.f32 %v201, %v218
  %v273 = vadd.f32 %v202, %v218
  %v274 = vadd.f32 %v203, %v218
  %v275 = vadd.f32 %v204, %v218
  %v276 = vadd.f32 %v205, %v218
  %v277 = vadd.f32 %v206, %v218
  %v278 = vadd.f32 %v207, %v218
  %v279 = vadd.f32 %v208, %v218
  %v280 = vadd.f32 %v209, %v218
  %v281 = vadd.f32 %v210, %v218
  %v282 = vadd.f32 %v211, %v218
  %v283 = vadd.f32 %v212, %v218
  %v284 = vmax.f32 %v220, 0.0
  %v285 = vmax.f32 %v221, 0.0
  %v286 = vmax.f32 %v222, 0.0
  %v287 = vmax.f32 %v223, 0.0
  %v288 = vmax.f32 %v224, 0.0
  %v289 = vmax.f32 %v225, 0.0
  %v290 = vmax.f32 %v226, 0.0
  %v291 = vmax.f32 %v227, 0.0
  %v292 = vmax.f32 %v228, 0.0
  %v293 = vmax.f32 %v229, 0.0
  %v294 = vmax.f32 %v230, 0.0
  %v295 = vmax.f32 %v231, 0.0
  %v296 = vmax.f32 %v232, 0.0
  %v297 = vmax.f32 %v233, 0.0
  %v298 = vmax.f32 %v234, 0.0
  %v299 = vmax.f32 %v235, 0.0
  %v300 = vmax.f32 %v236, 0.0
  %v301 = vmax.f32 %v237, 0.0
  %v302 = vmax.f32 %v238, 0.0
  %v303 = vmax.f32 %v239, 0.0
  %v304 = vmax.f32 %v240, 0.0
  %v305 = vmax.f32 %v241, 0.0
  %v306 = vmax.f32 %v242, 0.0
  %v307 = vmax.f32 %v243, 0.0
  %v308 = vmax.f32 %v244, 0.0
  %v309 = vmax.f32 %v245, 0.0
  %v310 = vmax.f32 %v246, 0.0
  %v311 = vmax.f32 %v247, 0.0
  %v312 = vmax.f32 %v248, 0.0
  %v313 = vmax.f32 %v249, 0.0
  %v314 = vmax.f32 %v250, 0.0
  %v315 = vmax.f32 %v251, 0.0
  %v316 = vmax.f32 %v252, 0.0
  %v317 = vmax.f32 %v253, 0.0
  %v318 = vmax.f32 %v254, 0.0
  %v319 = vmax.f32 %v255, 0.0
  %v320 = vmax.f32 %v256, 0.0
  %v321 = vmax.f32 %v257, 0.0
  %v322 = vmax.f32 %v258, 0.0
  %v323 = vmax.f32 %v259, 0.0
  %v324 = vmax.f32 %v260, 0.0
  %v325 = vmax.f32 %v261, 0.0
  %v326 = vmax.f32 %v262, 0.0
  %v327 = vmax.f32 %v263, 0.0
  %v328 = vmax.f32 %v264, 0.0
  %v329 = vmax.f32 %v265, 0.0
  %v330 = vmax.f32 %v266, 0.0
  %v331 = vmax.f32 %v267, 0.0
  %v332 = vmax.f32 %v268, 0.0
  %v333 = vmax.f32 %v269, 0.0
  %v334 = vmax.f32 %v270, 0.0
  %v335 = vmax.f32 %v271, 0.0
  %v336 = vmax.f32 %v272, 0.0
  %v337 = vmax.f32 %v273, 0.0
  %v338 = vmax.f32 %v274, 0.0
  %v339 = vmax.f32 %v275, 0.0
  %v340 = vmax.f32 %v276, 0.0
  %v341 = vmax.f32 %v277, 0.0
  %v342 = vmax.f32 %v278, 0.0
  %v343 = vmax.f32 %v279, 0.0
  %v344 = vmax.f32 %v280, 0.0
  %v345 = vmax.f32 %v281, 0.0
  %v346 = vmax.f32 %v282, 0.0
  %v347 = vmax.f32 %v283, 0.0
  %v348 = vpack.c.bf16 %v285, %v284
  %v349 = vpack.c.bf16 %v287, %v286
  %v350 = vpack.c.bf16 %v289, %v288
  %v351 = vpack.c.bf16 %v291, %v290
  %v352 = vpack.c.bf16 %v293, %v292
  %v353 = vpack.c.bf16 %v295, %v294
  %v354 = vpack.c.bf16 %v297, %v296
  %v355 = vpack.c.bf16 %v299, %v298
  %v356 = vpack.c.bf16 %v301, %v300
  %v357 = vpack.c.bf16 %v303, %v302
  %v358 = vpack.c.bf16 %v305, %v304
  %v359 = vpack.c.bf16 %v307, %v306
  %v360 = vpack.c.bf16 %v309, %v308
  %v361 = vpack.c.bf16 %v311, %v310
  %v362 = vpack.c.bf16 %v313, %v312
  %v363 = vpack.c.bf16 %v315, %v314
  %v364 = vpack.c.bf16 %v317, %v316
  %v365 = vpack.c.bf16 %v319, %v318
  %v366 = vpack.c.bf16 %v321, %v320
  %v367 = vpack.c.bf16 %v323, %v322
  %v368 = vpack.c.bf16 %v325, %v324
  %v369 = vpack.c.bf16 %v327, %v326
  %v370 = vpack.c.bf16 %v329, %v328
  %v371 = vpack.c.bf16 %v331, %v330
  %v372 = vpack.c.bf16 %v333, %v332
  %v373 = vpack.c.bf16 %v335, %v334
  %v374 = vpack.c.bf16 %v337, %v336
  %v375 = vpack.c.bf16 %v339, %v338
  %v376 = vpack.c.bf16 %v341, %v340
  %v377 = vpack.c.bf16 %v343, %v342
  %v378 = vpack.c.bf16 %v345, %v344
  %v379 = vpack.c.bf16 %v347, %v346
  %v412 = vunpack.c.l.b16 %v348
  %v413 = vunpack.c.h.b16 %v348
  %v414 = vunpack.c.l.b16 %v349
  %v415 = vunpack.c.h.b16 %v349
  %v416 = vunpack.c.l.b16 %v350
  %v417 = vunpack.c.h.b16 %v350
  %v418 = vunpack.c.l.b16 %v351
  %v419 = vunpack.c.h.b16 %v351
  %v420 = vunpack.c.l.b16 %v352
  %v421 = vunpack.c.h.b16 %v352
  %v422 = vunpack.c.l.b16 %v353
  %v423 = vunpack.c.h.b16 %v353
  %v424 = vunpack.c.l.b16 %v354
  %v425 = vunpack.c.h.b16 %v354
  %v426 = vunpack.c.l.b16 %v355
  %v427 = vunpack.c.h.b16 %v355
  %v428 = vunpack.c.l.b16 %v356
  %v429 = vunpack.c.h.b16 %v356
  %v430 = vunpack.c.l.b16 %v357
  %v431 = vunpack.c.h.b16 %v357
  %v432 = vunpack.c.l.b16 %v358
  %v433 = vunpack.c.h.b16 %v358
  %v434 = vunpack.c.l.b16 %v359
  %v435 = vunpack.c.h.b16 %v359
  %v436 = vunpack.c.l.b16 %v360
  %v437 = vunpack.c.h.b16 %v360
  %v438 = vunpack.c.l.b16 %v361
  %v439 = vunpack.c.h.b16 %v361
  %v440 = vunpack.c.l.b16 %v362
  %v441 = vunpack.c.h.b16 %v362
  %v442 = vunpack.c.l.b16 %v363
  %v443 = vunpack.c.h.b16 %v363
  %v444 = vunpack.c.l.b16 %v364
  %v445 = vunpack.c.h.b16 %v364
  %v446 = vunpack.c.l.b16 %v365
  %v447 = vunpack.c.h.b16 %v365
  %v448 = vunpack.c.l.b16 %v366
  %v449 = vunpack.c.h.b16 %v366
  %v450 = vunpack.c.l.b16 %v367
  %v451 = vunpack.c.h.b16 %v367
  %v452 = vunpack.c.l.b16 %v368
  %v453 = vunpack.c.h.b16 %v368
  %v454 = vunpack.c.l.b16 %v369
  %v455 = vunpack.c.h.b16 %v369
  %v456 = vunpack.c.l.b16 %v370
  %v457 = vunpack.c.h.b16 %v370
  %v458 = vunpack.c.l.b16 %v371
  %v459 = vunpack.c.h.b16 %v371
  %v460 = vunpack.c.l.b16 %v372
  %v461 = vunpack.c.h.b16 %v372
  %v462 = vunpack.c.l.b16 %v373
  %v463 = vunpack.c.h.b16 %v373
  %v464 = vunpack.c.l.b16 %v374
  %v465 = vunpack.c.h.b16 %v374
  %v466 = vunpack.c.l.b16 %v375
  %v467 = vunpack.c.h.b16 %v375
  %v468 = vunpack.c.l.b16 %v376
  %v469 = vunpack.c.h.b16 %v376
  %v470 = vunpack.c.l.b16 %v377
  %v471 = vunpack.c.h.b16 %v377
  %v472 = vunpack.c.l.b16 %v378
  %v473 = vunpack.c.h.b16 %v378
  %v474 = vunpack.c.l.b16 %v379
  %v475 = vunpack.c.h.b16 %v379
  %v476 = vpack.c.b16 %v412, %v412
  %v477 = vpack.c.b16 %v413, %v413
  %v478 = vpack.c.b16 %v414, %v414
  %v479 = vpack.c.b16 %v415, %v415
  %v480 = vpack.c.b16 %v416, %v416
  %v481 = vpack.c.b16 %v417, %v417
  %v482 = vpack.c.b16 %v418, %v418
  %v483 = vpack.c.b16 %v419, %v419
  %v484 = vpack.c.b16 %v420, %v420
  %v485 = vpack.c.b16 %v421, %v421
  %v486 = vpack.c.b16 %v422, %v422
  %v487 = vpack.c.b16 %v423, %v423
  %v488 = vpack.c.b16 %v424, %v424
  %v489 = vpack.c.b16 %v425, %v425
  %v490 = vpack.c.b16 %v426, %v426
  %v491 = vpack.c.b16 %v427, %v427
  %v492 = vpack.c.b16 %v428, %v428
  %v493 = vpack.c.b16 %v429, %v429
  %v494 = vpack.c.b16 %v430, %v430
  %v495 = vpack.c.b16 %v431, %v431
  %v496 = vpack.c.b16 %v432, %v432
  %v497 = vpack.c.b16 %v433, %v433
  %v498 = vpack.c.b16 %v434, %v434
  %v499 = vpack.c.b16 %v435, %v435
  %v500 = vpack.c.b16 %v436, %v436
  %v501 = vpack.c.b16 %v437, %v437
  %v502 = vpack.c.b16 %v438, %v438
  %v503 = vpack.c.b16 %v439, %v439
  %v504 = vpack.c.b16 %v440, %v440
  %v505 = vpack.c.b16 %v441, %v441
  %v506 = vpack.c.b16 %v442, %v442
  %v507 = vpack.c.b16 %v443, %v443
  %v508 = vpack.c.b16 %v444, %v444
  %v509 = vpack.c.b16 %v445, %v445
  %v510 = vpack.c.b16 %v446, %v446
  %v511 = vpack.c.b16 %v447, %v447
  %v512 = vpack.c.b16 %v448, %v448
  %v513 = vpack.c.b16 %v449, %v449
  %v514 = vpack.c.b16 %v450, %v450
  %v515 = vpack.c.b16 %v451, %v451
  %v516 = vpack.c.b16 %v452, %v452
  %v517 = vpack.c.b16 %v453, %v453
  %v518 = vpack.c.b16 %v454, %v454
  %v519 = vpack.c.b16 %v455, %v455
  %v520 = vpack.c.b16 %v456, %v456
  %v521 = vpack.c.b16 %v457, %v457
  %v522 = vpack.c.b16 %v458, %v458
  %v523 = vpack.c.b16 %v459, %v459
  %v524 = vpack.c.b16 %v460, %v460
  %v525 = vpack.c.b16 %v461, %v461
  %v526 = vpack.c.b16 %v462, %v462
  %v527 = vpack.c.b16 %v463, %v463
  %v528 = vpack.c.b16 %v464, %v464
  %v529 = vpack.c.b16 %v465, %v465
  %v530 = vpack.c.b16 %v466, %v466
  %v531 = vpack.c.b16 %v467, %v467
  %v532 = vpack.c.b16 %v468, %v468
  %v533 = vpack.c.b16 %v469, %v469
  %v534 = vpack.c.b16 %v470, %v470
  %v535 = vpack.c.b16 %v471, %v471
  %v536 = vpack.c.b16 %v472, %v472
  %v537 = vpack.c.b16 %v473, %v473
  %v538 = vpack.c.b16 %v474, %v474
  %v539 = vpack.c.b16 %v475, %v475
  %604 = vst [vmem:[%s3] sm:$0xf] %v476
  %605 = vst [vmem:[%s3 + $0x4] sm:$0xf] %v477
  %606 = vst [vmem:[%s3 + $0x8] sm:$0xf] %v478
  %607 = vst [vmem:[%s3 + $0xc] sm:$0xf] %v479
  %608 = vst [vmem:[%s3 + $0x10] sm:$0xf] %v480
  %609 = vst [vmem:[%s3 + $0x14] sm:$0xf] %v481
  %610 = vst [vmem:[%s3 + $0x18] sm:$0xf] %v482
  %611 = vst [vmem:[%s3 + $0x1c] sm:$0xf] %v483
  %612 = vst [vmem:[%s3 + $0x20] sm:$0xf] %v484
  %613 = vst [vmem:[%s3 + $0x24] sm:$0xf] %v485
  %614 = vst [vmem:[%s3 + $0x28] sm:$0xf] %v486
  %615 = vst [vmem:[%s3 + $0x2c] sm:$0xf] %v487
  %616 = vst [vmem:[%s3 + $0x30] sm:$0xf] %v488
  %617 = vst [vmem:[%s3 + $0x34] sm:$0xf] %v489
  %618 = vst [vmem:[%s3 + $0x38] sm:$0xf] %v490
  %619 = vst [vmem:[%s3 + $0x3c] sm:$0xf] %v491
  %620 = vst [vmem:[%s3 + $0x40] sm:$0xf] %v492
  %621 = vst [vmem:[%s3 + $0x44] sm:$0xf] %v493
  %622 = vst [vmem:[%s3 + $0x48] sm:$0xf] %v494
  %623 = vst [vmem:[%s3 + $0x4c] sm:$0xf] %v495
  %624 = vst [vmem:[%s3 + $0x50] sm:$0xf] %v496
  %625 = vst [vmem:[%s3 + $0x54] sm:$0xf] %v497
  %626 = vst [vmem:[%s3 + $0x58] sm:$0xf] %v498
  %627 = vst [vmem:[%s3 + $0x5c] sm:$0xf] %v499
  %628 = vst [vmem:[%s3 + $0x60] sm:$0xf] %v500
  %629 = vst [vmem:[%s3 + $0x64] sm:$0xf] %v501
  %630 = vst [vmem:[%s3 + $0x68] sm:$0xf] %v502
  %631 = vst [vmem:[%s3 + $0x6c] sm:$0xf] %v503
  %632 = vst [vmem:[%s3 + $0x70] sm:$0xf] %v504
  %633 = vst [vmem:[%s3 + $0x74] sm:$0xf] %v505
  %634 = vst [vmem:[%s3 + $0x78] sm:$0xf] %v506
  %635 = vst [vmem:[%s3 + $0x7c] sm:$0xf] %v507
  %636 = vst [vmem:[%s3 + $0x80] sm:$0xf] %v508
  %637 = vst [vmem:[%s3 + $0x84] sm:$0xf] %v509
  %638 = vst [vmem:[%s3 + $0x88] sm:$0xf] %v510
  %639 = vst [vmem:[%s3 + $0x8c] sm:$0xf] %v511
  %640 = vst [vmem:[%s3 + $0x90] sm:$0xf] %v512
  %641 = vst [vmem:[%s3 + $0x94] sm:$0xf] %v513
  %642 = vst [vmem:[%s3 + $0x98] sm:$0xf] %v514
  %643 = vst [vmem:[%s3 + $0x9c] sm:$0xf] %v515
  %644 = vst [vmem:[%s3 + $0xa0] sm:$0xf] %v516
  %645 = vst [vmem:[%s3 + $0xa4] sm:$0xf] %v517
  %646 = vst [vmem:[%s3 + $0xa8] sm:$0xf] %v518
  %647 = vst [vmem:[%s3 + $0xac] sm:$0xf] %v519
  %648 = vst [vmem:[%s3 + $0xb0] sm:$0xf] %v520
  %649 = vst [vmem:[%s3 + $0xb4] sm:$0xf] %v521
  %650 = vst [vmem:[%s3 + $0xb8] sm:$0xf] %v522
  %651 = vst [vmem:[%s3 + $0xbc] sm:$0xf] %v523
  %652 = vst [vmem:[%s3 + $0xc0] sm:$0xf] %v524
  %653 = vst [vmem:[%s3 + $0xc4] sm:$0xf] %v525
  %654 = vst [vmem:[%s3 + $0xc8] sm:$0xf] %v526
  %655 = vst [vmem:[%s3 + $0xcc] sm:$0xf] %v527
  %656 = vst [vmem:[%s3 + $0xd0] sm:$0xf] %v528
  %657 = vst [vmem:[%s3 + $0xd4] sm:$0xf] %v529
  %658 = vst [vmem:[%s3 + $0xd8] sm:$0xf] %v530
  %659 = vst [vmem:[%s3 + $0xdc] sm:$0xf] %v531
  %660 = vst [vmem:[%s3 + $0xe0] sm:$0xf] %v532
  %661 = vst [vmem:[%s3 + $0xe4] sm:$0xf] %v533
  %662 = vst [vmem:[%s3 + $0xe8] sm:$0xf] %v534
  %663 = vst [vmem:[%s3 + $0xec] sm:$0xf] %v535
  %664 = vst [vmem:[%s3 + $0xf0] sm:$0xf] %v536
  %665 = vst [vmem:[%s3 + $0xf4] sm:$0xf] %v537
  %666 = vst [vmem:[%s3 + $0xf8] sm:$0xf] %v538
  %667 = vst [vmem:[%s3 + $0xfc] sm:$0xf] %v539
  // Predicated region
  $region14: #{generator_forward.14} parent=0 // pred_check
    _
  $region15: #{generator_forward.14} parent=0 // pred_check_branch
    %669 = sbr.rel (0) target = $region17
  $region16: #{generator_forward.14} parent=0 // pred_region
    _
  $region17: #{generator_forward.14} parent=0 // pred_fallthru
    _
  // Predicated region
  $region18: #{generator_forward.14} parent=0 // pred_check
    _
  $region19: #{generator_forward.14} parent=0 // pred_check_branch
    %671 = sbr.rel (0) target = $region21
  $region20: #{generator_forward.14} parent=0 // pred_region
    _
  $region21: #{generator_forward.14} parent=0 // pred_fallthru
    _

// kernel: generator_forward.15
$region0: #{generator_forward.15}
  #allocation0 [shape = 'u32[]', space=smem, size = 0x4, offset = 0x4, fixed_abs, tag = 'smem constant byte address 0x4 - core index']
  #allocation1 [shape = 'u32[144,128]{1,0:T(1,128)}', space=vmem, size = 0x12000, scoped, tag = 'internal scratch']
  #allocation2 [shape = 'f32[512,128]{1,0:T(8,128)}', space=vmem, size = 0x40000, scoped, tag = 'scratch operand']
  %s0 = inlined_call_operand.vmem [shape: bf16[4,512,128], index: 0, kind: input, shape index: {}]
  %s1 = inlined_call_operand.vmem [shape: bf16[4,128,128], index: 1, kind: input, shape index: {}]
  %s2 = inlined_call_operand.vmem [shape: f32[1,128], index: 2, kind: input, shape index: {}]
  %s3 = inlined_call_operand.vmem [shape: bf16[4,512,128], index: 3, kind: output, shape index: {}]
  %s4 = sld [smem:[#allocation0]]
  $region53: #{generator_forward.15} parent=0
    _
  %s6 = ssub.s32 1, %s4
  %s7 = scalar_select 0, %s6, %s4
  loop: start=0, step=1, limit=6
  $region2: #{generator_forward.15} parent=0 // loop_pre_header
    _
  $region3: #{generator_forward.15} parent=0 // loop_header
    %s9 = sphi 0, %s13
    %p10 = scmp.ge.s32.totalorder %s9, 6
    %s16 = sphi 0, %s35
    %s17 = sphi 0, %s31
    %s18 = sphi 0, %s27
    %s19 = sphi 0, %s16
    %s20 = sphi 0, %s17
    %s21 = sphi 0, %s18
    %s22 = sphi 0, %s19
    %s23 = sphi 0, %s20
    %s24 = sphi 0, %s21
    %s42 = sphi 0, %s44
    %s45 = sphi 0, %s42
    %s46 = sphi 0, %s45
    %s62 = sphi 0, %s46
    %s70 = sphi 0, %s72
    %s73 = sphi 0, %s70
    %s74 = sphi 0, %s73
    %s90 = sphi 0, %s74
    %s94 = sphi 0, %s94
    %s96 = sphi 0, %s94
    %s97 = sphi 0, %s96
    %s111 = sphi 0, %s97
    %s119 = sphi 0, %s121
    %s122 = sphi 0, %s119
    %s123 = sphi 0, %s122
    %s139 = sphi 0, %s123
  $region4: #{generator_forward.15} parent=0 // loop_header_branch
    %12 = sbr.rel (%p10) target = $region8
  $region5: #{generator_forward.15} parent=0 // loop_body
    %s14 = ssub.s32 %s9, 1
    %s15 = ssub.s32 %s9, 2
    %s25 = sadd.s32 1, %s18
    %p26 = scmp.ge.s32.totalorder %s25, 1
    %s27 = scalar_select %p26, 0, %s25
    %s28 = sadd.s32 1, %s17
    %s29 = scalar_select %p26, %s28, %s17
    %p30 = scmp.ge.s32.totalorder %s29, 1
    %s31 = scalar_select %p30, 0, %s29
    %s32 = sadd.s32 1, %s16
    %s33 = scalar_select %p30, %s32, %s16
    %p34 = scmp.ge.s32.totalorder %s33, 4
    %s35 = scalar_select %p34, 0, %s33
    %s36 = ssub.s32 %s16, %s35
    %s37 = ssub.s32 %s17, %s31
    %s38 = sor.u32 %s36, %s37
    %s39 = ssub.s32 %s18, %s27
    %s40 = sor.u32 %s38, %s39
    %p41 = scmp.eq.s32.totalorder %s40, 0
    %s43 = sadd.s32 %s42, 1
    %s44 = scalar_select %p41, %s42, %s43
    %p47 = pneg %p41
    %p48 = scmp.eq.s32.totalorder %s9, 3
    %p49 = por %p47, %p48
    %p50 = scmp.ne.s32.totalorder %s42, %s45
    %p51 = scmp.eq.s32.totalorder %s9, 0
    %p52 = por %p50, %p51
    %p53 = scmp.ne.s32.totalorder %s42, %s45
    %p54 = scmp.eq.s32.totalorder %s14, 3
    %p55 = por %p53, %p54
    %p56 = scmp.ne.s32.totalorder %s45, %s46
    %p57 = scmp.eq.s32.totalorder %s14, 0
    %p58 = por %p56, %p57
    %p59 = scmp.ne.s32.totalorder %s45, %s46
    %p60 = scmp.eq.s32.totalorder %s15, 3
    %p61 = por %p59, %p60
    %p63 = scmp.ne.s32.totalorder %s46, %s62
    %p64 = scmp.eq.s32.totalorder %s15, 0
    %p65 = por %p63, %p64
    %s66 = ssub.s32 %s16, %s35
    %s67 = ssub.s32 %s18, %s27
    %s68 = sor.u32 %s66, %s67
    %p69 = scmp.eq.s32.totalorder %s68, 0
    %s71 = sadd.s32 %s70, 1
    %s72 = scalar_select %p69, %s70, %s71
    %p75 = pneg %p69
    %p76 = scmp.eq.s32.totalorder %s9, 3
    %p77 = por %p75, %p76
    %p78 = scmp.ne.s32.totalorder %s70, %s73
    %p79 = scmp.eq.s32.totalorder %s9, 0
    %p80 = por %p78, %p79
    %p81 = scmp.ne.s32.totalorder %s70, %s73
    %p82 = scmp.eq.s32.totalorder %s14, 3
    %p83 = por %p81, %p82
    %p84 = scmp.ne.s32.totalorder %s73, %s74
    %p85 = scmp.eq.s32.totalorder %s14, 0
    %p86 = por %p84, %p85
    %p87 = scmp.ne.s32.totalorder %s73, %s74
    %p88 = scmp.eq.s32.totalorder %s15, 3
    %p89 = por %p87, %p88
    %p91 = scmp.ne.s32.totalorder %s74, %s90
    %p92 = scmp.eq.s32.totalorder %s15, 0
    %p93 = por %p91, %p92
    %s95 = sadd.s32 %s94, 1
    %p98 = scmp.eq.s32.totalorder %s9, 3
    %p99 = scmp.ne.s32.totalorder %s94, %s96
    %p100 = scmp.eq.s32.totalorder %s9, 0
    %p101 = por %p99, %p100
    %p102 = scmp.ne.s32.totalorder %s94, %s96
    %p103 = scmp.eq.s32.totalorder %s14, 3
    %p104 = por %p102, %p103
    %p105 = scmp.ne.s32.totalorder %s96, %s97
    %p106 = scmp.eq.s32.totalorder %s14, 0
    %p107 = por %p105, %p106
    %p108 = scmp.ne.s32.totalorder %s96, %s97
    %p109 = scmp.eq.s32.totalorder %s15, 3
    %p110 = por %p108, %p109
    %p112 = scmp.ne.s32.totalorder %s97, %s111
    %p113 = scmp.eq.s32.totalorder %s15, 0
    %p114 = por %p112, %p113
    %s115 = ssub.s32 %s16, %s35
    %s116 = ssub.s32 %s17, %s31
    %s117 = sor.u32 %s115, %s116
    %p118 = scmp.eq.s32.totalorder %s117, 0
    %s120 = sadd.s32 %s119, 1
    %s121 = scalar_select %p118, %s119, %s120
    %p124 = pneg %p118
    %p125 = scmp.eq.s32.totalorder %s9, 3
    %p126 = por %p124, %p125
    %p127 = scmp.ne.s32.totalorder %s119, %s122
    %p128 = scmp.eq.s32.totalorder %s9, 0
    %p129 = por %p127, %p128
    %p130 = scmp.ne.s32.totalorder %s119, %s122
    %p131 = scmp.eq.s32.totalorder %s14, 3
    %p132 = por %p130, %p131
    %p133 = scmp.ne.s32.totalorder %s122, %s123
    %p134 = scmp.eq.s32.totalorder %s14, 0
    %p135 = por %p133, %p134
    %p136 = scmp.ne.s32.totalorder %s122, %s123
    %p137 = scmp.eq.s32.totalorder %s15, 3
    %p138 = por %p136, %p137
    %p140 = scmp.ne.s32.totalorder %s123, %s139
    %p141 = scmp.eq.s32.totalorder %s15, 0
    %p142 = por %p140, %p141
    %p143 = scmp.le.s32.totalorder 1, %s9
    %p144 = scmp.lt.s32.totalorder %s9, 5
    %p145 = pnand %p143, %p144
    %p146 = pneg %p145
    // Predicated region
    $region9: #{generator_forward.15} parent=5 // pred_check
      _
    $region10: #{generator_forward.15} parent=5 // pred_check_branch
      %148 = sbr.rel (%p145) target = $region12
    $region11: #{generator_forward.15} parent=5 // pred_region
      %s149 = ssub.s32 %s9, 1
      // Predicated region
      $region13: #{generator_forward.15} parent=11 // pred_check
        %p150 = pneg %p107
      $region14: #{generator_forward.15} parent=11 // pred_check_branch
        %152 = sbr.rel (%p150) target = $region16
      $region15: #{generator_forward.15} parent=11 // pred_region
        _
      $region16: #{generator_forward.15} parent=11 // pred_fallthru
        _
    $region12: #{generator_forward.15} parent=5 // pred_fallthru
      _
    %p153 = scmp.lt.s32.totalorder %s9, 4
    // Predicated region
    $region17: #{generator_forward.15} parent=5 // pred_check
      %p154 = pneg %p153
    $region18: #{generator_forward.15} parent=5 // pred_check_branch
      %156 = sbr.rel (%p154) target = $region20
    $region19: #{generator_forward.15} parent=5 // pred_region
      // Predicated region
      $region21: #{generator_forward.15} parent=19 // pred_check
        %p157 = pneg %p52
      $region22: #{generator_forward.15} parent=19 // pred_check_branch
        %159 = sbr.rel (%p157) target = $region24
      $region23: #{generator_forward.15} parent=19 // pred_region
        %s160 = smul.u32 64, %s17
        %p161 = scmp.lt.s32.totalorder %s16, 3
        %s162 = scalar_select %p161, %s16, 3
        %p163 = scmp.lt.s32.totalorder %s160, 63
        %s164 = scalar_select %p163, %s160, 63
        %p165 = scmp.lt.s32.totalorder %s18, 0
        %s166 = scalar_select %p165, %s18, 0
        %s167 = sadd.s32 %s166, %s164
        %s168 = smul.addr %s162, 64
        %s169 = sadd.s32 %s167, %s168
        %s170 = smul.addr %s169, 4
        %s171 = scalar_lea.vmem %s0, %s170
        %s172 = smul.u32 64, %s17
      $region24: #{generator_forward.15} parent=19 // pred_fallthru
        _
      // Predicated region
      $region25: #{generator_forward.15} parent=19 // pred_check
        %p173 = pneg %p80
      $region26: #{generator_forward.15} parent=19 // pred_check_branch
        %175 = sbr.rel (%p173) target = $region28
      $region27: #{generator_forward.15} parent=19 // pred_region
        %s176 = smul.u32 16, %s18
        %p177 = scmp.lt.s32.totalorder %s16, 3
        %s178 = scalar_select %p177, %s16, 3
        %p179 = scmp.lt.s32.totalorder %s176, 15
        %s180 = scalar_select %p179, %s176, 15
        %s181 = smul.addr %s178, 16
        %s182 = sadd.s32 %s180, %s181
        %s183 = smul.addr %s182, 4
        %s184 = scalar_lea.vmem %s1, %s183
        %s185 = smul.u32 16, %s18
      $region28: #{generator_forward.15} parent=19 // pred_fallthru
        _
    $region20: #{generator_forward.15} parent=5 // pred_fallthru
      _
    %p186 = scmp.le.s32.totalorder 1, %s9
    %p187 = scmp.lt.s32.totalorder %s9, 5
    %p188 = pnand %p186, %p187
    %p189 = pneg %p188
    // Predicated region
    $region29: #{generator_forward.15} parent=5 // pred_check
      _
    $region30: #{generator_forward.15} parent=5 // pred_check_branch
      %191 = sbr.rel (%p188) target = $region32
    $region31: #{generator_forward.15} parent=5 // pred_region
      %s192 = ssub.s32 %s9, 1
      %s193 = smul.u32 64, %s20
      %p194 = scmp.lt.s32.totalorder %s19, 3
      %s195 = scalar_select %p194, %s19, 3
      %p196 = scmp.lt.s32.totalorder %s193, 63
      %s197 = scalar_select %p196, %s193, 63
      %p198 = scmp.lt.s32.totalorder %s21, 0
      %s199 = scalar_select %p198, %s21, 0
      %s200 = sadd.s32 %s199, %s197
      %s201 = smul.addr %s195, 64
      %s202 = sadd.s32 %s200, %s201
      %s203 = smul.addr %s202, 4
      %s204 = scalar_lea.vmem %s0, %s203
      %p205 = pneg %p58
      %p206 = pneg %p55
      %s207 = smul.u32 16, %s21
      %p208 = scmp.lt.s32.totalorder %s19, 3
      %s209 = scalar_select %p208, %s19, 3
      %p210 = scmp.lt.s32.totalorder %s207, 15
      %s211 = scalar_select %p210, %s207, 15
      %s212 = smul.addr %s209, 16
      %s213 = sadd.s32 %s211, %s212
      %s214 = smul.addr %s213, 4
      %s215 = scalar_lea.vmem %s1, %s214
      %p216 = pneg %p86
      %p217 = pneg %p83
      %p218 = pneg %p107
      %p219 = pneg %p104
      %p220 = pneg %p135
      %p221 = pneg %p132
      %s222 = smul.u32 64, %s20
      %p223 = scmp.lt.s32.totalorder %s19, 3
      %s224 = scalar_select %p223, %s19, 3
      %p225 = scmp.lt.s32.totalorder %s222, 63
      %s226 = scalar_select %p225, %s222, 63
      %s227 = smul.addr %s224, 64
      %s228 = sadd.s32 %s226, %s227
      %s229 = smul.addr %s228, 4
      %s230 = scalar_lea.vmem %s3, %s229
      %s231 = smul.u32 64, %s20
      %p232 = scmp.lt.s32.totalorder %s19, 3
      %s233 = scalar_select %p232, %s19, 3
      %p234 = scmp.lt.s32.totalorder %s231, 63
      %s235 = scalar_select %p234, %s231, 63
      %p236 = scmp.lt.s32.totalorder %s21, 0
      %s237 = scalar_select %p236, %s21, 0
      %s238 = sadd.s32 %s237, %s235
      %s239 = smul.addr %s233, 64
      %s240 = sadd.s32 %s238, %s239
      %s241 = smul.addr %s240, 4
      %s242 = scalar_lea.vmem %s0, %s241
      %s243 = smul.u32 64, %s20
      %s244 = smul.u32 16, %s21
      %p245 = scmp.lt.s32.totalorder %s19, 3
      %s246 = scalar_select %p245, %s19, 3
      %p247 = scmp.lt.s32.totalorder %s244, 15
      %s248 = scalar_select %p247, %s244, 15
      %s249 = smul.addr %s246, 16
      %s250 = sadd.s32 %s248, %s249
      %s251 = smul.addr %s250, 4
      %s252 = scalar_lea.vmem %s1, %s251
      %s253 = smul.u32 16, %s21
      %s254 = smul.u32 64, %s20
      %p255 = scmp.lt.s32.totalorder %s19, 3
      %s256 = scalar_select %p255, %s19, 3
      %p257 = scmp.lt.s32.totalorder %s254, 63
      %s258 = scalar_select %p257, %s254, 63
      %s259 = smul.addr %s256, 64
      %s260 = sadd.s32 %s258, %s259
      %s261 = smul.addr %s260, 4
      %s262 = scalar_lea.vmem %s3, %s261
      %s263 = smul.u32 64, %s20
      %p265 = scmp.eq.s32.totalorder %s21, 0
      // Predicated region
      $region33: #{generator_forward.15} parent=31 // pred_check
        %p266 = pneg %p265
      $region34: #{generator_forward.15} parent=31 // pred_check_branch
        %268 = sbr.rel (%p266) target = $region36
      $region35: #{generator_forward.15} parent=31 // pred_region
        %269 = vst [vmem:[#allocation2] sm:$0xff] 0.0
        %270 = vst [vmem:[#allocation2 + $0x8] sm:$0xff] 0.0
        %271 = vst [vmem:[#allocation2 + $0x10] sm:$0xff] 0.0
        %272 = vst [vmem:[#allocation2 + $0x18] sm:$0xff] 0.0
        %273 = vst [vmem:[#allocation2 + $0x20] sm:$0xff] 0.0
        %274 = vst [vmem:[#allocation2 + $0x28] sm:$0xff] 0.0
        %275 = vst [vmem:[#allocation2 + $0x30] sm:$0xff] 0.0
        %276 = vst [vmem:[#allocation2 + $0x38] sm:$0xff] 0.0
        %277 = vst [vmem:[#allocation2 + $0x40] sm:$0xff] 0.0
        %278 = vst [vmem:[#allocation2 + $0x48] sm:$0xff] 0.0
        %279 = vst [vmem:[#allocation2 + $0x50] sm:$0xff] 0.0
        %280 = vst [vmem:[#allocation2 + $0x58] sm:$0xff] 0.0
        %281 = vst [vmem:[#allocation2 + $0x60] sm:$0xff] 0.0
        %282 = vst [vmem:[#allocation2 + $0x68] sm:$0xff] 0.0
        %283 = vst [vmem:[#allocation2 + $0x70] sm:$0xff] 0.0
        %284 = vst [vmem:[#allocation2 + $0x78] sm:$0xff] 0.0
        %285 = vst [vmem:[#allocation2 + $0x80] sm:$0xff] 0.0
        %286 = vst [vmem:[#allocation2 + $0x88] sm:$0xff] 0.0
        %287 = vst [vmem:[#allocation2 + $0x90] sm:$0xff] 0.0
        %288 = vst [vmem:[#allocation2 + $0x98] sm:$0xff] 0.0
        %289 = vst [vmem:[#allocation2 + $0xa0] sm:$0xff] 0.0
        %290 = vst [vmem:[#allocation2 + $0xa8] sm:$0xff] 0.0
        %291 = vst [vmem:[#allocation2 + $0xb0] sm:$0xff] 0.0
        %292 = vst [vmem:[#allocation2 + $0xb8] sm:$0xff] 0.0
        %293 = vst [vmem:[#allocation2 + $0xc0] sm:$0xff] 0.0
        %294 = vst [vmem:[#allocation2 + $0xc8] sm:$0xff] 0.0
        %295 = vst [vmem:[#allocation2 + $0xd0] sm:$0xff] 0.0
        %296 = vst [vmem:[#allocation2 + $0xd8] sm:$0xff] 0.0
        %297 = vst [vmem:[#allocation2 + $0xe0] sm:$0xff] 0.0
        %298 = vst [vmem:[#allocation2 + $0xe8] sm:$0xff] 0.0
        %299 = vst [vmem:[#allocation2 + $0xf0] sm:$0xff] 0.0
        %300 = vst [vmem:[#allocation2 + $0xf8] sm:$0xff] 0.0
        %301 = vst [vmem:[#allocation2 + $0x100] sm:$0xff] 0.0
        %302 = vst [vmem:[#allocation2 + $0x108] sm:$0xff] 0.0
        %303 = vst [vmem:[#allocation2 + $0x110] sm:$0xff] 0.0
        %304 = vst [vmem:[#allocation2 + $0x118] sm:$0xff] 0.0
        %305 = vst [vmem:[#allocation2 + $0x120] sm:$0xff] 0.0
        %306 = vst [vmem:[#allocation2 + $0x128] sm:$0xff] 0.0
        %307 = vst [vmem:[#allocation2 + $0x130] sm:$0xff] 0.0
        %308 = vst [vmem:[#allocation2 + $0x138] sm:$0xff] 0.0
        %309 = vst [vmem:[#allocation2 + $0x140] sm:$0xff] 0.0
        %310 = vst [vmem:[#allocation2 + $0x148] sm:$0xff] 0.0
        %311 = vst [vmem:[#allocation2 + $0x150] sm:$0xff] 0.0
        %312 = vst [vmem:[#allocation2 + $0x158] sm:$0xff] 0.0
        %313 = vst [vmem:[#allocation2 + $0x160] sm:$0xff] 0.0
        %314 = vst [vmem:[#allocation2 + $0x168] sm:$0xff] 0.0
        %315 = vst [vmem:[#allocation2 + $0x170] sm:$0xff] 0.0
        %316 = vst [vmem:[#allocation2 + $0x178] sm:$0xff] 0.0
        %317 = vst [vmem:[#allocation2 + $0x180] sm:$0xff] 0.0
        %318 = vst [vmem:[#allocation2 + $0x188] sm:$0xff] 0.0
        %319 = vst [vmem:[#allocation2 + $0x190] sm:$0xff] 0.0
        %320 = vst [vmem:[#allocation2 + $0x198] sm:$0xff] 0.0
        %321 = vst [vmem:[#allocation2 + $0x1a0] sm:$0xff] 0.0
        %322 = vst [vmem:[#allocation2 + $0x1a8] sm:$0xff] 0.0
        %323 = vst [vmem:[#allocation2 + $0x1b0] sm:$0xff] 0.0
        %324 = vst [vmem:[#allocation2 + $0x1b8] sm:$0xff] 0.0
        %325 = vst [vmem:[#allocation2 + $0x1c0] sm:$0xff] 0.0
        %326 = vst [vmem:[#allocation2 + $0x1c8] sm:$0xff] 0.0
        %327 = vst [vmem:[#allocation2 + $0x1d0] sm:$0xff] 0.0
        %328 = vst [vmem:[#allocation2 + $0x1d8] sm:$0xff] 0.0
        %329 = vst [vmem:[#allocation2 + $0x1e0] sm:$0xff] 0.0
        %330 = vst [vmem:[#allocation2 + $0x1e8] sm:$0xff] 0.0
        %331 = vst [vmem:[#allocation2 + $0x1f0] sm:$0xff] 0.0
        %332 = vst [vmem:[#allocation2 + $0x1f8] sm:$0xff] 0.0
      $region36: #{generator_forward.15} parent=31 // pred_fallthru
        _
      %v333 = vld [vmem:[#allocation2] sm:$0xff]
      %v334 = vld [vmem:[#allocation2 + $0x8] sm:$0xff]
      %v335 = vld [vmem:[#allocation2 + $0x10] sm:$0xff]
      %v336 = vld [vmem:[#allocation2 + $0x18] sm:$0xff]
      %v337 = vld [vmem:[#allocation2 + $0x20] sm:$0xff]
      %v338 = vld [vmem:[#allocation2 + $0x28] sm:$0xff]
      %v339 = vld [vmem:[#allocation2 + $0x30] sm:$0xff]
      %v340 = vld [vmem:[#allocation2 + $0x38] sm:$0xff]
      %v341 = vld [vmem:[#allocation2 + $0x40] sm:$0xff]
      %v342 = vld [vmem:[#allocation2 + $0x48] sm:$0xff]
      %v343 = vld [vmem:[#allocation2 + $0x50] sm:$0xff]
      %v344 = vld [vmem:[#allocation2 + $0x58] sm:$0xff]
      %v345 = vld [vmem:[#allocation2 + $0x60] sm:$0xff]
      %v346 = vld [vmem:[#allocation2 + $0x68] sm:$0xff]
      %v347 = vld [vmem:[#allocation2 + $0x70] sm:$0xff]
      %v348 = vld [vmem:[#allocation2 + $0x78] sm:$0xff]
      %v349 = vld [vmem:[#allocation2 + $0x80] sm:$0xff]
      %v350 = vld [vmem:[#allocation2 + $0x88] sm:$0xff]
      %v351 = vld [vmem:[#allocation2 + $0x90] sm:$0xff]
      %v352 = vld [vmem:[#allocation2 + $0x98] sm:$0xff]
      %v353 = vld [vmem:[#allocation2 + $0xa0] sm:$0xff]
      %v354 = vld [vmem:[#allocation2 + $0xa8] sm:$0xff]
      %v355 = vld [vmem:[#allocation2 + $0xb0] sm:$0xff]
      %v356 = vld [vmem:[#allocation2 + $0xb8] sm:$0xff]
      %v357 = vld [vmem:[#allocation2 + $0xc0] sm:$0xff]
      %v358 = vld [vmem:[#allocation2 + $0xc8] sm:$0xff]
      %v359 = vld [vmem:[#allocation2 + $0xd0] sm:$0xff]
      %v360 = vld [vmem:[#allocation2 + $0xd8] sm:$0xff]
      %v361 = vld [vmem:[#allocation2 + $0xe0] sm:$0xff]
      %v362 = vld [vmem:[#allocation2 + $0xe8] sm:$0xff]
      %v363 = vld [vmem:[#allocation2 + $0xf0] sm:$0xff]
      %v364 = vld [vmem:[#allocation2 + $0xf8] sm:$0xff]
      %v365 = vld [vmem:[#allocation2 + $0x100] sm:$0xff]
      %v366 = vld [vmem:[#allocation2 + $0x108] sm:$0xff]
      %v367 = vld [vmem:[#allocation2 + $0x110] sm:$0xff]
      %v368 = vld [vmem:[#allocation2 + $0x118] sm:$0xff]
      %v369 = vld [vmem:[#allocation2 + $0x120] sm:$0xff]
      %v370 = vld [vmem:[#allocation2 + $0x128] sm:$0xff]
      %v371 = vld [vmem:[#allocation2 + $0x130] sm:$0xff]
      %v372 = vld [vmem:[#allocation2 + $0x138] sm:$0xff]
      %v373 = vld [vmem:[#allocation2 + $0x140] sm:$0xff]
      %v374 = vld [vmem:[#allocation2 + $0x148] sm:$0xff]
      %v375 = vld [vmem:[#allocation2 + $0x150] sm:$0xff]
      %v376 = vld [vmem:[#allocation2 + $0x158] sm:$0xff]
      %v377 = vld [vmem:[#allocation2 + $0x160] sm:$0xff]
      %v378 = vld [vmem:[#allocation2 + $0x168] sm:$0xff]
      %v379 = vld [vmem:[#allocation2 + $0x170] sm:$0xff]
      %v380 = vld [vmem:[#allocation2 + $0x178] sm:$0xff]
      %v381 = vld [vmem:[#allocation2 + $0x180] sm:$0xff]
      %v382 = vld [vmem:[#allocation2 + $0x188] sm:$0xff]
      %v383 = vld [vmem:[#allocation2 + $0x190] sm:$0xff]
      %v384 = vld [vmem:[#allocation2 + $0x198] sm:$0xff]
      %v385 = vld [vmem:[#allocation2 + $0x1a0] sm:$0xff]
      %v386 = vld [vmem:[#allocation2 + $0x1a8] sm:$0xff]
      %v387 = vld [vmem:[#allocation2 + $0x1b0] sm:$0xff]
      %v388 = vld [vmem:[#allocation2 + $0x1b8] sm:$0xff]
      %v389 = vld [vmem:[#allocation2 + $0x1c0] sm:$0xff]
      %v390 = vld [vmem:[#allocation2 + $0x1c8] sm:$0xff]
      %v391 = vld [vmem:[#allocation2 + $0x1d0] sm:$0xff]
      %v392 = vld [vmem:[#allocation2 + $0x1d8] sm:$0xff]
      %v393 = vld [vmem:[#allocation2 + $0x1e0] sm:$0xff]
      %v394 = vld [vmem:[#allocation2 + $0x1e8] sm:$0xff]
      %v395 = vld [vmem:[#allocation2 + $0x1f0] sm:$0xff]
      %v396 = vld [vmem:[#allocation2 + $0x1f8] sm:$0xff]
      %v397 = vld [vmem:[%s242] sm:$0xf]
      %v398 = vld [vmem:[%s242 + $0x4] sm:$0xf]
      %v399 = vld [vmem:[%s242 + $0x8] sm:$0xf]
      %v400 = vld [vmem:[%s242 + $0xc] sm:$0xf]
      %v401 = vld [vmem:[%s242 + $0x10] sm:$0xf]
      %v402 = vld [vmem:[%s242 + $0x14] sm:$0xf]
      %v403 = vld [vmem:[%s242 + $0x18] sm:$0xf]
      %v404 = vld [vmem:[%s242 + $0x1c] sm:$0xf]
      %v405 = vld [vmem:[%s242 + $0x20] sm:$0xf]
      %v406 = vld [vmem:[%s242 + $0x24] sm:$0xf]
      %v407 = vld [vmem:[%s242 + $0x28] sm:$0xf]
      %v408 = vld [vmem:[%s242 + $0x2c] sm:$0xf]
      %v409 = vld [vmem:[%s242 + $0x30] sm:$0xf]
      %v410 = vld [vmem:[%s242 + $0x34] sm:$0xf]
      %v411 = vld [vmem:[%s242 + $0x38] sm:$0xf]
      %v412 = vld [vmem:[%s242 + $0x3c] sm:$0xf]
      %v413 = vld [vmem:[%s242 + $0x40] sm:$0xf]
      %v414 = vld [vmem:[%s242 + $0x44] sm:$0xf]
      %v415 = vld [vmem:[%s242 + $0x48] sm:$0xf]
      %v416 = vld [vmem:[%s242 + $0x4c] sm:$0xf]
      %v417 = vld [vmem:[%s242 + $0x50] sm:$0xf]
      %v418 = vld [vmem:[%s242 + $0x54] sm:$0xf]
      %v419 = vld [vmem:[%s242 + $0x58] sm:$0xf]
      %v420 = vld [vmem:[%s242 + $0x5c] sm:$0xf]
      %v421 = vld [vmem:[%s242 + $0x60] sm:$0xf]
      %v422 = vld [vmem:[%s242 + $0x64] sm:$0xf]
      %v423 = vld [vmem:[%s242 + $0x68] sm:$0xf]
      %v424 = vld [vmem:[%s242 + $0x6c] sm:$0xf]
      %v425 = vld [vmem:[%s242 + $0x70] sm:$0xf]
      %v426 = vld [vmem:[%s242 + $0x74] sm:$0xf]
      %v427 = vld [vmem:[%s242 + $0x78] sm:$0xf]
      %v428 = vld [vmem:[%s242 + $0x7c] sm:$0xf]
      %v429 = vld [vmem:[%s242 + $0x80] sm:$0xf]
      %v430 = vld [vmem:[%s242 + $0x84] sm:$0xf]
      %v431 = vld [vmem:[%s242 + $0x88] sm:$0xf]
      %v432 = vld [vmem:[%s242 + $0x8c] sm:$0xf]
      %v433 = vld [vmem:[%s242 + $0x90] sm:$0xf]
      %v434 = vld [vmem:[%s242 + $0x94] sm:$0xf]
      %v435 = vld [vmem:[%s242 + $0x98] sm:$0xf]
      %v436 = vld [vmem:[%s242 + $0x9c] sm:$0xf]
      %v437 = vld [vmem:[%s242 + $0xa0] sm:$0xf]
      %v438 = vld [vmem:[%s242 + $0xa4] sm:$0xf]
      %v439 = vld [vmem:[%s242 + $0xa8] sm:$0xf]
      %v440 = vld [vmem:[%s242 + $0xac] sm:$0xf]
      %v441 = vld [vmem:[%s242 + $0xb0] sm:$0xf]
      %v442 = vld [vmem:[%s242 + $0xb4] sm:$0xf]
      %v443 = vld [vmem:[%s242 + $0xb8] sm:$0xf]
      %v444 = vld [vmem:[%s242 + $0xbc] sm:$0xf]
      %v445 = vld [vmem:[%s242 + $0xc0] sm:$0xf]
      %v446 = vld [vmem:[%s242 + $0xc4] sm:$0xf]
      %v447 = vld [vmem:[%s242 + $0xc8] sm:$0xf]
      %v448 = vld [vmem:[%s242 + $0xcc] sm:$0xf]
      %v449 = vld [vmem:[%s242 + $0xd0] sm:$0xf]
      %v450 = vld [vmem:[%s242 + $0xd4] sm:$0xf]
      %v451 = vld [vmem:[%s242 + $0xd8] sm:$0xf]
      %v452 = vld [vmem:[%s242 + $0xdc] sm:$0xf]
      %v453 = vld [vmem:[%s242 + $0xe0] sm:$0xf]
      %v454 = vld [vmem:[%s242 + $0xe4] sm:$0xf]
      %v455 = vld [vmem:[%s242 + $0xe8] sm:$0xf]
      %v456 = vld [vmem:[%s242 + $0xec] sm:$0xf]
      %v457 = vld [vmem:[%s242 + $0xf0] sm:$0xf]
      %v458 = vld [vmem:[%s242 + $0xf4] sm:$0xf]
      %v459 = vld [vmem:[%s242 + $0xf8] sm:$0xf]
      %v460 = vld [vmem:[%s242 + $0xfc] sm:$0xf]
      %v461 = vld [vmem:[%s252] sm:$0xf]
      %v462 = vld [vmem:[%s252 + $0x4] sm:$0xf]
      %v463 = vld [vmem:[%s252 + $0x8] sm:$0xf]
      %v464 = vld [vmem:[%s252 + $0xc] sm:$0xf]
      %v465 = vld [vmem:[%s252 + $0x10] sm:$0xf]
      %v466 = vld [vmem:[%s252 + $0x14] sm:$0xf]
      %v467 = vld [vmem:[%s252 + $0x18] sm:$0xf]
      %v468 = vld [vmem:[%s252 + $0x1c] sm:$0xf]
      %v469 = vld [vmem:[%s252 + $0x20] sm:$0xf]
      %v470 = vld [vmem:[%s252 + $0x24] sm:$0xf]
      %v471 = vld [vmem:[%s252 + $0x28] sm:$0xf]
      %v472 = vld [vmem:[%s252 + $0x2c] sm:$0xf]
      %v473 = vld [vmem:[%s252 + $0x30] sm:$0xf]
      %v474 = vld [vmem:[%s252 + $0x34] sm:$0xf]
      %v475 = vld [vmem:[%s252 + $0x38] sm:$0xf]
      %v476 = vld [vmem:[%s252 + $0x3c] sm:$0xf]
      %v541 = vunpack.c.l.b16 %v397
      %v542 = vunpack.c.l.b16 %v398
      %v543 = vunpack.c.l.b16 %v399
      %v544 = vunpack.c.l.b16 %v400
      %v545 = vunpack.c.l.b16 %v401
      %v546 = vunpack.c.l.b16 %v402
      %v547 = vunpack.c.l.b16 %v403
      %v548 = vunpack.c.l.b16 %v404
      %v549 = vunpack.c.l.b16 %v405
      %v550 = vunpack.c.l.b16 %v406
      %v551 = vunpack.c.l.b16 %v407
      %v552 = vunpack.c.l.b16 %v408
      %v553 = vunpack.c.l.b16 %v409
      %v554 = vunpack.c.l.b16 %v410
      %v555 = vunpack.c.l.b16 %v411
      %v556 = vunpack.c.l.b16 %v412
      %v557 = vunpack.c.l.b16 %v413
      %v558 = vunpack.c.l.b16 %v414
      %v559 = vunpack.c.l.b16 %v415
      %v560 = vunpack.c.l.b16 %v416
      %v561 = vunpack.c.l.b16 %v417
      %v562 = vunpack.c.l.b16 %v418
      %v563 = vunpack.c.l.b16 %v419
      %v564 = vunpack.c.l.b16 %v420
      %v565 = vunpack.c.l.b16 %v421
      %v566 = vunpack.c.l.b16 %v422
      %v567 = vunpack.c.l.b16 %v423
      %v568 = vunpack.c.l.b16 %v424
      %v569 = vunpack.c.l.b16 %v425
      %v570 = vunpack.c.l.b16 %v426
      %v571 = vunpack.c.l.b16 %v427
      %v572 = vunpack.c.l.b16 %v428
      %v573 = vunpack.c.l.b16 %v429
      %v574 = vunpack.c.l.b16 %v430
      %v575 = vunpack.c.l.b16 %v431
      %v576 = vunpack.c.l.b16 %v432
      %v577 = vunpack.c.l.b16 %v433
      %v578 = vunpack.c.l.b16 %v434
      %v579 = vunpack.c.l.b16 %v435
      %v580 = vunpack.c.l.b16 %v436
      %v581 = vunpack.c.l.b16 %v437
      %v582 = vunpack.c.l.b16 %v438
      %v583 = vunpack.c.l.b16 %v439
      %v584 = vunpack.c.l.b16 %v440
      %v585 = vunpack.c.l.b16 %v441
      %v586 = vunpack.c.l.b16 %v442
      %v587 = vunpack.c.l.b16 %v443
      %v588 = vunpack.c.l.b16 %v444
      %v589 = vunpack.c.l.b16 %v445
      %v590 = vunpack.c.l.b16 %v446
      %v591 = vunpack.c.l.b16 %v447
      %v592 = vunpack.c.l.b16 %v448
      %v593 = vunpack.c.l.b16 %v449
      %v594 = vunpack.c.l.b16 %v450
      %v595 = vunpack.c.l.b16 %v451
      %v596 = vunpack.c.l.b16 %v452
      %v597 = vunpack.c.l.b16 %v453
      %v598 = vunpack.c.l.b16 %v454
      %v599 = vunpack.c.l.b16 %v455
      %v600 = vunpack.c.l.b16 %v456
      %v601 = vunpack.c.l.b16 %v457
      %v602 = vunpack.c.l.b16 %v458
      %v603 = vunpack.c.l.b16 %v459
      %v604 = vunpack.c.l.b16 %v460
      %v605 = vpack.c.b16 %v542, %v541
      %v606 = vpack.c.b16 %v544, %v543
      %v607 = vpack.c.b16 %v546, %v545
      %v608 = vpack.c.b16 %v548, %v547
      %v609 = vpack.c.b16 %v550, %v549
      %v610 = vpack.c.b16 %v552, %v551
      %v611 = vpack.c.b16 %v554, %v553
      %v612 = vpack.c.b16 %v556, %v555
      %v613 = vpack.c.b16 %v558, %v557
      %v614 = vpack.c.b16 %v560, %v559
      %v615 = vpack.c.b16 %v562, %v561
      %v616 = vpack.c.b16 %v564, %v563
      %v617 = vpack.c.b16 %v566, %v565
      %v618 = vpack.c.b16 %v568, %v567
      %v619 = vpack.c.b16 %v570, %v569
      %v620 = vpack.c.b16 %v572, %v571
      %v621 = vpack.c.b16 %v574, %v573
      %v622 = vpack.c.b16 %v576, %v575
      %v623 = vpack.c.b16 %v578, %v577
      %v624 = vpack.c.b16 %v580, %v579
      %v625 = vpack.c.b16 %v582, %v581
      %v626 = vpack.c.b16 %v584, %v583
      %v627 = vpack.c.b16 %v586, %v585
      %v628 = vpack.c.b16 %v588, %v587
      %v629 = vpack.c.b16 %v590, %v589
      %v630 = vpack.c.b16 %v592, %v591
      %v631 = vpack.c.b16 %v594, %v593
      %v632 = vpack.c.b16 %v596, %v595
      %v633 = vpack.c.b16 %v598, %v597
      %v634 = vpack.c.b16 %v600, %v599
      %v635 = vpack.c.b16 %v602, %v601
      %v636 = vpack.c.b16 %v604, %v603
      %v685 = vunpack.c.l.b16 %v461
      %v686 = vunpack.c.l.b16 %v462
      %v687 = vunpack.c.l.b16 %v463
      %v688 = vunpack.c.l.b16 %v464
      %v689 = vunpack.c.l.b16 %v465
      %v690 = vunpack.c.l.b16 %v466
      %v691 = vunpack.c.l.b16 %v467
      %v692 = vunpack.c.l.b16 %v468
      %v693 = vunpack.c.l.b16 %v469
      %v694 = vunpack.c.l.b16 %v470
      %v695 = vunpack.c.l.b16 %v471
      %v696 = vunpack.c.l.b16 %v472
      %v697 = vunpack.c.l.b16 %v473
      %v698 = vunpack.c.l.b16 %v474
      %v699 = vunpack.c.l.b16 %v475
      %v700 = vunpack.c.l.b16 %v476
      %v701 = vpack.c.b16 %v686, %v685
      %v702 = vpack.c.b16 %v688, %v687
      %v703 = vpack.c.b16 %v690, %v689
      %v704 = vpack.c.b16 %v692, %v691
      %v705 = vpack.c.b16 %v694, %v693
      %v706 = vpack.c.b16 %v696, %v695
      %v707 = vpack.c.b16 %v698, %v697
      %v708 = vpack.c.b16 %v700, %v699
      %717 = vmatprep.subr.bf16.mxu0 0
      %718 = vmatpush1.bf16.msra.mxu0 %v708
      %719 = vmatprep.subr.bf16.mxu0 0
      %720 = vmatpush1.bf16.msra.mxu0 %v707
      %721 = vmatprep.subr.bf16.mxu0 0
      %722 = vmatpush1.bf16.msra.mxu0 %v706
      %723 = vmatprep.subr.bf16.mxu0 0
      %724 = vmatpush1.bf16.msra.mxu0 %v705
      %725 = vmatprep.subr.bf16.mxu0 0
      %726 = vmatpush1.bf16.msra.mxu0 %v704
      %727 = vmatprep.subr.bf16.mxu0 0
      %728 = vmatpush1.bf16.msra.mxu0 %v703
      %729 = vmatprep.subr.bf16.mxu0 0
      %730 = vmatpush1.bf16.msra.mxu0 %v702
      %731 = vmatprep.subr.bf16.mxu0 0
      %732 = vmatpush1.bf16.msra.mxu0 %v701
      %733 = vmatprep.subr.bf16.mxu0 0
      %734 = vmatpush2.bf16.msra.mxu0 0
      %735 = vmatprep.subr.bf16.mxu0 0
      %736 = vmatpush2.bf16.msra.mxu0 0
      %737 = vmatprep.subr.bf16.mxu0 0
      %738 = vmatpush2.bf16.msra.mxu0 0
      %739 = vmatprep.subr.bf16.mxu0 0
      %740 = vmatpush2.bf16.msra.mxu0 0
      %741 = vmatprep.subr.bf16.mxu0 0
      %742 = vmatpush2.bf16.msra.mxu0 0
      %743 = vmatprep.subr.bf16.mxu0 0
      %744 = vmatpush2.bf16.msra.mxu0 0
      %745 = vmatprep.subr.bf16.mxu0 0
      %746 = vmatpush2.bf16.msra.mxu0 0
      %747 = vmatprep.subr.bf16.mxu0 0
      %748 = vmatpush2.bf16.msra.mxu0 0
      %749 = vmatprep.mubr.bf16.mxu0 0
      %750 = vmatmul.mubr.bf16.gmra.mxu0 %v605
      %v751 = vpop.f32.mrf.mxu0
      %v752 = vadd.f32 0.0, %v751
      %v753 = vpop.f32.mrf.mxu0
      %v754 = vpop.f32.mrf.mxu0
      %v755 = vadd.f32 0.0, %v754
      %v756 = vpop.f32.mrf.mxu0
      %757 = vmatprep.mubr.bf16.mxu0 0
      %758 = vmatmul.mubr.bf16.gmra.mxu0 %v606
      %v759 = vpop.f32.mrf.mxu0
      %v760 = vadd.f32 0.0, %v759
      %v761 = vpop.f32.mrf.mxu0
      %v762 = vpop.f32.mrf.mxu0
      %v763 = vadd.f32 0.0, %v762
      %v764 = vpop.f32.mrf.mxu0
      %765 = vmatprep.mubr.bf16.mxu0 0
      %766 = vmatmul.mubr.bf16.gmra.mxu0 %v607
      %v767 = vpop.f32.mrf.mxu0
      %v768 = vadd.f32 0.0, %v767
      %v769 = vpop.f32.mrf.mxu0
      %v770 = vpop.f32.mrf.mxu0
      %v771 = vadd.f32 0.0, %v770
      %v772 = vpop.f32.mrf.mxu0
      %773 = vmatprep.mubr.bf16.mxu0 0
      %774 = vmatmul.mubr.bf16.gmra.mxu0 %v608
      %v775 = vpop.f32.mrf.mxu0
      %v776 = vadd.f32 0.0, %v775
      %v777 = vpop.f32.mrf.mxu0
      %v778 = vpop.f32.mrf.mxu0
      %v779 = vadd.f32 0.0, %v778
      %v780 = vpop.f32.mrf.mxu0
      %781 = vmatprep.mubr.bf16.mxu0 0
      %782 = vmatmul.mubr.bf16.gmra.mxu0 %v609
      %v783 = vpop.f32.mrf.mxu0
      %v784 = vadd.f32 0.0, %v783
      %v785 = vpop.f32.mrf.mxu0
      %v786 = vpop.f32.mrf.mxu0
      %v787 = vadd.f32 0.0, %v786
      %v788 = vpop.f32.mrf.mxu0
      %789 = vmatprep.mubr.bf16.mxu0 0
      %790 = vmatmul.mubr.bf16.gmra.mxu0 %v610
      %v791 = vpop.f32.mrf.mxu0
      %v792 = vadd.f32 0.0, %v791
      %v793 = vpop.f32.mrf.mxu0
      %v794 = vpop.f32.mrf.mxu0
      %v795 = vadd.f32 0.0, %v794
      %v796 = vpop.f32.mrf.mxu0
      %797 = vmatprep.mubr.bf16.mxu0 0
      %798 = vmatmul.mubr.bf16.gmra.mxu0 %v611
      %v799 = vpop.f32.mrf.mxu0
      %v800 = vadd.f32 0.0, %v799
      %v801 = vpop.f32.mrf.mxu0
      %v802 = vpop.f32.mrf.mxu0
      %v803 = vadd.f32 0.0, %v802
      %v804 = vpop.f32.mrf.mxu0
      %805 = vmatprep.mubr.bf16.mxu0 0
      %806 = vmatmul.mubr.bf16.gmra.mxu0 %v612
      %v807 = vpop.f32.mrf.mxu0
      %v808 = vadd.f32 0.0, %v807
      %v809 = vpop.f32.mrf.mxu0
      %v810 = vpop.f32.mrf.mxu0
      %v811 = vadd.f32 0.0, %v810
      %v812 = vpop.f32.mrf.mxu0
      %813 = vmatprep.mubr.bf16.mxu0 0
      %814 = vmatmul.mubr.bf16.gmra.mxu0 %v613
      %v815 = vpop.f32.mrf.mxu0
      %v816 = vadd.f32 0.0, %v815
      %v817 = vpop.f32.mrf.mxu0
      %v818 = vpop.f32.mrf.mxu0
      %v819 = vadd.f32 0.0, %v818
      %v820 = vpop.f32.mrf.mxu0
      %821 = vmatprep.mubr.bf16.mxu0 0
      %822 = vmatmul.mubr.bf16.gmra.mxu0 %v614
      %v823 = vpop.f32.mrf.mxu0
      %v824 = vadd.f32 0.0, %v823
      %v825 = vpop.f32.mrf.mxu0
      %v826 = vpop.f32.mrf.mxu0
      %v827 = vadd.f32 0.0, %v826
      %v828 = vpop.f32.mrf.mxu0
      %829 = vmatprep.mubr.bf16.mxu0 0
      %830 = vmatmul.mubr.bf16.gmra.mxu0 %v615
      %v831 = vpop.f32.mrf.mxu0
      %v832 = vadd.f32 0.0, %v831
      %v833 = vpop.f32.mrf.mxu0
      %v834 = vpop.f32.mrf.mxu0
      %v835 = vadd.f32 0.0, %v834
      %v836 = vpop.f32.mrf.mxu0
      %837 = vmatprep.mubr.bf16.mxu0 0
      %838 = vmatmul.mubr.bf16.gmra.mxu0 %v616
      %v839 = vpop.f32.mrf.mxu0
      %v840 = vadd.f32 0.0, %v839
      %v841 = vpop.f32.mrf.mxu0
      %v842 = vpop.f32.mrf.mxu0
      %v843 = vadd.f32 0.0, %v842
      %v844 = vpop.f32.mrf.mxu0
      %845 = vmatprep.mubr.bf16.mxu0 0
      %846 = vmatmul.mubr.bf16.gmra.mxu0 %v617
      %v847 = vpop.f32.mrf.mxu0
      %v848 = vadd.f32 0.0, %v847
      %v849 = vpop.f32.mrf.mxu0
      %v850 = vpop.f32.mrf.mxu0
      %v851 = vadd.f32 0.0, %v850
      %v852 = vpop.f32.mrf.mxu0
      %853 = vmatprep.mubr.bf16.mxu0 0
      %854 = vmatmul.mubr.bf16.gmra.mxu0 %v618
      %v855 = vpop.f32.mrf.mxu0
      %v856 = vadd.f32 0.0, %v855
      %v857 = vpop.f32.mrf.mxu0
      %v858 = vpop.f32.mrf.mxu0
      %v859 = vadd.f32 0.0, %v858
      %v860 = vpop.f32.mrf.mxu0
      %861 = vmatprep.mubr.bf16.mxu0 0
      %862 = vmatmul.mubr.bf16.gmra.mxu0 %v619
      %v863 = vpop.f32.mrf.mxu0
      %v864 = vadd.f32 0.0, %v863
      %v865 = vpop.f32.mrf.mxu0
      %v866 = vpop.f32.mrf.mxu0
      %v867 = vadd.f32 0.0, %v866
      %v868 = vpop.f32.mrf.mxu0
      %869 = vmatprep.mubr.bf16.mxu0 0
      %870 = vmatmul.mubr.bf16.gmra.mxu0 %v620
      %v871 = vpop.f32.mrf.mxu0
      %v872 = vadd.f32 0.0, %v871
      %v873 = vpop.f32.mrf.mxu0
      %v874 = vpop.f32.mrf.mxu0
      %v875 = vadd.f32 0.0, %v874
      %v876 = vpop.f32.mrf.mxu0
      %877 = vmatprep.mubr.bf16.mxu0 0
      %878 = vmatmul.mubr.bf16.gmra.mxu0 %v621
      %v879 = vpop.f32.mrf.mxu0
      %v880 = vadd.f32 0.0, %v879
      %v881 = vpop.f32.mrf.mxu0
      %v882 = vpop.f32.mrf.mxu0
      %v883 = vadd.f32 0.0, %v882
      %v884 = vpop.f32.mrf.mxu0
      %885 = vmatprep.mubr.bf16.mxu0 0
      %886 = vmatmul.mubr.bf16.gmra.mxu0 %v622
      %v887 = vpop.f32.mrf.mxu0
      %v888 = vadd.f32 0.0, %v887
      %v889 = vpop.f32.mrf.mxu0
      %v890 = vpop.f32.mrf.mxu0
      %v891 = vadd.f32 0.0, %v890
      %v892 = vpop.f32.mrf.mxu0
      %893 = vmatprep.mubr.bf16.mxu0 0
      %894 = vmatmul.mubr.bf16.gmra.mxu0 %v623
      %v895 = vpop.f32.mrf.mxu0
      %v896 = vadd.f32 0.0, %v895
      %v897 = vpop.f32.mrf.mxu0
      %v898 = vpop.f32.mrf.mxu0
      %v899 = vadd.f32 0.0, %v898
      %v900 = vpop.f32.mrf.mxu0
      %901 = vmatprep.mubr.bf16.mxu0 0
      %902 = vmatmul.mubr.bf16.gmra.mxu0 %v624
      %v903 = vpop.f32.mrf.mxu0
      %v904 = vadd.f32 0.0, %v903
      %v905 = vpop.f32.mrf.mxu0
      %v906 = vpop.f32.mrf.mxu0
      %v907 = vadd.f32 0.0, %v906
      %v908 = vpop.f32.mrf.mxu0
      %909 = vmatprep.mubr.bf16.mxu0 0
      %910 = vmatmul.mubr.bf16.gmra.mxu0 %v625
      %v911 = vpop.f32.mrf.mxu0
      %v912 = vadd.f32 0.0, %v911
      %v913 = vpop.f32.mrf.mxu0
      %v914 = vpop.f32.mrf.mxu0
      %v915 = vadd.f32 0.0, %v914
      %v916 = vpop.f32.mrf.mxu0
      %917 = vmatprep.mubr.bf16.mxu0 0
      %918 = vmatmul.mubr.bf16.gmra.mxu0 %v626
      %v919 = vpop.f32.mrf.mxu0
      %v920 = vadd.f32 0.0, %v919
      %v921 = vpop.f32.mrf.mxu0
      %v922 = vpop.f32.mrf.mxu0
      %v923 = vadd.f32 0.0, %v922
      %v924 = vpop.f32.mrf.mxu0
      %925 = vmatprep.mubr.bf16.mxu0 0
      %926 = vmatmul.mubr.bf16.gmra.mxu0 %v627
      %v927 = vpop.f32.mrf.mxu0
      %v928 = vadd.f32 0.0, %v927
      %v929 = vpop.f32.mrf.mxu0
      %v930 = vpop.f32.mrf.mxu0
      %v931 = vadd.f32 0.0, %v930
      %v932 = vpop.f32.mrf.mxu0
      %933 = vmatprep.mubr.bf16.mxu0 0
      %934 = vmatmul.mubr.bf16.gmra.mxu0 %v628
      %v935 = vpop.f32.mrf.mxu0
      %v936 = vadd.f32 0.0, %v935
      %v937 = vpop.f32.mrf.mxu0
      %v938 = vpop.f32.mrf.mxu0
      %v939 = vadd.f32 0.0, %v938
      %v940 = vpop.f32.mrf.mxu0
      %941 = vmatprep.mubr.bf16.mxu0 0
      %942 = vmatmul.mubr.bf16.gmra.mxu0 %v629
      %v943 = vpop.f32.mrf.mxu0
      %v944 = vadd.f32 0.0, %v943
      %v945 = vpop.f32.mrf.mxu0
      %v946 = vpop.f32.mrf.mxu0
      %v947 = vadd.f32 0.0, %v946
      %v948 = vpop.f32.mrf.mxu0
      %949 = vmatprep.mubr.bf16.mxu0 0
      %950 = vmatmul.mubr.bf16.gmra.mxu0 %v630
      %v951 = vpop.f32.mrf.mxu0
      %v952 = vadd.f32 0.0, %v951
      %v953 = vpop.f32.mrf.mxu0
      %v954 = vpop.f32.mrf.mxu0
      %v955 = vadd.f32 0.0, %v954
      %v956 = vpop.f32.mrf.mxu0
      %957 = vmatprep.mubr.bf16.mxu0 0
      %958 = vmatmul.mubr.bf16.gmra.mxu0 %v631
      %v959 = vpop.f32.mrf.mxu0
      %v960 = vadd.f32 0.0, %v959
      %v961 = vpop.f32.mrf.mxu0
      %v962 = vpop.f32.mrf.mxu0
      %v963 = vadd.f32 0.0, %v962
      %v964 = vpop.f32.mrf.mxu0
      %965 = vmatprep.mubr.bf16.mxu0 0
      %966 = vmatmul.mubr.bf16.gmra.mxu0 %v632
      %v967 = vpop.f32.mrf.mxu0
      %v968 = vadd.f32 0.0, %v967
      %v969 = vpop.f32.mrf.mxu0
      %v970 = vpop.f32.mrf.mxu0
      %v971 = vadd.f32 0.0, %v970
      %v972 = vpop.f32.mrf.mxu0
      %973 = vmatprep.mubr.bf16.mxu0 0
      %974 = vmatmul.mubr.bf16.gmra.mxu0 %v633
      %v975 = vpop.f32.mrf.mxu0
      %v976 = vadd.f32 0.0, %v975
      %v977 = vpop.f32.mrf.mxu0
      %v978 = vpop.f32.mrf.mxu0
      %v979 = vadd.f32 0.0, %v978
      %v980 = vpop.f32.mrf.mxu0
      %981 = vmatprep.mubr.bf16.mxu0 0
      %982 = vmatmul.mubr.bf16.gmra.mxu0 %v634
      %v983 = vpop.f32.mrf.mxu0
      %v984 = vadd.f32 0.0, %v983
      %v985 = vpop.f32.mrf.mxu0
      %v986 = vpop.f32.mrf.mxu0
      %v987 = vadd.f32 0.0, %v986
      %v988 = vpop.f32.mrf.mxu0
      %989 = vmatprep.mubr.bf16.mxu0 0
      %990 = vmatmul.mubr.bf16.gmra.mxu0 %v635
      %v991 = vpop.f32.mrf.mxu0
      %v992 = vadd.f32 0.0, %v991
      %v993 = vpop.f32.mrf.mxu0
      %v994 = vpop.f32.mrf.mxu0
      %v995 = vadd.f32 0.0, %v994
      %v996 = vpop.f32.mrf.mxu0
      %997 = vmatprep.mubr.bf16.mxu0 0
      %998 = vmatmul.mubr.bf16.gmra.mxu0 %v636
      %v999 = vpop.f32.mrf.mxu0
      %v1000 = vadd.f32 0.0, %v999
      %v1001 = vpop.f32.mrf.mxu0
      %v1002 = vpop.f32.mrf.mxu0
      %v1003 = vadd.f32 0.0, %v1002
      %v1004 = vpop.f32.mrf.mxu0
      %1005 = vdwg.mxu0
      %v1006 = vadd.f32 %v333, %v752
      %v1007 = vadd.f32 %v334, %v755
      %v1008 = vadd.f32 %v335, %v760
      %v1009 = vadd.f32 %v336, %v763
      %v1010 = vadd.f32 %v337, %v768
      %v1011 = vadd.f32 %v338, %v771
      %v1012 = vadd.f32 %v339, %v776
      %v1013 = vadd.f32 %v340, %v779
      %v1014 = vadd.f32 %v341, %v784
      %v1015 = vadd.f32 %v342, %v787
      %v1016 = vadd.f32 %v343, %v792
      %v1017 = vadd.f32 %v344, %v795
      %v1018 = vadd.f32 %v345, %v800
      %v1019 = vadd.f32 %v346, %v803
      %v1020 = vadd.f32 %v347, %v808
      %v1021 = vadd.f32 %v348, %v811
      %v1022 = vadd.f32 %v349, %v816
      %v1023 = vadd.f32 %v350, %v819
      %v1024 = vadd.f32 %v351, %v824
      %v1025 = vadd.f32 %v352, %v827
      %v1026 = vadd.f32 %v353, %v832
      %v1027 = vadd.f32 %v354, %v835
      %v1028 = vadd.f32 %v355, %v840
      %v1029 = vadd.f32 %v356, %v843
      %v1030 = vadd.f32 %v357, %v848
      %v1031 = vadd.f32 %v358, %v851
      %v1032 = vadd.f32 %v359, %v856
      %v1033 = vadd.f32 %v360, %v859
      %v1034 = vadd.f32 %v361, %v864
      %v1035 = vadd.f32 %v362, %v867
      %v1036 = vadd.f32 %v363, %v872
      %v1037 = vadd.f32 %v364, %v875
      %v1038 = vadd.f32 %v365, %v880
      %v1039 = vadd.f32 %v366, %v883
      %v1040 = vadd.f32 %v367, %v888
      %v1041 = vadd.f32 %v368, %v891
      %v1042 = vadd.f32 %v369, %v896
      %v1043 = vadd.f32 %v370, %v899
      %v1044 = vadd.f32 %v371, %v904
      %v1045 = vadd.f32 %v372, %v907
      %v1046 = vadd.f32 %v373, %v912
      %v1047 = vadd.f32 %v374, %v915
      %v1048 = vadd.f32 %v375, %v920
      %v1049 = vadd.f32 %v376, %v923
      %v1050 = vadd.f32 %v377, %v928
      %v1051 = vadd.f32 %v378, %v931
      %v1052 = vadd.f32 %v379, %v936
      %v1053 = vadd.f32 %v380, %v939
      %v1054 = vadd.f32 %v381, %v944
      %v1055 = vadd.f32 %v382, %v947
      %v1056 = vadd.f32 %v383, %v952
      %v1057 = vadd.f32 %v384, %v955
      %v1058 = vadd.f32 %v385, %v960
      %v1059 = vadd.f32 %v386, %v963
      %v1060 = vadd.f32 %v387, %v968
      %v1061 = vadd.f32 %v388, %v971
      %v1062 = vadd.f32 %v389, %v976
      %v1063 = vadd.f32 %v390, %v979
      %v1064 = vadd.f32 %v391, %v984
      %v1065 = vadd.f32 %v392, %v987
      %v1066 = vadd.f32 %v393, %v992
      %v1067 = vadd.f32 %v394, %v995
      %v1068 = vadd.f32 %v395, %v1000
      %v1069 = vadd.f32 %v396, %v1003
      %1070 = vst [vmem:[#allocation2] sm:$0xff] %v1006
      %1071 = vst [vmem:[#allocation2 + $0x8] sm:$0xff] %v1007
      %1072 = vst [vmem:[#allocation2 + $0x10] sm:$0xff] %v1008
      %1073 = vst [vmem:[#allocation2 + $0x18] sm:$0xff] %v1009
      %1074 = vst [vmem:[#allocation2 + $0x20] sm:$0xff] %v1010
      %1075 = vst [vmem:[#allocation2 + $0x28] sm:$0xff] %v1011
      %1076 = vst [vmem:[#allocation2 + $0x30] sm:$0xff] %v1012
      %1077 = vst [vmem:[#allocation2 + $0x38] sm:$0xff] %v1013
      %1078 = vst [vmem:[#allocation2 + $0x40] sm:$0xff] %v1014
      %1079 = vst [vmem:[#allocation2 + $0x48] sm:$0xff] %v1015
      %1080 = vst [vmem:[#allocation2 + $0x50] sm:$0xff] %v1016
      %1081 = vst [vmem:[#allocation2 + $0x58] sm:$0xff] %v1017
      %1082 = vst [vmem:[#allocation2 + $0x60] sm:$0xff] %v1018
      %1083 = vst [vmem:[#allocation2 + $0x68] sm:$0xff] %v1019
      %1084 = vst [vmem:[#allocation2 + $0x70] sm:$0xff] %v1020
      %1085 = vst [vmem:[#allocation2 + $0x78] sm:$0xff] %v1021
      %1086 = vst [vmem:[#allocation2 + $0x80] sm:$0xff] %v1022
      %1087 = vst [vmem:[#allocation2 + $0x88] sm:$0xff] %v1023
      %1088 = vst [vmem:[#allocation2 + $0x90] sm:$0xff] %v1024
      %1089 = vst [vmem:[#allocation2 + $0x98] sm:$0xff] %v1025
      %1090 = vst [vmem:[#allocation2 + $0xa0] sm:$0xff] %v1026
      %1091 = vst [vmem:[#allocation2 + $0xa8] sm:$0xff] %v1027
      %1092 = vst [vmem:[#allocation2 + $0xb0] sm:$0xff] %v1028
      %1093 = vst [vmem:[#allocation2 + $0xb8] sm:$0xff] %v1029
      %1094 = vst [vmem:[#allocation2 + $0xc0] sm:$0xff] %v1030
      %1095 = vst [vmem:[#allocation2 + $0xc8] sm:$0xff] %v1031
      %1096 = vst [vmem:[#allocation2 + $0xd0] sm:$0xff] %v1032
      %1097 = vst [vmem:[#allocation2 + $0xd8] sm:$0xff] %v1033
      %1098 = vst [vmem:[#allocation2 + $0xe0] sm:$0xff] %v1034
      %1099 = vst [vmem:[#allocation2 + $0xe8] sm:$0xff] %v1035
      %1100 = vst [vmem:[#allocation2 + $0xf0] sm:$0xff] %v1036
      %1101 = vst [vmem:[#allocation2 + $0xf8] sm:$0xff] %v1037
      %1102 = vst [vmem:[#allocation2 + $0x100] sm:$0xff] %v1038
      %1103 = vst [vmem:[#allocation2 + $0x108] sm:$0xff] %v1039
      %1104 = vst [vmem:[#allocation2 + $0x110] sm:$0xff] %v1040
      %1105 = vst [vmem:[#allocation2 + $0x118] sm:$0xff] %v1041
      %1106 = vst [vmem:[#allocation2 + $0x120] sm:$0xff] %v1042
      %1107 = vst [vmem:[#allocation2 + $0x128] sm:$0xff] %v1043
      %1108 = vst [vmem:[#allocation2 + $0x130] sm:$0xff] %v1044
      %1109 = vst [vmem:[#allocation2 + $0x138] sm:$0xff] %v1045
      %1110 = vst [vmem:[#allocation2 + $0x140] sm:$0xff] %v1046
      %1111 = vst [vmem:[#allocation2 + $0x148] sm:$0xff] %v1047
      %1112 = vst [vmem:[#allocation2 + $0x150] sm:$0xff] %v1048
      %1113 = vst [vmem:[#allocation2 + $0x158] sm:$0xff] %v1049
      %1114 = vst [vmem:[#allocation2 + $0x160] sm:$0xff] %v1050
      %1115 = vst [vmem:[#allocation2 + $0x168] sm:$0xff] %v1051
      %1116 = vst [vmem:[#allocation2 + $0x170] sm:$0xff] %v1052
      %1117 = vst [vmem:[#allocation2 + $0x178] sm:$0xff] %v1053
      %1118 = vst [vmem:[#allocation2 + $0x180] sm:$0xff] %v1054
      %1119 = vst [vmem:[#allocation2 + $0x188] sm:$0xff] %v1055
      %1120 = vst [vmem:[#allocation2 + $0x190] sm:$0xff] %v1056
      %1121 = vst [vmem:[#allocation2 + $0x198] sm:$0xff] %v1057
      %1122 = vst [vmem:[#allocation2 + $0x1a0] sm:$0xff] %v1058
      %1123 = vst [vmem:[#allocation2 + $0x1a8] sm:$0xff] %v1059
      %1124 = vst [vmem:[#allocation2 + $0x1b0] sm:$0xff] %v1060
      %1125 = vst [vmem:[#allocation2 + $0x1b8] sm:$0xff] %v1061
      %1126 = vst [vmem:[#allocation2 + $0x1c0] sm:$0xff] %v1062
      %1127 = vst [vmem:[#allocation2 + $0x1c8] sm:$0xff] %v1063
      %1128 = vst [vmem:[#allocation2 + $0x1d0] sm:$0xff] %v1064
      %1129 = vst [vmem:[#allocation2 + $0x1d8] sm:$0xff] %v1065
      %1130 = vst [vmem:[#allocation2 + $0x1e0] sm:$0xff] %v1066
      %1131 = vst [vmem:[#allocation2 + $0x1e8] sm:$0xff] %v1067
      %1132 = vst [vmem:[#allocation2 + $0x1f0] sm:$0xff] %v1068
      %1133 = vst [vmem:[#allocation2 + $0x1f8] sm:$0xff] %v1069
      // Predicated region
      $region37: #{generator_forward.15} parent=31 // pred_check
        %p1134 = pneg %p265
      $region38: #{generator_forward.15} parent=31 // pred_check_branch
        %1136 = sbr.rel (%p1134) target = $region40
      $region39: #{generator_forward.15} parent=31 // pred_region
        %v1137 = vld [vmem:[#allocation2] sm:$0xff]
        %v1138 = vld [vmem:[#allocation2 + $0x8] sm:$0xff]
        %v1139 = vld [vmem:[#allocation2 + $0x10] sm:$0xff]
        %v1140 = vld [vmem:[#allocation2 + $0x18] sm:$0xff]
        %v1141 = vld [vmem:[#allocation2 + $0x20] sm:$0xff]
        %v1142 = vld [vmem:[#allocation2 + $0x28] sm:$0xff]
        %v1143 = vld [vmem:[#allocation2 + $0x30] sm:$0xff]
        %v1144 = vld [vmem:[#allocation2 + $0x38] sm:$0xff]
        %v1145 = vld [vmem:[#allocation2 + $0x40] sm:$0xff]
        %v1146 = vld [vmem:[#allocation2 + $0x48] sm:$0xff]
        %v1147 = vld [vmem:[#allocation2 + $0x50] sm:$0xff]
        %v1148 = vld [vmem:[#allocation2 + $0x58] sm:$0xff]
        %v1149 = vld [vmem:[#allocation2 + $0x60] sm:$0xff]
        %v1150 = vld [vmem:[#allocation2 + $0x68] sm:$0xff]
        %v1151 = vld [vmem:[#allocation2 + $0x70] sm:$0xff]
        %v1152 = vld [vmem:[#allocation2 + $0x78] sm:$0xff]
        %v1153 = vld [vmem:[#allocation2 + $0x80] sm:$0xff]
        %v1154 = vld [vmem:[#allocation2 + $0x88] sm:$0xff]
        %v1155 = vld [vmem:[#allocation2 + $0x90] sm:$0xff]
        %v1156 = vld [vmem:[#allocation2 + $0x98] sm:$0xff]
        %v1157 = vld [vmem:[#allocation2 + $0xa0] sm:$0xff]
        %v1158 = vld [vmem:[#allocation2 + $0xa8] sm:$0xff]
        %v1159 = vld [vmem:[#allocation2 + $0xb0] sm:$0xff]
        %v1160 = vld [vmem:[#allocation2 + $0xb8] sm:$0xff]
        %v1161 = vld [vmem:[#allocation2 + $0xc0] sm:$0xff]
        %v1162 = vld [vmem:[#allocation2 + $0xc8] sm:$0xff]
        %v1163 = vld [vmem:[#allocation2 + $0xd0] sm:$0xff]
        %v1164 = vld [vmem:[#allocation2 + $0xd8] sm:$0xff]
        %v1165 = vld [vmem:[#allocation2 + $0xe0] sm:$0xff]
        %v1166 = vld [vmem:[#allocation2 + $0xe8] sm:$0xff]
        %v1167 = vld [vmem:[#allocation2 + $0xf0] sm:$0xff]
        %v1168 = vld [vmem:[#allocation2 + $0xf8] sm:$0xff]
        %v1169 = vld [vmem:[#allocation2 + $0x100] sm:$0xff]
        %v1170 = vld [vmem:[#allocation2 + $0x108] sm:$0xff]
        %v1171 = vld [vmem:[#allocation2 + $0x110] sm:$0xff]
        %v1172 = vld [vmem:[#allocation2 + $0x118] sm:$0xff]
        %v1173 = vld [vmem:[#allocation2 + $0x120] sm:$0xff]
        %v1174 = vld [vmem:[#allocation2 + $0x128] sm:$0xff]
        %v1175 = vld [vmem:[#allocation2 + $0x130] sm:$0xff]
        %v1176 = vld [vmem:[#allocation2 + $0x138] sm:$0xff]
        %v1177 = vld [vmem:[#allocation2 + $0x140] sm:$0xff]
        %v1178 = vld [vmem:[#allocation2 + $0x148] sm:$0xff]
        %v1179 = vld [vmem:[#allocation2 + $0x150] sm:$0xff]
        %v1180 = vld [vmem:[#allocation2 + $0x158] sm:$0xff]
        %v1181 = vld [vmem:[#allocation2 + $0x160] sm:$0xff]
        %v1182 = vld [vmem:[#allocation2 + $0x168] sm:$0xff]
        %v1183 = vld [vmem:[#allocation2 + $0x170] sm:$0xff]
        %v1184 = vld [vmem:[#allocation2 + $0x178] sm:$0xff]
        %v1185 = vld [vmem:[#allocation2 + $0x180] sm:$0xff]
        %v1186 = vld [vmem:[#allocation2 + $0x188] sm:$0xff]
        %v1187 = vld [vmem:[#allocation2 + $0x190] sm:$0xff]
        %v1188 = vld [vmem:[#allocation2 + $0x198] sm:$0xff]
        %v1189 = vld [vmem:[#allocation2 + $0x1a0] sm:$0xff]
        %v1190 = vld [vmem:[#allocation2 + $0x1a8] sm:$0xff]
        %v1191 = vld [vmem:[#allocation2 + $0x1b0] sm:$0xff]
        %v1192 = vld [vmem:[#allocation2 + $0x1b8] sm:$0xff]
        %v1193 = vld [vmem:[#allocation2 + $0x1c0] sm:$0xff]
        %v1194 = vld [vmem:[#allocation2 + $0x1c8] sm:$0xff]
        %v1195 = vld [vmem:[#allocation2 + $0x1d0] sm:$0xff]
        %v1196 = vld [vmem:[#allocation2 + $0x1d8] sm:$0xff]
        %v1197 = vld [vmem:[#allocation2 + $0x1e0] sm:$0xff]
        %v1198 = vld [vmem:[#allocation2 + $0x1e8] sm:$0xff]
        %v1199 = vld [vmem:[#allocation2 + $0x1f0] sm:$0xff]
        %v1200 = vld [vmem:[#allocation2 + $0x1f8] sm:$0xff]
        %v1201 = vld [vmem:[%s2] sm:$0x1]
        %v1203 = vlaneseq
        %v1204 = vshrl.u32 %v1203, 7
        %v1205 = vsub.s32 0, %v1204
        %v1206 = vrot.slane %v1201, %v1205
        %v1208 = vadd.f32 %v1137, %v1206
        %v1209 = vadd.f32 %v1138, %v1206
        %v1210 = vadd.f32 %v1139, %v1206
        %v1211 = vadd.f32 %v1140, %v1206
        %v1212 = vadd.f32 %v1141, %v1206
        %v1213 = vadd.f32 %v1142, %v1206
        %v1214 = vadd.f32 %v1143, %v1206
        %v1215 = vadd.f32 %v1144, %v1206
        %v1216 = vadd.f32 %v1145, %v1206
        %v1217 = vadd.f32 %v1146, %v1206
        %v1218 = vadd.f32 %v1147, %v1206
        %v1219 = vadd.f32 %v1148, %v1206
        %v1220 = vadd.f32 %v1149, %v1206
        %v1221 = vadd.f32 %v1150, %v1206
        %v1222 = vadd.f32 %v1151, %v1206
        %v1223 = vadd.f32 %v1152, %v1206
        %v1224 = vadd.f32 %v1153, %v1206
        %v1225 = vadd.f32 %v1154, %v1206
        %v1226 = vadd.f32 %v1155, %v1206
        %v1227 = vadd.f32 %v1156, %v1206
        %v1228 = vadd.f32 %v1157, %v1206
        %v1229 = vadd.f32 %v1158, %v1206
        %v1230 = vadd.f32 %v1159, %v1206
        %v1231 = vadd.f32 %v1160, %v1206
        %v1232 = vadd.f32 %v1161, %v1206
        %v1233 = vadd.f32 %v1162, %v1206
        %v1234 = vadd.f32 %v1163, %v1206
        %v1235 = vadd.f32 %v1164, %v1206
        %v1236 = vadd.f32 %v1165, %v1206
        %v1237 = vadd.f32 %v1166, %v1206
        %v1238 = vadd.f32 %v1167, %v1206
        %v1239 = vadd.f32 %v1168, %v1206
        %v1240 = vadd.f32 %v1169, %v1206
        %v1241 = vadd.f32 %v1170, %v1206
        %v1242 = vadd.f32 %v1171, %v1206
        %v1243 = vadd.f32 %v1172, %v1206
        %v1244 = vadd.f32 %v1173, %v1206
        %v1245 = vadd.f32 %v1174, %v1206
        %v1246 = vadd.f32 %v1175, %v1206
        %v1247 = vadd.f32 %v1176, %v1206
        %v1248 = vadd.f32 %v1177, %v1206
        %v1249 = vadd.f32 %v1178, %v1206
        %v1250 = vadd.f32 %v1179, %v1206
        %v1251 = vadd.f32 %v1180, %v1206
        %v1252 = vadd.f32 %v1181, %v1206
        %v1253 = vadd.f32 %v1182, %v1206
        %v1254 = vadd.f32 %v1183, %v1206
        %v1255 = vadd.f32 %v1184, %v1206
        %v1256 = vadd.f32 %v1185, %v1206
        %v1257 = vadd.f32 %v1186, %v1206
        %v1258 = vadd.f32 %v1187, %v1206
        %v1259 = vadd.f32 %v1188, %v1206
        %v1260 = vadd.f32 %v1189, %v1206
        %v1261 = vadd.f32 %v1190, %v1206
        %v1262 = vadd.f32 %v1191, %v1206
        %v1263 = vadd.f32 %v1192, %v1206
        %v1264 = vadd.f32 %v1193, %v1206
        %v1265 = vadd.f32 %v1194, %v1206
        %v1266 = vadd.f32 %v1195, %v1206
        %v1267 = vadd.f32 %v1196, %v1206
        %v1268 = vadd.f32 %v1197, %v1206
        %v1269 = vadd.f32 %v1198, %v1206
        %v1270 = vadd.f32 %v1199, %v1206
        %v1271 = vadd.f32 %v1200, %v1206
        %v1272 = vsub.f32 0.0, %v1208
        %v1273 = vsub.f32 0.0, %v1209
        %v1274 = vsub.f32 0.0, %v1210
        %v1275 = vsub.f32 0.0, %v1211
        %v1276 = vsub.f32 0.0, %v1212
        %v1277 = vsub.f32 0.0, %v1213
        %v1278 = vsub.f32 0.0, %v1214
        %v1279 = vsub.f32 0.0, %v1215
        %v1280 = vsub.f32 0.0, %v1216
        %v1281 = vsub.f32 0.0, %v1217
        %v1282 = vsub.f32 0.0, %v1218
        %v1283 = vsub.f32 0.0, %v1219
        %v1284 = vsub.f32 0.0, %v1220
        %v1285 = vsub.f32 0.0, %v1221
        %v1286 = vsub.f32 0.0, %v1222
        %v1287 = vsub.f32 0.0, %v1223
        %v1288 = vsub.f32 0.0, %v1224
        %v1289 = vsub.f32 0.0, %v1225
        %v1290 = vsub.f32 0.0, %v1226
        %v1291 = vsub.f32 0.0, %v1227
        %v1292 = vsub.f32 0.0, %v1228
        %v1293 = vsub.f32 0.0, %v1229
        %v1294 = vsub.f32 0.0, %v1230
        %v1295 = vsub.f32 0.0, %v1231
        %v1296 = vsub.f32 0.0, %v1232
        %v1297 = vsub.f32 0.0, %v1233
        %v1298 = vsub.f32 0.0, %v1234
        %v1299 = vsub.f32 0.0, %v1235
        %v1300 = vsub.f32 0.0, %v1236
        %v1301 = vsub.f32 0.0, %v1237
        %v1302 = vsub.f32 0.0, %v1238
        %v1303 = vsub.f32 0.0, %v1239
        %v1304 = vsub.f32 0.0, %v1240
        %v1305 = vsub.f32 0.0, %v1241
        %v1306 = vsub.f32 0.0, %v1242
        %v1307 = vsub.f32 0.0, %v1243
        %v1308 = vsub.f32 0.0, %v1244
        %v1309 = vsub.f32 0.0, %v1245
        %v1310 = vsub.f32 0.0, %v1246
        %v1311 = vsub.f32 0.0, %v1247
        %v1312 = vsub.f32 0.0, %v1248
        %v1313 = vsub.f32 0.0, %v1249
        %v1314 = vsub.f32 0.0, %v1250
        %v1315 = vsub.f32 0.0, %v1251
        %v1316 = vsub.f32 0.0, %v1252
        %v1317 = vsub.f32 0.0, %v1253
        %v1318 = vsub.f32 0.0, %v1254
        %v1319 = vsub.f32 0.0, %v1255
        %v1320 = vsub.f32 0.0, %v1256
        %v1321 = vsub.f32 0.0, %v1257
        %v1322 = vsub.f32 0.0, %v1258
        %v1323 = vsub.f32 0.0, %v1259
        %v1324 = vsub.f32 0.0, %v1260
        %v1325 = vsub.f32 0.0, %v1261
        %v1326 = vsub.f32 0.0, %v1262
        %v1327 = vsub.f32 0.0, %v1263
        %v1328 = vsub.f32 0.0, %v1264
        %v1329 = vsub.f32 0.0, %v1265
        %v1330 = vsub.f32 0.0, %v1266
        %v1331 = vsub.f32 0.0, %v1267
        %v1332 = vsub.f32 0.0, %v1268
        %v1333 = vsub.f32 0.0, %v1269
        %v1334 = vsub.f32 0.0, %v1270
        %v1335 = vsub.f32 0.0, %v1271
        %v1336 = vmul.f32 %v1272, 1.442695
        %v1337 = vpow.pop %v1336
        %v1338 = vmul.f32 %v1273, 1.442695
        %v1339 = vpow.pop %v1338
        %v1340 = vmul.f32 %v1274, 1.442695
        %v1341 = vpow.pop %v1340
        %v1342 = vmul.f32 %v1275, 1.442695
        %v1343 = vpow.pop %v1342
        %v1344 = vmul.f32 %v1276, 1.442695
        %v1345 = vpow.pop %v1344
        %v1346 = vmul.f32 %v1277, 1.442695
        %v1347 = vpow.pop %v1346
        %v1348 = vmul.f32 %v1278, 1.442695
        %v1349 = vpow.pop %v1348
        %v1350 = vmul.f32 %v1279, 1.442695
        %v1351 = vpow.pop %v1350
        %v1352 = vmul.f32 %v1280, 1.442695
        %v1353 = vpow.pop %v1352
        %v1354 = vmul.f32 %v1281, 1.442695
        %v1355 = vpow.pop %v1354
        %v1356 = vmul.f32 %v1282, 1.442695
        %v1357 = vpow.pop %v1356
        %v1358 = vmul.f32 %v1283, 1.442695
        %v1359 = vpow.pop %v1358
        %v1360 = vmul.f32 %v1284, 1.442695
        %v1361 = vpow.pop %v1360
        %v1362 = vmul.f32 %v1285, 1.442695
        %v1363 = vpow.pop %v1362
        %v1364 = vmul.f32 %v1286, 1.442695
        %v1365 = vpow.pop %v1364
        %v1366 = vmul.f32 %v1287, 1.442695
        %v1367 = vpow.pop %v1366
        %v1368 = vmul.f32 %v1288, 1.442695
        %v1369 = vpow.pop %v1368
        %v1370 = vmul.f32 %v1289, 1.442695
        %v1371 = vpow.pop %v1370
        %v1372 = vmul.f32 %v1290, 1.442695
        %v1373 = vpow.pop %v1372
        %v1374 = vmul.f32 %v1291, 1.442695
        %v1375 = vpow.pop %v1374
        %v1376 = vmul.f32 %v1292, 1.442695
        %v1377 = vpow.pop %v1376
        %v1378 = vmul.f32 %v1293, 1.442695
        %v1379 = vpow.pop %v1378
        %v1380 = vmul.f32 %v1294, 1.442695
        %v1381 = vpow.pop %v1380
        %v1382 = vmul.f32 %v1295, 1.442695
        %v1383 = vpow.pop %v1382
        %v1384 = vmul.f32 %v1296, 1.442695
        %v1385 = vpow.pop %v1384
        %v1386 = vmul.f32 %v1297, 1.442695
        %v1387 = vpow.pop %v1386
        %v1388 = vmul.f32 %v1298, 1.442695
        %v1389 = vpow.pop %v1388
        %v1390 = vmul.f32 %v1299, 1.442695
        %v1391 = vpow.pop %v1390
        %v1392 = vmul.f32 %v1300, 1.442695
        %v1393 = vpow.pop %v1392
        %v1394 = vmul.f32 %v1301, 1.442695
        %v1395 = vpow.pop %v1394
        %v1396 = vmul.f32 %v1302, 1.442695
        %v1397 = vpow.pop %v1396
        %v1398 = vmul.f32 %v1303, 1.442695
        %v1399 = vpow.pop %v1398
        %v1400 = vmul.f32 %v1304, 1.442695
        %v1401 = vpow.pop %v1400
        %v1402 = vmul.f32 %v1305, 1.442695
        %v1403 = vpow.pop %v1402
        %v1404 = vmul.f32 %v1306, 1.442695
        %v1405 = vpow.pop %v1404
        %v1406 = vmul.f32 %v1307, 1.442695
        %v1407 = vpow.pop %v1406
        %v1408 = vmul.f32 %v1308, 1.442695
        %v1409 = vpow.pop %v1408
        %v1410 = vmul.f32 %v1309, 1.442695
        %v1411 = vpow.pop %v1410
        %v1412 = vmul.f32 %v1310, 1.442695
        %v1413 = vpow.pop %v1412
        %v1414 = vmul.f32 %v1311, 1.442695
        %v1415 = vpow.pop %v1414
        %v1416 = vmul.f32 %v1312, 1.442695
        %v1417 = vpow.pop %v1416
        %v1418 = vmul.f32 %v1313, 1.442695
        %v1419 = vpow.pop %v1418
        %v1420 = vmul.f32 %v1314, 1.442695
        %v1421 = vpow.pop %v1420
        %v1422 = vmul.f32 %v1315, 1.442695
        %v1423 = vpow.pop %v1422
        %v1424 = vmul.f32 %v1316, 1.442695
        %v1425 = vpow.pop %v1424
        %v1426 = vmul.f32 %v1317, 1.442695
        %v1427 = vpow.pop %v1426
        %v1428 = vmul.f32 %v1318, 1.442695
        %v1429 = vpow.pop %v1428
        %v1430 = vmul.f32 %v1319, 1.442695
        %v1431 = vpow.pop %v1430
        %v1432 = vmul.f32 %v1320, 1.442695
        %v1433 = vpow.pop %v1432
        %v1434 = vmul.f32 %v1321, 1.442695
        %v1435 = vpow.pop %v1434
        %v1436 = vmul.f32 %v1322, 1.442695
        %v1437 = vpow.pop %v1436
        %v1438 = vmul.f32 %v1323, 1.442695
        %v1439 = vpow.pop %v1438
        %v1440 = vmul.f32 %v1324, 1.442695
        %v1441 = vpow.pop %v1440
        %v1442 = vmul.f32 %v1325, 1.442695
        %v1443 = vpow.pop %v1442
        %v1444 = vmul.f32 %v1326, 1.442695
        %v1445 = vpow.pop %v1444
        %v1446 = vmul.f32 %v1327, 1.442695
        %v1447 = vpow.pop %v1446
        %v1448 = vmul.f32 %v1328, 1.442695
        %v1449 = vpow.pop %v1448
        %v1450 = vmul.f32 %v1329, 1.442695
        %v1451 = vpow.pop %v1450
        %v1452 = vmul.f32 %v1330, 1.442695
        %v1453 = vpow.pop %v1452
        %v1454 = vmul.f32 %v1331, 1.442695
        %v1455 = vpow.pop %v1454
        %v1456 = vmul.f32 %v1332, 1.442695
        %v1457 = vpow.pop %v1456
        %v1458 = vmul.f32 %v1333, 1.442695
        %v1459 = vpow.pop %v1458
        %v1460 = vmul.f32 %v1334, 1.442695
        %v1461 = vpow.pop %v1460
        %v1462 = vmul.f32 %v1335, 1.442695
        %v1463 = vpow.pop %v1462
        %v1464 = vadd.f32 %v1337, 1.0
        %v1465 = vadd.f32 %v1339, 1.0
        %v1466 = vadd.f32 %v1341, 1.0
        %v1467 = vadd.f32 %v1343, 1.0
        %v1468 = vadd.f32 %v1345, 1.0
        %v1469 = vadd.f32 %v1347, 1.0
        %v1470 = vadd.f32 %v1349, 1.0
        %v1471 = vadd.f32 %v1351, 1.0
        %v1472 = vadd.f32 %v1353, 1.0
        %v1473 = vadd.f32 %v1355, 1.0
        %v1474 = vadd.f32 %v1357, 1.0
        %v1475 = vadd.f32 %v1359, 1.0
        %v1476 = vadd.f32 %v1361, 1.0
        %v1477 = vadd.f32 %v1363, 1.0
        %v1478 = vadd.f32 %v1365, 1.0
        %v1479 = vadd.f32 %v1367, 1.0
        %v1480 = vadd.f32 %v1369, 1.0
        %v1481 = vadd.f32 %v1371, 1.0
        %v1482 = vadd.f32 %v1373, 1.0
        %v1483 = vadd.f32 %v1375, 1.0
        %v1484 = vadd.f32 %v1377, 1.0
        %v1485 = vadd.f32 %v1379, 1.0
        %v1486 = vadd.f32 %v1381, 1.0
        %v1487 = vadd.f32 %v1383, 1.0
        %v1488 = vadd.f32 %v1385, 1.0
        %v1489 = vadd.f32 %v1387, 1.0
        %v1490 = vadd.f32 %v1389, 1.0
        %v1491 = vadd.f32 %v1391, 1.0
        %v1492 = vadd.f32 %v1393, 1.0
        %v1493 = vadd.f32 %v1395, 1.0
        %v1494 = vadd.f32 %v1397, 1.0
        %v1495 = vadd.f32 %v1399, 1.0
        %v1496 = vadd.f32 %v1401, 1.0
        %v1497 = vadd.f32 %v1403, 1.0
        %v1498 = vadd.f32 %v1405, 1.0
        %v1499 = vadd.f32 %v1407, 1.0
        %v1500 = vadd.f32 %v1409, 1.0
        %v1501 = vadd.f32 %v1411, 1.0
        %v1502 = vadd.f32 %v1413, 1.0
        %v1503 = vadd.f32 %v1415, 1.0
        %v1504 = vadd.f32 %v1417, 1.0
        %v1505 = vadd.f32 %v1419, 1.0
        %v1506 = vadd.f32 %v1421, 1.0
        %v1507 = vadd.f32 %v1423, 1.0
        %v1508 = vadd.f32 %v1425, 1.0
        %v1509 = vadd.f32 %v1427, 1.0
        %v1510 = vadd.f32 %v1429, 1.0
        %v1511 = vadd.f32 %v1431, 1.0
        %v1512 = vadd.f32 %v1433, 1.0
        %v1513 = vadd.f32 %v1435, 1.0
        %v1514 = vadd.f32 %v1437, 1.0
        %v1515 = vadd.f32 %v1439, 1.0
        %v1516 = vadd.f32 %v1441, 1.0
        %v1517 = vadd.f32 %v1443, 1.0
        %v1518 = vadd.f32 %v1445, 1.0
        %v1519 = vadd.f32 %v1447, 1.0
        %v1520 = vadd.f32 %v1449, 1.0
        %v1521 = vadd.f32 %v1451, 1.0
        %v1522 = vadd.f32 %v1453, 1.0
        %v1523 = vadd.f32 %v1455, 1.0
        %v1524 = vadd.f32 %v1457, 1.0
        %v1525 = vadd.f32 %v1459, 1.0
        %v1526 = vadd.f32 %v1461, 1.0
        %v1527 = vadd.f32 %v1463, 1.0
        %v1528 = vrcp.pop %v1464
        %v1529 = vmul.f32 1.0, %v1528
        %v1530 = vrcp.pop %v1465
        %v1531 = vmul.f32 1.0, %v1530
        %v1532 = vrcp.pop %v1466
        %v1533 = vmul.f32 1.0, %v1532
        %v1534 = vrcp.pop %v1467
        %v1535 = vmul.f32 1.0, %v1534
        %v1536 = vrcp.pop %v1468
        %v1537 = vmul.f32 1.0, %v1536
        %v1538 = vrcp.pop %v1469
        %v1539 = vmul.f32 1.0, %v1538
        %v1540 = vrcp.pop %v1470
        %v1541 = vmul.f32 1.0, %v1540
        %v1542 = vrcp.pop %v1471
        %v1543 = vmul.f32 1.0, %v1542
        %v1544 = vrcp.pop %v1472
        %v1545 = vmul.f32 1.0, %v1544
        %v1546 = vrcp.pop %v1473
        %v1547 = vmul.f32 1.0, %v1546
        %v1548 = vrcp.pop %v1474
        %v1549 = vmul.f32 1.0, %v1548
        %v1550 = vrcp.pop %v1475
        %v1551 = vmul.f32 1.0, %v1550
        %v1552 = vrcp.pop %v1476
        %v1553 = vmul.f32 1.0, %v1552
        %v1554 = vrcp.pop %v1477
        %v1555 = vmul.f32 1.0, %v1554
        %v1556 = vrcp.pop %v1478
        %v1557 = vmul.f32 1.0, %v1556
        %v1558 = vrcp.pop %v1479
        %v1559 = vmul.f32 1.0, %v1558
        %v1560 = vrcp.pop %v1480
        %v1561 = vmul.f32 1.0, %v1560
        %v1562 = vrcp.pop %v1481
        %v1563 = vmul.f32 1.0, %v1562
        %v1564 = vrcp.pop %v1482
        %v1565 = vmul.f32 1.0, %v1564
        %v1566 = vrcp.pop %v1483
        %v1567 = vmul.f32 1.0, %v1566
        %v1568 = vrcp.pop %v1484
        %v1569 = vmul.f32 1.0, %v1568
        %v1570 = vrcp.pop %v1485
        %v1571 = vmul.f32 1.0, %v1570
        %v1572 = vrcp.pop %v1486
        %v1573 = vmul.f32 1.0, %v1572
        %v1574 = vrcp.pop %v1487
        %v1575 = vmul.f32 1.0, %v1574
        %v1576 = vrcp.pop %v1488
        %v1577 = vmul.f32 1.0, %v1576
        %v1578 = vrcp.pop %v1489
        %v1579 = vmul.f32 1.0, %v1578
        %v1580 = vrcp.pop %v1490
        %v1581 = vmul.f32 1.0, %v1580
        %v1582 = vrcp.pop %v1491
        %v1583 = vmul.f32 1.0, %v1582
        %v1584 = vrcp.pop %v1492
        %v1585 = vmul.f32 1.0, %v1584
        %v1586 = vrcp.pop %v1493
        %v1587 = vmul.f32 1.0, %v1586
        %v1588 = vrcp.pop %v1494
        %v1589 = vmul.f32 1.0, %v1588
        %v1590 = vrcp.pop %v1495
        %v1591 = vmul.f32 1.0, %v1590
        %v1592 = vrcp.pop %v1496
        %v1593 = vmul.f32 1.0, %v1592
        %v1594 = vrcp.pop %v1497
        %v1595 = vmul.f32 1.0, %v1594
        %v1596 = vrcp.pop %v1498
        %v1597 = vmul.f32 1.0, %v1596
        %v1598 = vrcp.pop %v1499
        %v1599 = vmul.f32 1.0, %v1598
        %v1600 = vrcp.pop %v1500
        %v1601 = vmul.f32 1.0, %v1600
        %v1602 = vrcp.pop %v1501
        %v1603 = vmul.f32 1.0, %v1602
        %v1604 = vrcp.pop %v1502
        %v1605 = vmul.f32 1.0, %v1604
        %v1606 = vrcp.pop %v1503
        %v1607 = vmul.f32 1.0, %v1606
        %v1608 = vrcp.pop %v1504
        %v1609 = vmul.f32 1.0, %v1608
        %v1610 = vrcp.pop %v1505
        %v1611 = vmul.f32 1.0, %v1610
        %v1612 = vrcp.pop %v1506
        %v1613 = vmul.f32 1.0, %v1612
        %v1614 = vrcp.pop %v1507
        %v1615 = vmul.f32 1.0, %v1614
        %v1616 = vrcp.pop %v1508
        %v1617 = vmul.f32 1.0, %v1616
        %v1618 = vrcp.pop %v1509
        %v1619 = vmul.f32 1.0, %v1618
        %v1620 = vrcp.pop %v1510
        %v1621 = vmul.f32 1.0, %v1620
        %v1622 = vrcp.pop %v1511
        %v1623 = vmul.f32 1.0, %v1622
        %v1624 = vrcp.pop %v1512
        %v1625 = vmul.f32 1.0, %v1624
        %v1626 = vrcp.pop %v1513
        %v1627 = vmul.f32 1.0, %v1626
        %v1628 = vrcp.pop %v1514
        %v1629 = vmul.f32 1.0, %v1628
        %v1630 = vrcp.pop %v1515
        %v1631 = vmul.f32 1.0, %v1630
        %v1632 = vrcp.pop %v1516
        %v1633 = vmul.f32 1.0, %v1632
        %v1634 = vrcp.pop %v1517
        %v1635 = vmul.f32 1.0, %v1634
        %v1636 = vrcp.pop %v1518
        %v1637 = vmul.f32 1.0, %v1636
        %v1638 = vrcp.pop %v1519
        %v1639 = vmul.f32 1.0, %v1638
        %v1640 = vrcp.pop %v1520
        %v1641 = vmul.f32 1.0, %v1640
        %v1642 = vrcp.pop %v1521
        %v1643 = vmul.f32 1.0, %v1642
        %v1644 = vrcp.pop %v1522
        %v1645 = vmul.f32 1.0, %v1644
        %v1646 = vrcp.pop %v1523
        %v1647 = vmul.f32 1.0, %v1646
        %v1648 = vrcp.pop %v1524
        %v1649 = vmul.f32 1.0, %v1648
        %v1650 = vrcp.pop %v1525
        %v1651 = vmul.f32 1.0, %v1650
        %v1652 = vrcp.pop %v1526
        %v1653 = vmul.f32 1.0, %v1652
        %v1654 = vrcp.pop %v1527
        %v1655 = vmul.f32 1.0, %v1654
        %v1656 = vpack.c.bf16 %v1531, %v1529
        %v1657 = vpack.c.bf16 %v1535, %v1533
        %v1658 = vpack.c.bf16 %v1539, %v1537
        %v1659 = vpack.c.bf16 %v1543, %v1541
        %v1660 = vpack.c.bf16 %v1547, %v1545
        %v1661 = vpack.c.bf16 %v1551, %v1549
        %v1662 = vpack.c.bf16 %v1555, %v1553
        %v1663 = vpack.c.bf16 %v1559, %v1557
        %v1664 = vpack.c.bf16 %v1563, %v1561
        %v1665 = vpack.c.bf16 %v1567, %v1565
        %v1666 = vpack.c.bf16 %v1571, %v1569
        %v1667 = vpack.c.bf16 %v1575, %v1573
        %v1668 = vpack.c.bf16 %v1579, %v1577
        %v1669 = vpack.c.bf16 %v1583, %v1581
        %v1670 = vpack.c.bf16 %v1587, %v1585
        %v1671 = vpack.c.bf16 %v1591, %v1589
        %v1672 = vpack.c.bf16 %v1595, %v1593
        %v1673 = vpack.c.bf16 %v1599, %v1597
        %v1674 = vpack.c.bf16 %v1603, %v1601
        %v1675 = vpack.c.bf16 %v1607, %v1605
        %v1676 = vpack.c.bf16 %v1611, %v1609
        %v1677 = vpack.c.bf16 %v1615, %v1613
        %v1678 = vpack.c.bf16 %v1619, %v1617
        %v1679 = vpack.c.bf16 %v1623, %v1621
        %v1680 = vpack.c.bf16 %v1627, %v1625
        %v1681 = vpack.c.bf16 %v1631, %v1629
        %v1682 = vpack.c.bf16 %v1635, %v1633
        %v1683 = vpack.c.bf16 %v1639, %v1637
        %v1684 = vpack.c.bf16 %v1643, %v1641
        %v1685 = vpack.c.bf16 %v1647, %v1645
        %v1686 = vpack.c.bf16 %v1651, %v1649
        %v1687 = vpack.c.bf16 %v1655, %v1653
        %v1720 = vunpack.c.l.b16 %v1656
        %v1721 = vunpack.c.h.b16 %v1656
        %v1722 = vunpack.c.l.b16 %v1657
        %v1723 = vunpack.c.h.b16 %v1657
        %v1724 = vunpack.c.l.b16 %v1658
        %v1725 = vunpack.c.h.b16 %v1658
        %v1726 = vunpack.c.l.b16 %v1659
        %v1727 = vunpack.c.h.b16 %v1659
        %v1728 = vunpack.c.l.b16 %v1660
        %v1729 = vunpack.c.h.b16 %v1660
        %v1730 = vunpack.c.l.b16 %v1661
        %v1731 = vunpack.c.h.b16 %v1661
        %v1732 = vunpack.c.l.b16 %v1662
        %v1733 = vunpack.c.h.b16 %v1662
        %v1734 = vunpack.c.l.b16 %v1663
        %v1735 = vunpack.c.h.b16 %v1663
        %v1736 = vunpack.c.l.b16 %v1664
        %v1737 = vunpack.c.h.b16 %v1664
        %v1738 = vunpack.c.l.b16 %v1665
        %v1739 = vunpack.c.h.b16 %v1665
        %v1740 = vunpack.c.l.b16 %v1666
        %v1741 = vunpack.c.h.b16 %v1666
        %v1742 = vunpack.c.l.b16 %v1667
        %v1743 = vunpack.c.h.b16 %v1667
        %v1744 = vunpack.c.l.b16 %v1668
        %v1745 = vunpack.c.h.b16 %v1668
        %v1746 = vunpack.c.l.b16 %v1669
        %v1747 = vunpack.c.h.b16 %v1669
        %v1748 = vunpack.c.l.b16 %v1670
        %v1749 = vunpack.c.h.b16 %v1670
        %v1750 = vunpack.c.l.b16 %v1671
        %v1751 = vunpack.c.h.b16 %v1671
        %v1752 = vunpack.c.l.b16 %v1672
        %v1753 = vunpack.c.h.b16 %v1672
        %v1754 = vunpack.c.l.b16 %v1673
        %v1755 = vunpack.c.h.b16 %v1673
        %v1756 = vunpack.c.l.b16 %v1674
        %v1757 = vunpack.c.h.b16 %v1674
        %v1758 = vunpack.c.l.b16 %v1675
        %v1759 = vunpack.c.h.b16 %v1675
        %v1760 = vunpack.c.l.b16 %v1676
        %v1761 = vunpack.c.h.b16 %v1676
        %v1762 = vunpack.c.l.b16 %v1677
        %v1763 = vunpack.c.h.b16 %v1677
        %v1764 = vunpack.c.l.b16 %v1678
        %v1765 = vunpack.c.h.b16 %v1678
        %v1766 = vunpack.c.l.b16 %v1679
        %v1767 = vunpack.c.h.b16 %v1679
        %v1768 = vunpack.c.l.b16 %v1680
        %v1769 = vunpack.c.h.b16 %v1680
        %v1770 = vunpack.c.l.b16 %v1681
        %v1771 = vunpack.c.h.b16 %v1681
        %v1772 = vunpack.c.l.b16 %v1682
        %v1773 = vunpack.c.h.b16 %v1682
        %v1774 = vunpack.c.l.b16 %v1683
        %v1775 = vunpack.c.h.b16 %v1683
        %v1776 = vunpack.c.l.b16 %v1684
        %v1777 = vunpack.c.h.b16 %v1684
        %v1778 = vunpack.c.l.b16 %v1685
        %v1779 = vunpack.c.h.b16 %v1685
        %v1780 = vunpack.c.l.b16 %v1686
        %v1781 = vunpack.c.h.b16 %v1686
        %v1782 = vunpack.c.l.b16 %v1687
        %v1783 = vunpack.c.h.b16 %v1687
        %v1784 = vpack.c.b16 %v1720, %v1720
        %v1785 = vpack.c.b16 %v1721, %v1721
        %v1786 = vpack.c.b16 %v1722, %v1722
        %v1787 = vpack.c.b16 %v1723, %v1723
        %v1788 = vpack.c.b16 %v1724, %v1724
        %v1789 = vpack.c.b16 %v1725, %v1725
        %v1790 = vpack.c.b16 %v1726, %v1726
        %v1791 = vpack.c.b16 %v1727, %v1727
        %v1792 = vpack.c.b16 %v1728, %v1728
        %v1793 = vpack.c.b16 %v1729, %v1729
        %v1794 = vpack.c.b16 %v1730, %v1730
        %v1795 = vpack.c.b16 %v1731, %v1731
        %v1796 = vpack.c.b16 %v1732, %v1732
        %v1797 = vpack.c.b16 %v1733, %v1733
        %v1798 = vpack.c.b16 %v1734, %v1734
        %v1799 = vpack.c.b16 %v1735, %v1735
        %v1800 = vpack.c.b16 %v1736, %v1736
        %v1801 = vpack.c.b16 %v1737, %v1737
        %v1802 = vpack.c.b16 %v1738, %v1738
        %v1803 = vpack.c.b16 %v1739, %v1739
        %v1804 = vpack.c.b16 %v1740, %v1740
        %v1805 = vpack.c.b16 %v1741, %v1741
        %v1806 = vpack.c.b16 %v1742, %v1742
        %v1807 = vpack.c.b16 %v1743, %v1743
        %v1808 = vpack.c.b16 %v1744, %v1744
        %v1809 = vpack.c.b16 %v1745, %v1745
        %v1810 = vpack.c.b16 %v1746, %v1746
        %v1811 = vpack.c.b16 %v1747, %v1747
        %v1812 = vpack.c.b16 %v1748, %v1748
        %v1813 = vpack.c.b16 %v1749, %v1749
        %v1814 = vpack.c.b16 %v1750, %v1750
        %v1815 = vpack.c.b16 %v1751, %v1751
        %v1816 = vpack.c.b16 %v1752, %v1752
        %v1817 = vpack.c.b16 %v1753, %v1753
        %v1818 = vpack.c.b16 %v1754, %v1754
        %v1819 = vpack.c.b16 %v1755, %v1755
        %v1820 = vpack.c.b16 %v1756, %v1756
        %v1821 = vpack.c.b16 %v1757, %v1757
        %v1822 = vpack.c.b16 %v1758, %v1758
        %v1823 = vpack.c.b16 %v1759, %v1759
        %v1824 = vpack.c.b16 %v1760, %v1760
        %v1825 = vpack.c.b16 %v1761, %v1761
        %v1826 = vpack.c.b16 %v1762, %v1762
        %v1827 = vpack.c.b16 %v1763, %v1763
        %v1828 = vpack.c.b16 %v1764, %v1764
        %v1829 = vpack.c.b16 %v1765, %v1765
        %v1830 = vpack.c.b16 %v1766, %v1766
        %v1831 = vpack.c.b16 %v1767, %v1767
        %v1832 = vpack.c.b16 %v1768, %v1768
        %v1833 = vpack.c.b16 %v1769, %v1769
        %v1834 = vpack.c.b16 %v1770, %v1770
        %v1835 = vpack.c.b16 %v1771, %v1771
        %v1836 = vpack.c.b16 %v1772, %v1772
        %v1837 = vpack.c.b16 %v1773, %v1773
        %v1838 = vpack.c.b16 %v1774, %v1774
        %v1839 = vpack.c.b16 %v1775, %v1775
        %v1840 = vpack.c.b16 %v1776, %v1776
        %v1841 = vpack.c.b16 %v1777, %v1777
        %v1842 = vpack.c.b16 %v1778, %v1778
        %v1843 = vpack.c.b16 %v1779, %v1779
        %v1844 = vpack.c.b16 %v1780, %v1780
        %v1845 = vpack.c.b16 %v1781, %v1781
        %v1846 = vpack.c.b16 %v1782, %v1782
        %v1847 = vpack.c.b16 %v1783, %v1783
        %1912 = vst [vmem:[%s262] sm:$0xf] %v1784
        %1913 = vst [vmem:[%s262 + $0x4] sm:$0xf] %v1785
        %1914 = vst [vmem:[%s262 + $0x8] sm:$0xf] %v1786
        %1915 = vst [vmem:[%s262 + $0xc] sm:$0xf] %v1787
        %1916 = vst [vmem:[%s262 + $0x10] sm:$0xf] %v1788
        %1917 = vst [vmem:[%s262 + $0x14] sm:$0xf] %v1789
        %1918 = vst [vmem:[%s262 + $0x18] sm:$0xf] %v1790
        %1919 = vst [vmem:[%s262 + $0x1c] sm:$0xf] %v1791
        %1920 = vst [vmem:[%s262 + $0x20] sm:$0xf] %v1792
        %1921 = vst [vmem:[%s262 + $0x24] sm:$0xf] %v1793
        %1922 = vst [vmem:[%s262 + $0x28] sm:$0xf] %v1794
        %1923 = vst [vmem:[%s262 + $0x2c] sm:$0xf] %v1795
        %1924 = vst [vmem:[%s262 + $0x30] sm:$0xf] %v1796
        %1925 = vst [vmem:[%s262 + $0x34] sm:$0xf] %v1797
        %1926 = vst [vmem:[%s262 + $0x38] sm:$0xf] %v1798
        %1927 = vst [vmem:[%s262 + $0x3c] sm:$0xf] %v1799
        %1928 = vst [vmem:[%s262 + $0x40] sm:$0xf] %v1800
        %1929 = vst [vmem:[%s262 + $0x44] sm:$0xf] %v1801
        %1930 = vst [vmem:[%s262 + $0x48] sm:$0xf] %v1802
        %1931 = vst [vmem:[%s262 + $0x4c] sm:$0xf] %v1803
        %1932 = vst [vmem:[%s262 + $0x50] sm:$0xf] %v1804
        %1933 = vst [vmem:[%s262 + $0x54] sm:$0xf] %v1805
        %1934 = vst [vmem:[%s262 + $0x58] sm:$0xf] %v1806
        %1935 = vst [vmem:[%s262 + $0x5c] sm:$0xf] %v1807
        %1936 = vst [vmem:[%s262 + $0x60] sm:$0xf] %v1808
        %1937 = vst [vmem:[%s262 + $0x64] sm:$0xf] %v1809
        %1938 = vst [vmem:[%s262 + $0x68] sm:$0xf] %v1810
        %1939 = vst [vmem:[%s262 + $0x6c] sm:$0xf] %v1811
        %1940 = vst [vmem:[%s262 + $0x70] sm:$0xf] %v1812
        %1941 = vst [vmem:[%s262 + $0x74] sm:$0xf] %v1813
        %1942 = vst [vmem:[%s262 + $0x78] sm:$0xf] %v1814
        %1943 = vst [vmem:[%s262 + $0x7c] sm:$0xf] %v1815
        %1944 = vst [vmem:[%s262 + $0x80] sm:$0xf] %v1816
        %1945 = vst [vmem:[%s262 + $0x84] sm:$0xf] %v1817
        %1946 = vst [vmem:[%s262 + $0x88] sm:$0xf] %v1818
        %1947 = vst [vmem:[%s262 + $0x8c] sm:$0xf] %v1819
        %1948 = vst [vmem:[%s262 + $0x90] sm:$0xf] %v1820
        %1949 = vst [vmem:[%s262 + $0x94] sm:$0xf] %v1821
        %1950 = vst [vmem:[%s262 + $0x98] sm:$0xf] %v1822
        %1951 = vst [vmem:[%s262 + $0x9c] sm:$0xf] %v1823
        %1952 = vst [vmem:[%s262 + $0xa0] sm:$0xf] %v1824
        %1953 = vst [vmem:[%s262 + $0xa4] sm:$0xf] %v1825
        %1954 = vst [vmem:[%s262 + $0xa8] sm:$0xf] %v1826
        %1955 = vst [vmem:[%s262 + $0xac] sm:$0xf] %v1827
        %1956 = vst [vmem:[%s262 + $0xb0] sm:$0xf] %v1828
        %1957 = vst [vmem:[%s262 + $0xb4] sm:$0xf] %v1829
        %1958 = vst [vmem:[%s262 + $0xb8] sm:$0xf] %v1830
        %1959 = vst [vmem:[%s262 + $0xbc] sm:$0xf] %v1831
        %1960 = vst [vmem:[%s262 + $0xc0] sm:$0xf] %v1832
        %1961 = vst [vmem:[%s262 + $0xc4] sm:$0xf] %v1833
        %1962 = vst [vmem:[%s262 + $0xc8] sm:$0xf] %v1834
        %1963 = vst [vmem:[%s262 + $0xcc] sm:$0xf] %v1835
        %1964 = vst [vmem:[%s262 + $0xd0] sm:$0xf] %v1836
        %1965 = vst [vmem:[%s262 + $0xd4] sm:$0xf] %v1837
        %1966 = vst [vmem:[%s262 + $0xd8] sm:$0xf] %v1838
        %1967 = vst [vmem:[%s262 + $0xdc] sm:$0xf] %v1839
        %1968 = vst [vmem:[%s262 + $0xe0] sm:$0xf] %v1840
        %1969 = vst [vmem:[%s262 + $0xe4] sm:$0xf] %v1841
        %1970 = vst [vmem:[%s262 + $0xe8] sm:$0xf] %v1842
        %1971 = vst [vmem:[%s262 + $0xec] sm:$0xf] %v1843
        %1972 = vst [vmem:[%s262 + $0xf0] sm:$0xf] %v1844
        %1973 = vst [vmem:[%s262 + $0xf4] sm:$0xf] %v1845
        %1974 = vst [vmem:[%s262 + $0xf8] sm:$0xf] %v1846
        %1975 = vst [vmem:[%s262 + $0xfc] sm:$0xf] %v1847
      $region40: #{generator_forward.15} parent=31 // pred_fallthru
        _
      %s1976 = smul.u32 64, %s20
      %p1977 = scmp.lt.s32.totalorder %s19, 3
      %s1978 = scalar_select %p1977, %s19, 3
      %p1979 = scmp.lt.s32.totalorder %s1976, 63
      %s1980 = scalar_select %p1979, %s1976, 63
      %s1981 = smul.addr %s1978, 64
      %s1982 = sadd.s32 %s1980, %s1981
      %s1983 = smul.addr %s1982, 4
      %s1984 = scalar_lea.vmem %s3, %s1983
      // Predicated region
      $region41: #{generator_forward.15} parent=31 // pred_check
        %p1985 = pneg %p132
      $region42: #{generator_forward.15} parent=31 // pred_check_branch
        %1987 = sbr.rel (%p1985) target = $region44
      $region43: #{generator_forward.15} parent=31 // pred_region
        %s1988 = smul.u32 64, %s20
      $region44: #{generator_forward.15} parent=31 // pred_fallthru
        _
    $region32: #{generator_forward.15} parent=5 // pred_fallthru
      _
    %p1989 = scmp.le.s32.totalorder 2, %s9
    // Predicated region
    $region45: #{generator_forward.15} parent=5 // pred_check
      %p1990 = pneg %p1989
    $region46: #{generator_forward.15} parent=5 // pred_check_branch
      %1992 = sbr.rel (%p1990) target = $region48
    $region47: #{generator_forward.15} parent=5 // pred_region
      %s1993 = ssub.s32 %s9, 2
      // Predicated region
      $region49: #{generator_forward.15} parent=47 // pred_check
        %p1994 = pneg %p138
      $region50: #{generator_forward.15} parent=47 // pred_check_branch
        %1996 = sbr.rel (%p1994) target = $region52
      $region51: #{generator_forward.15} parent=47 // pred_region
        %s1997 = smul.u32 64, %s23
        %p1998 = scmp.lt.s32.totalorder %s22, 3
        %s1999 = scalar_select %p1998, %s22, 3
        %p2000 = scmp.lt.s32.totalorder %s1997, 63
        %s2001 = scalar_select %p2000, %s1997, 63
        %s2002 = smul.addr %s1999, 64
        %s2003 = sadd.s32 %s2001, %s2002
        %s2004 = smul.addr %s2003, 4
        %s2005 = scalar_lea.vmem %s3, %s2004
      $region52: #{generator_forward.15} parent=47 // pred_fallthru
        _
    $region48: #{generator_forward.15} parent=5 // pred_fallthru
      _
  $region6: #{generator_forward.15} parent=0 // loop_footer
    %s13 = sadd.s32 1, %s9
  $region7: #{generator_forward.15} parent=0 // loop_footer_branch
    %8 = sbr.rel target = $region3
  $region8: #{generator_forward.15} parent=0 // loop_exit
    _

</llo_original>
